<compile_context>
chip_gen: v6e
topology: v6e:2x2x1
jax: 0.10.0
libtpu: 0.0.40
codegen_flags: <defaults>
</compile_context>

<pallas_src>
import functools

import jax
import jax.numpy as jnp
from jax.experimental import pallas as pl
from jax.experimental.pallas import tpu as pltpu


def _round_up(v, m):
    return ((v + m - 1) // m) * m


# ----------------------------------------------------------------------------
# Pallas kernel
#   grid = (s,): spatial tiles (reduction axis, "arbitrary")
#   x block:  (N*C, S_TILE)     -- spatial on lanes, dense sublanes, 1 HBM pass
#   weights:  stacked [student, teacher], pre-transposed, zero-padded to 128,
#             constant index_map -> VMEM resident across the whole grid
#   acc:      (2, C1p, N) f32 scratch -- running spatial sum per net/sample
#   output:   (2, Dp, N) block, written once at the last spatial tile
# ----------------------------------------------------------------------------
def _ts_kernel(x_ref, w1t_ref, b1_ref, w2t_ref, b2_ref, w3t_ref, b3_ref,
               o_ref, acc_ref, *, n_batch, c_in, chunk, hw, inv_hw, pad):
    s = pl.program_id(0)
    n_s = pl.num_programs(0)
    s_tile = x_ref.shape[1]
    c1p = acc_ref.shape[1]
    n_chunks = s_tile // chunk

    @pl.when(s == 0)
    def _init():
        acc_ref[...] = jnp.zeros_like(acc_ref)

    # 1x1 conv + bias + ReLU + partial global-average-pool, fused per spatial
    # chunk so only a (c1p, chunk) activation is live at a time.  Both
    # networks are processed on the same x tile (x read from HBM once).
    for net in range(2):
        w1t = w1t_ref[net]                                   # (c1p, C)
        b1b = jnp.broadcast_to(b1_ref[net], (c1p, chunk))    # hoisted broadcast
        # TODO(synk): switch the sample loop to lax.fori_loop(unroll=True)
        # if the batch size grows beyond ~8 (bounds vreg live ranges).
        for i in range(n_batch):
            part = jnp.zeros((c1p, 1), jnp.float32)
            for cj in range(n_chunks):
                c0 = cj * chunk
                xc = x_ref[i * c_in:(i + 1) * c_in, c0:c0 + chunk]   # (C, chunk)
                hc = jnp.dot(w1t, xc, preferred_element_type=jnp.float32)
                hc = jnp.maximum(hc + b1b, 0.0)                      # (c1p, chunk)
                if pad:   # static flag: mask zero-padded spatial tail
                    col = (s * s_tile + c0
                           + jax.lax.broadcasted_iota(jnp.int32, (1, chunk), 1))
                    hc = jnp.where(col < hw, hc, 0.0)
                part = part + jnp.sum(hc, axis=1, keepdims=True)     # (c1p, 1)
            acc_ref[net, :, i:i + 1] += part

    # Projection head only on the last spatial tile, batched over samples
    # (width-N RHS instead of N separate width-1 matmuls).
    @pl.when(s == n_s - 1)
    def _head():
        for net in range(2):
            g = acc_ref[net] * inv_hw                                # GAP, (c1p, N)
            z = jnp.dot(w2t_ref[net], g,
                        preferred_element_type=jnp.float32) + b2_ref[net]
            z = jax.nn.gelu(z, approximate=True)                     # (hdp, N)
            y = jnp.dot(w3t_ref[net], z,
                        preferred_element_type=jnp.float32) + b3_ref[net]
            o_ref[net] = y                                           # (dp, N)


# ----------------------------------------------------------------------------
# Parameter packing: stack [student, teacher], transpose, zero-pad to 128.
# Zero padding is exact: ReLU(0)=0, GELU(0)=0, padded rows/cols contribute 0.
# ----------------------------------------------------------------------------
def _pack_params(student, teacher, c1p, hdp, dp):
    def stack(name):
        return jnp.stack([student[name], teacher[name]], axis=0).astype(jnp.float32)

    w1, w2, w3 = stack("w1"), stack("w2"), stack("w3")   # (2,C,C1) (2,C1,Hd) (2,Hd,D)
    b1, b2, b3 = stack("b1"), stack("b2"), stack("b3")   # (2,C1) (2,Hd) (2,D)
    C, C1 = w1.shape[1], w1.shape[2]
    Hd, D = w2.shape[2], w3.shape[2]

    w1t = jnp.zeros((2, c1p, C), jnp.float32).at[:, :C1, :].set(
        jnp.transpose(w1, (0, 2, 1)))
    w2t = jnp.zeros((2, hdp, c1p), jnp.float32).at[:, :Hd, :C1].set(
        jnp.transpose(w2, (0, 2, 1)))
    w3t = jnp.zeros((2, dp, hdp), jnp.float32).at[:, :D, :Hd].set(
        jnp.transpose(w3, (0, 2, 1)))
    b1c = jnp.zeros((2, c1p, 1), jnp.float32).at[:, :C1, 0].set(b1)
    b2c = jnp.zeros((2, hdp, 1), jnp.float32).at[:, :Hd, 0].set(b2)
    b3c = jnp.zeros((2, dp, 1), jnp.float32).at[:, :D, 0].set(b3)
    return w1t, b1c, w2t, b2c, w3t, b3c


def _pick_spatial_tile(hwp, n, c, requested=None):
    """Lane-aligned spatial tile that divides the (padded) spatial extent."""
    if requested is not None:
        st = max(128, _round_up(min(requested, hwp), 128))
    else:
        # Keep the double-buffered x block under ~8 MiB, cap grid-step count.
        budget = 8 * 1024 * 1024
        max_cols = max(128, budget // (2 * n * c * 4))
        st = min(hwp, min(max_cols, 2048))
        st = max(128, (st // 128) * 128)
    st = min(st, hwp)
    while hwp % st != 0:   # hwp is a multiple of 128 -> terminates at 128
        st -= 128
    return st


def _estimate_vmem_bytes(nc, s_tile, c, c1p, hdp, dp, n):
    f32 = 4
    x_blk = 2 * nc * s_tile * f32                                   # double-buffered
    weights = 2 * 2 * (c1p * c + c1p + hdp * c1p + hdp + dp * hdp + dp) * f32
    acc = 2 * c1p * _round_up(n, 128) * f32
    out = 2 * dp * _round_up(n, 128) * f32
    return int(max(x_blk + weights + acc + out + (2 << 20), 4 << 20))


# ----------------------------------------------------------------------------
# TeacherStudent wrapper (mirrors forward: returns (student(x), teacher(x)))
# ----------------------------------------------------------------------------
def teacher_student_forward(x_nchw, student_params, teacher_params, *,
                            spatial_tile=None):
    N, C, H, W = x_nchw.shape
    HW = H * W
    HWp = _round_up(HW, 128)

    # Free, contiguous reshape (NCHW): dense sublanes, no HBM transpose.
    x = x_nchw.reshape(N * C, HW)
    if HWp != HW:
        x = jnp.pad(x, ((0, 0), (0, HWp - HW)))   # padded lanes masked in-kernel

    C1 = student_params["w1"].shape[1]
    Hd = student_params["w2"].shape[1]
    D = student_params["w3"].shape[1]
    c1p, hdp, dp = _round_up(C1, 128), _round_up(Hd, 128), _round_up(D, 128)

    s_tile = _pick_spatial_tile(HWp, N, C, spatial_tile)
    n_s = HWp // s_tile
    chunk = min(s_tile, 256)
    while s_tile % chunk != 0:
        chunk -= 128

    w1t, b1, w2t, b2, w3t, b3 = _pack_params(
        student_params, teacher_params, c1p, hdp, dp)

    kernel = functools.partial(
        _ts_kernel, n_batch=N, c_in=C, chunk=chunk,
        hw=HW, inv_hw=1.0 / HW, pad=(HWp != HW))

    out_padded = pl.pallas_call(
        kernel,
        out_shape=jax.ShapeDtypeStruct((2, dp, N), jnp.float32),
        grid=(n_s,),
        in_specs=[
            # x: streamed tile-by-tile (auto double-buffered), read ONCE per tile
            pl.BlockSpec((N * C, s_tile), lambda s: (0, s)),
            # stacked [student, teacher] weights, VMEM-resident across the grid
            pl.BlockSpec((2, c1p, C), lambda s: (0, 0, 0)),
            pl.BlockSpec((2, c1p, 1), lambda s: (0, 0, 0)),
            pl.BlockSpec((2, hdp, c1p), lambda s: (0, 0, 0)),
            pl.BlockSpec((2, hdp, 1), lambda s: (0, 0, 0)),
            pl.BlockSpec((2, dp, hdp), lambda s: (0, 0, 0)),
            pl.BlockSpec((2, dp, 1), lambda s: (0, 0, 0)),
        ],
        out_specs=pl.BlockSpec((2, dp, N), lambda s: (0, 0, 0)),
        scratch_shapes=[pltpu.VMEM((2, c1p, N), jnp.float32)],
        compiler_params=pltpu.CompilerParams(
            dimension_semantics=("arbitrary",),   # spatial axis is a reduction
            vmem_limit_bytes=_estimate_vmem_bytes(N * C, s_tile, C, c1p, hdp, dp, N),
        ),
    )(x, w1t, b1, w2t, b2, w3t, b3)

    # (2, Dp, N) -> (2, N, D); tiny tensor, negligible cost.
    out = jnp.transpose(out_padded[:, :D, :], (0, 2, 1))
    out_s = out[0]
    out_t = jax.lax.stop_gradient(out[1])   # mirrors torch.no_grad()
    return out_s, out_t


def update_teacher_weight(student_params, teacher_params, update_rate=0.9):
    """EMA update, matching TeacherStudent.update_teacher_weight."""
    return jax.tree_util.tree_map(
        lambda t, s: update_rate * t + (1.0 - update_rate) * jax.lax.stop_gradient(s),
        teacher_params, student_params)


# ----------------------------------------------------------------------------
# Deterministic synthetic backbone parameters + pure-JAX reference
# ----------------------------------------------------------------------------
def init_backbone_params(key, c_in, c_mid, hidden, out_dim):
    k1, k2, k3, k4, k5, k6 = jax.random.split(key, 6)
    s = 0.1
    return {
        "w1": (s * jax.random.normal(k1, (c_in, c_mid))).astype(jnp.float32),
        "b1": (0.01 * jax.random.normal(k4, (c_mid,))).astype(jnp.float32),
        "w2": (s * jax.random.normal(k2, (c_mid, hidden))).astype(jnp.float32),
        "b2": (0.01 * jax.random.normal(k5, (hidden,))).astype(jnp.float32),
        "w3": (s * jax.random.normal(k3, (hidden, out_dim))).astype(jnp.float32),
        "b3": (0.01 * jax.random.normal(k6, (out_dim,))).astype(jnp.float32),
    }


def _reference_forward(x_nchw, params):
    """Full f32 reference (module semantics)."""
    N, C, H, W = x_nchw.shape
    x = x_nchw.reshape(N, C, H * W).astype(jnp.float32)
    h = jnp.einsum("ncs,ck->nks", x, params["w1"]) + params["b1"][None, :, None]
    h = jnp.maximum(h, 0.0)
    g = jnp.mean(h, axis=2)
    z = jax.nn.gelu(g @ params["w2"] + params["b2"], approximate=True)
    return z @ params["w3"] + params["b3"]


if __name__ == "__main__":
    # Small shapes consistent with an NCHW conv backbone input.
    N, C, H, W = 2, 4, 16, 16
    C_MID, HIDDEN, OUT = 32, 32, 16

    key = jax.random.PRNGKey(0)
    k_x, k_p = jax.random.split(key)
    x = jax.random.normal(k_x, (N, C, H, W), dtype=jnp.float32)

    student_params = init_backbone_params(k_p, C, C_MID, HIDDEN, OUT)
    # teacher = copy.deepcopy(student): identical initial weights
    teacher_params = jax.tree_util.tree_map(lambda p: p + 0.0, student_params)

    # spatial_tile=128 (HW=256) deliberately exercises the multi-tile GAP
    # accumulation path; default picks a larger lane-aligned tile automatically.
    fwd = jax.jit(functools.partial(teacher_student_forward, spatial_tile=128))
    out_s, out_t = fwd(x, student_params, teacher_params)
    jax.block_until_ready((out_s, out_t))

    assert out_s.shape == (N, OUT) and out_t.shape == (N, OUT)

    # Module-semantics check (all-f32 math; only summation order differs).
    ref_s = _reference_forward(x, student_params)
    ref_t = _reference_forward(x, teacher_params)
    assert jnp.allclose(out_s, ref_s, atol=1e-4, rtol=1e-3), "student vs reference"
    assert jnp.allclose(out_t, ref_t, atol=1e-4, rtol=1e-3), "teacher vs reference"

    # deepcopy semantics: teacher == student before any EMA step.
    assert jnp.allclose(out_s, out_t), "teacher/student mismatch"

    # EMA update still functions (teacher == student => unchanged).
    teacher2 = update_teacher_weight(student_params, teacher_params, 0.9)
    assert jnp.allclose(teacher2["w1"], student_params["w1"], atol=1e-6)

    print("KERNEL_OK")
</pallas_src>

<mosaic_0001>
module attributes {stable_mosaic.version = 11 : i64} {
  func.func @_ts_kernel(%arg0: i32, %arg1: memref<8x128xf32, #tpu.memory_space<vmem>>, %arg2: memref<2x128x4xf32, #tpu.memory_space<vmem>>, %arg3: memref<2x128x1xf32, #tpu.memory_space<vmem>>, %arg4: memref<2x128x128xf32, #tpu.memory_space<vmem>>, %arg5: memref<2x128x1xf32, #tpu.memory_space<vmem>>, %arg6: memref<2x128x128xf32, #tpu.memory_space<vmem>>, %arg7: memref<2x128x1xf32, #tpu.memory_space<vmem>>, %arg8: memref<2x128x2xf32, #tpu.memory_space<vmem>>, %arg9: memref<2x128x2xf32, #tpu.memory_space<vmem>>) attributes {dimension_semantics = [#tpu.dimension_semantics<arbitrary>], iteration_bounds = array<i64: 2>, scalar_prefetch = 0 : i64, scratch_operands = 1 : i64, tpu.core_type = #tpu.core_type<tc>, window_params = [{transform_indices = @transform_0, window_bounds = array<i64: 8, 128>}, {pipeline_mode = #tpu.pipeline_mode<synchronous>, transform_indices = @transform_1, window_bounds = array<i64: 2, 128, 4>}, {pipeline_mode = #tpu.pipeline_mode<synchronous>, transform_indices = @transform_2, window_bounds = array<i64: 2, 128, 1>}, {pipeline_mode = #tpu.pipeline_mode<synchronous>, transform_indices = @transform_3, window_bounds = array<i64: 2, 128, 128>}, {pipeline_mode = #tpu.pipeline_mode<synchronous>, transform_indices = @transform_4, window_bounds = array<i64: 2, 128, 1>}, {pipeline_mode = #tpu.pipeline_mode<synchronous>, transform_indices = @transform_5, window_bounds = array<i64: 2, 128, 128>}, {pipeline_mode = #tpu.pipeline_mode<synchronous>, transform_indices = @transform_6, window_bounds = array<i64: 2, 128, 1>}, {pipeline_mode = #tpu.pipeline_mode<synchronous>, transform_indices = @transform_7, window_bounds = array<i64: 2, 128, 2>}]} {
    %c0_i32 = arith.constant 0 : i32
    %0 = arith.cmpi eq, %arg0, %c0_i32 : i32
    %1 = arith.extui %0 : i1 to i32
    %c0_i32_0 = arith.constant 0 : i32
    %2 = arith.cmpi ne, %1, %c0_i32_0 : i32
    scf.if %2 {
      %cst_58 = arith.constant 0.000000e+00 : f32
      %78 = vector.broadcast %cst_58 : f32 to vector<2x128x2xf32>
      %c0_59 = arith.constant 0 : index
      %c0_60 = arith.constant 0 : index
      %c0_61 = arith.constant 0 : index
      %79 = vector.load %arg9[%c0_59, %c0_60, %c0_61] : memref<2x128x2xf32, #tpu.memory_space<vmem>>, vector<2x128x2xf32>
      tpu.vector_store %arg9[%c0_59, %c0_60, %c0_61], %78 {strides = array<i32>} : memref<2x128x2xf32, #tpu.memory_space<vmem>>, vector<2x128x2xf32>,
    } else {
    }
    %c0 = arith.constant 0 : index
    %c0_1 = arith.constant 0 : index
    %c0_2 = arith.constant 0 : index
    %3 = vector.load %arg2[%c0, %c0_1, %c0_2] : memref<2x128x4xf32, #tpu.memory_space<vmem>>, vector<1x128x4xf32>
    %4 = vector.shape_cast %3 : vector<1x128x4xf32> to vector<128x4xf32>
    %c0_3 = arith.constant 0 : index
    %c0_4 = arith.constant 0 : index
    %c0_5 = arith.constant 0 : index
    %5 = vector.load %arg3[%c0_3, %c0_4, %c0_5] : memref<2x128x1xf32, #tpu.memory_space<vmem>>, vector<1x128x1xf32>
    %6 = vector.shape_cast %5 : vector<1x128x1xf32> to vector<128x1xf32>
    %7 = vector.shape_cast %6 : vector<128x1xf32> to vector<128x1xf32>
    %8 = vector.broadcast %7 : vector<128x1xf32> to vector<128x128xf32>
    %cst = arith.constant 0.000000e+00 : f32
    %9 = vector.broadcast %cst : f32 to vector<128x1xf32>
    %c0_6 = arith.constant 0 : index
    %c0_7 = arith.constant 0 : index
    %10 = vector.load %arg1[%c0_6, %c0_7] : memref<8x128xf32, #tpu.memory_space<vmem>>, vector<4x128xf32>
    %cst_8 = arith.constant dense<0.000000e+00> : vector<128x128xf32>
    %11 = tpu.matmul %4, %10, %cst_8 {dimension_numbers = #tpu.dot_dimension_numbers<[1], [0], [0], [1], [0, 0, 1, 1], [], []>} : vector<128x4xf32>, vector<4x128xf32>, vector<128x128xf32> -> vector<128x128xf32>
    %12 = arith.addf %11, %8 : vector<128x128xf32>
    %cst_9 = arith.constant 0.000000e+00 : f32
    %13 = vector.broadcast %cst_9 : f32 to vector<128x128xf32>
    %14 = arith.maximumf %12, %13 : vector<128x128xf32>
    %cst_10 = arith.constant dense<0.000000e+00> : vector<128xf32>
    %15 = vector.multi_reduction <add>, %14, %cst_10 [1] : vector<128x128xf32> to vector<128xf32>
    %16 = vector.shape_cast %15 : vector<128xf32> to vector<128x1xf32>
    %17 = arith.addf %9, %16 : vector<128x1xf32>
    %c0_11 = arith.constant 0 : index
    %c0_12 = arith.constant 0 : index
    %c0_13 = arith.constant 0 : index
    %18 = vector.load %arg9[%c0_11, %c0_12, %c0_13] : memref<2x128x2xf32, #tpu.memory_space<vmem>>, vector<1x128x1xf32>
    %19 = vector.shape_cast %18 : vector<1x128x1xf32> to vector<128x1xf32>
    %20 = arith.addf %19, %17 : vector<128x1xf32>
    %c0_14 = arith.constant 0 : index
    %c0_15 = arith.constant 0 : index
    %c0_16 = arith.constant 0 : index
    %21 = vector.load %arg9[%c0_14, %c0_15, %c0_16] : memref<2x128x2xf32, #tpu.memory_space<vmem>>, vector<1x128x1xf32>
    %22 = vector.shape_cast %21 : vector<1x128x1xf32> to vector<128x1xf32>
    %23 = vector.shape_cast %20 : vector<128x1xf32> to vector<1x128x1xf32>
    tpu.vector_store %arg9[%c0_14, %c0_15, %c0_16], %23 {strides = array<i32>} : memref<2x128x2xf32, #tpu.memory_space<vmem>>, vector<1x128x1xf32>,
    %cst_17 = arith.constant 0.000000e+00 : f32
    %24 = vector.broadcast %cst_17 : f32 to vector<128x1xf32>
    %c4 = arith.constant 4 : index
    %c0_18 = arith.constant 0 : index
    %25 = vector.load %arg1[%c4, %c0_18] : memref<8x128xf32, #tpu.memory_space<vmem>>, vector<4x128xf32>
    %cst_19 = arith.constant dense<0.000000e+00> : vector<128x128xf32>
    %26 = tpu.matmul %4, %25, %cst_19 {dimension_numbers = #tpu.dot_dimension_numbers<[1], [0], [0], [1], [0, 0, 1, 1], [], []>} : vector<128x4xf32>, vector<4x128xf32>, vector<128x128xf32> -> vector<128x128xf32>
    %27 = arith.addf %26, %8 : vector<128x128xf32>
    %cst_20 = arith.constant 0.000000e+00 : f32
    %28 = vector.broadcast %cst_20 : f32 to vector<128x128xf32>
    %29 = arith.maximumf %27, %28 : vector<128x128xf32>
    %cst_21 = arith.constant dense<0.000000e+00> : vector<128xf32>
    %30 = vector.multi_reduction <add>, %29, %cst_21 [1] : vector<128x128xf32> to vector<128xf32>
    %31 = vector.shape_cast %30 : vector<128xf32> to vector<128x1xf32>
    %32 = arith.addf %24, %31 : vector<128x1xf32>
    %c0_22 = arith.constant 0 : index
    %c0_23 = arith.constant 0 : index
    %c1 = arith.constant 1 : index
    %33 = vector.load %arg9[%c0_22, %c0_23, %c1] : memref<2x128x2xf32, #tpu.memory_space<vmem>>, vector<1x128x1xf32>
    %34 = vector.shape_cast %33 : vector<1x128x1xf32> to vector<128x1xf32>
    %35 = arith.addf %34, %32 : vector<128x1xf32>
    %c0_24 = arith.constant 0 : index
    %c0_25 = arith.constant 0 : index
    %c1_26 = arith.constant 1 : index
    %36 = vector.load %arg9[%c0_24, %c0_25, %c1_26] : memref<2x128x2xf32, #tpu.memory_space<vmem>>, vector<1x128x1xf32>
    %37 = vector.shape_cast %36 : vector<1x128x1xf32> to vector<128x1xf32>
    %38 = vector.shape_cast %35 : vector<128x1xf32> to vector<1x128x1xf32>
    tpu.vector_store %arg9[%c0_24, %c0_25, %c1_26], %38 {strides = array<i32>} : memref<2x128x2xf32, #tpu.memory_space<vmem>>, vector<1x128x1xf32>,
    %c1_27 = arith.constant 1 : index
    %c0_28 = arith.constant 0 : index
    %c0_29 = arith.constant 0 : index
    %39 = vector.load %arg2[%c1_27, %c0_28, %c0_29] : memref<2x128x4xf32, #tpu.memory_space<vmem>>, vector<1x128x4xf32>
    %40 = vector.shape_cast %39 : vector<1x128x4xf32> to vector<128x4xf32>
    %c1_30 = arith.constant 1 : index
    %c0_31 = arith.constant 0 : index
    %c0_32 = arith.constant 0 : index
    %41 = vector.load %arg3[%c1_30, %c0_31, %c0_32] : memref<2x128x1xf32, #tpu.memory_space<vmem>>, vector<1x128x1xf32>
    %42 = vector.shape_cast %41 : vector<1x128x1xf32> to vector<128x1xf32>
    %43 = vector.shape_cast %42 : vector<128x1xf32> to vector<128x1xf32>
    %44 = vector.broadcast %43 : vector<128x1xf32> to vector<128x128xf32>
    %cst_33 = arith.constant 0.000000e+00 : f32
    %45 = vector.broadcast %cst_33 : f32 to vector<128x1xf32>
    %c0_34 = arith.constant 0 : index
    %c0_35 = arith.constant 0 : index
    %46 = vector.load %arg1[%c0_34, %c0_35] : memref<8x128xf32, #tpu.memory_space<vmem>>, vector<4x128xf32>
    %cst_36 = arith.constant dense<0.000000e+00> : vector<128x128xf32>
    %47 = tpu.matmul %40, %46, %cst_36 {dimension_numbers = #tpu.dot_dimension_numbers<[1], [0], [0], [1], [0, 0, 1, 1], [], []>} : vector<128x4xf32>, vector<4x128xf32>, vector<128x128xf32> -> vector<128x128xf32>
    %48 = arith.addf %47, %44 : vector<128x128xf32>
    %cst_37 = arith.constant 0.000000e+00 : f32
    %49 = vector.broadcast %cst_37 : f32 to vector<128x128xf32>
    %50 = arith.maximumf %48, %49 : vector<128x128xf32>
    %cst_38 = arith.constant dense<0.000000e+00> : vector<128xf32>
    %51 = vector.multi_reduction <add>, %50, %cst_38 [1] : vector<128x128xf32> to vector<128xf32>
    %52 = vector.shape_cast %51 : vector<128xf32> to vector<128x1xf32>
    %53 = arith.addf %45, %52 : vector<128x1xf32>
    %c1_39 = arith.constant 1 : index
    %c0_40 = arith.constant 0 : index
    %c0_41 = arith.constant 0 : index
    %54 = vector.load %arg9[%c1_39, %c0_40, %c0_41] : memref<2x128x2xf32, #tpu.memory_space<vmem>>, vector<1x128x1xf32>
    %55 = vector.shape_cast %54 : vector<1x128x1xf32> to vector<128x1xf32>
    %56 = arith.addf %55, %53 : vector<128x1xf32>
    %c1_42 = arith.constant 1 : index
    %c0_43 = arith.constant 0 : index
    %c0_44 = arith.constant 0 : index
    %57 = vector.load %arg9[%c1_42, %c0_43, %c0_44] : memref<2x128x2xf32, #tpu.memory_space<vmem>>, vector<1x128x1xf32>
    %58 = vector.shape_cast %57 : vector<1x128x1xf32> to vector<128x1xf32>
    %59 = vector.shape_cast %56 : vector<128x1xf32> to vector<1x128x1xf32>
    tpu.vector_store %arg9[%c1_42, %c0_43, %c0_44], %59 {strides = array<i32>} : memref<2x128x2xf32, #tpu.memory_space<vmem>>, vector<1x128x1xf32>,
    %cst_45 = arith.constant 0.000000e+00 : f32
    %60 = vector.broadcast %cst_45 : f32 to vector<128x1xf32>
    %c4_46 = arith.constant 4 : index
    %c0_47 = arith.constant 0 : index
    %61 = vector.load %arg1[%c4_46, %c0_47] : memref<8x128xf32, #tpu.memory_space<vmem>>, vector<4x128xf32>
    %cst_48 = arith.constant dense<0.000000e+00> : vector<128x128xf32>
    %62 = tpu.matmul %40, %61, %cst_48 {dimension_numbers = #tpu.dot_dimension_numbers<[1], [0], [0], [1], [0, 0, 1, 1], [], []>} : vector<128x4xf32>, vector<4x128xf32>, vector<128x128xf32> -> vector<128x128xf32>
    %63 = arith.addf %62, %44 : vector<128x128xf32>
    %cst_49 = arith.constant 0.000000e+00 : f32
    %64 = vector.broadcast %cst_49 : f32 to vector<128x128xf32>
    %65 = arith.maximumf %63, %64 : vector<128x128xf32>
    %cst_50 = arith.constant dense<0.000000e+00> : vector<128xf32>
    %66 = vector.multi_reduction <add>, %65, %cst_50 [1] : vector<128x128xf32> to vector<128xf32>
    %67 = vector.shape_cast %66 : vector<128xf32> to vector<128x1xf32>
    %68 = arith.addf %60, %67 : vector<128x1xf32>
    %c1_51 = arith.constant 1 : index
    %c0_52 = arith.constant 0 : index
    %c1_53 = arith.constant 1 : index
    %69 = vector.load %arg9[%c1_51, %c0_52, %c1_53] : memref<2x128x2xf32, #tpu.memory_space<vmem>>, vector<1x128x1xf32>
    %70 = vector.shape_cast %69 : vector<1x128x1xf32> to vector<128x1xf32>
    %71 = arith.addf %70, %68 : vector<128x1xf32>
    %c1_54 = arith.constant 1 : index
    %c0_55 = arith.constant 0 : index
    %c1_56 = arith.constant 1 : index
    %72 = vector.load %arg9[%c1_54, %c0_55, %c1_56] : memref<2x128x2xf32, #tpu.memory_space<vmem>>, vector<1x128x1xf32>
    %73 = vector.shape_cast %72 : vector<1x128x1xf32> to vector<128x1xf32>
    %74 = vector.shape_cast %71 : vector<128x1xf32> to vector<1x128x1xf32>
    tpu.vector_store %arg9[%c1_54, %c0_55, %c1_56], %74 {strides = array<i32>} : memref<2x128x2xf32, #tpu.memory_space<vmem>>, vector<1x128x1xf32>,
    %c1_i32 = arith.constant 1 : i32
    %75 = arith.cmpi eq, %arg0, %c1_i32 : i32
    %76 = arith.extui %75 : i1 to i32
    %c0_i32_57 = arith.constant 0 : i32
    %77 = arith.cmpi ne, %76, %c0_i32_57 : i32
    scf.if %77 {
      %c0_58 = arith.constant 0 : index
      %c0_59 = arith.constant 0 : index
      %c0_60 = arith.constant 0 : index
      %78 = vector.load %arg9[%c0_58, %c0_59, %c0_60] : memref<2x128x2xf32, #tpu.memory_space<vmem>>, vector<1x128x2xf32>
      %79 = vector.shape_cast %78 : vector<1x128x2xf32> to vector<128x2xf32>
      %cst_61 = arith.constant 3.906250e-03 : f32
      %80 = vector.broadcast %cst_61 : f32 to vector<128x2xf32>
      %81 = arith.mulf %79, %80 : vector<128x2xf32>
      %c0_62 = arith.constant 0 : index
      %c0_63 = arith.constant 0 : index
      %c0_64 = arith.constant 0 : index
      %82 = vector.load %arg4[%c0_62, %c0_63, %c0_64] : memref<2x128x128xf32, #tpu.memory_space<vmem>>, vector<1x128x128xf32>
      %83 = vector.shape_cast %82 : vector<1x128x128xf32> to vector<128x128xf32>
      %cst_65 = arith.constant dense<0.000000e+00> : vector<128x2xf32>
      %84 = tpu.matmul %83, %81, %cst_65 {dimension_numbers = #tpu.dot_dimension_numbers<[1], [0], [0], [1], [0, 0, 1, 1], [], []>} : vector<128x128xf32>, vector<128x2xf32>, vector<128x2xf32> -> vector<128x2xf32>
      %c0_66 = arith.constant 0 : index
      %c0_67 = arith.constant 0 : index
      %c0_68 = arith.constant 0 : index
      %85 = vector.load %arg5[%c0_66, %c0_67, %c0_68] : memref<2x128x1xf32, #tpu.memory_space<vmem>>, vector<1x128x1xf32>
      %86 = vector.shape_cast %85 : vector<1x128x1xf32> to vector<128x1xf32>
      %87 = vector.broadcast %86 : vector<128x1xf32> to vector<128x2xf32>
      %88 = arith.addf %84, %87 : vector<128x2xf32>
      %89 = arith.mulf %88, %88 : vector<128x2xf32>
      %90 = arith.mulf %88, %89 : vector<128x2xf32>
      %cst_69 = arith.constant 4.471500e-02 : f32
      %91 = vector.broadcast %cst_69 : f32 to vector<128x2xf32>
      %92 = arith.mulf %91, %90 : vector<128x2xf32>
      %93 = arith.addf %88, %92 : vector<128x2xf32>
      %cst_70 = arith.constant 0.797884583 : f32
      %94 = vector.broadcast %cst_70 : f32 to vector<128x2xf32>
      %95 = arith.mulf %94, %93 : vector<128x2xf32>
      %96 = math.tanh %95 : vector<128x2xf32>
      %cst_71 = arith.constant 1.000000e+00 : f32
      %97 = vector.broadcast %cst_71 : f32 to vector<128x2xf32>
      %98 = arith.addf %97, %96 : vector<128x2xf32>
      %cst_72 = arith.constant 5.000000e-01 : f32
      %99 = vector.broadcast %cst_72 : f32 to vector<128x2xf32>
      %100 = arith.mulf %99, %98 : vector<128x2xf32>
      %101 = arith.mulf %88, %100 : vector<128x2xf32>
      %c0_73 = arith.constant 0 : index
      %c0_74 = arith.constant 0 : index
      %c0_75 = arith.constant 0 : index
      %102 = vector.load %arg6[%c0_73, %c0_74, %c0_75] : memref<2x128x128xf32, #tpu.memory_space<vmem>>, vector<1x128x128xf32>
      %103 = vector.shape_cast %102 : vector<1x128x128xf32> to vector<128x128xf32>
      %cst_76 = arith.constant dense<0.000000e+00> : vector<128x2xf32>
      %104 = tpu.matmul %103, %101, %cst_76 {dimension_numbers = #tpu.dot_dimension_numbers<[1], [0], [0], [1], [0, 0, 1, 1], [], []>} : vector<128x128xf32>, vector<128x2xf32>, vector<128x2xf32> -> vector<128x2xf32>
      %c0_77 = arith.constant 0 : index
      %c0_78 = arith.constant 0 : index
      %c0_79 = arith.constant 0 : index
      %105 = vector.load %arg7[%c0_77, %c0_78, %c0_79] : memref<2x128x1xf32, #tpu.memory_space<vmem>>, vector<1x128x1xf32>
      %106 = vector.shape_cast %105 : vector<1x128x1xf32> to vector<128x1xf32>
      %107 = vector.broadcast %106 : vector<128x1xf32> to vector<128x2xf32>
      %108 = arith.addf %104, %107 : vector<128x2xf32>
      %c0_80 = arith.constant 0 : index
      %c0_81 = arith.constant 0 : index
      %c0_82 = arith.constant 0 : index
      %109 = vector.load %arg8[%c0_80, %c0_81, %c0_82] : memref<2x128x2xf32, #tpu.memory_space<vmem>>, vector<1x128x2xf32>
      %110 = vector.shape_cast %109 : vector<1x128x2xf32> to vector<128x2xf32>
      %111 = vector.shape_cast %108 : vector<128x2xf32> to vector<1x128x2xf32>
      tpu.vector_store %arg8[%c0_80, %c0_81, %c0_82], %111 {strides = array<i32>} : memref<2x128x2xf32, #tpu.memory_space<vmem>>, vector<1x128x2xf32>,
      %c1_83 = arith.constant 1 : index
      %c0_84 = arith.constant 0 : index
      %c0_85 = arith.constant 0 : index
      %112 = vector.load %arg9[%c1_83, %c0_84, %c0_85] : memref<2x128x2xf32, #tpu.memory_space<vmem>>, vector<1x128x2xf32>
      %113 = vector.shape_cast %112 : vector<1x128x2xf32> to vector<128x2xf32>
      %cst_86 = arith.constant 3.906250e-03 : f32
      %114 = vector.broadcast %cst_86 : f32 to vector<128x2xf32>
      %115 = arith.mulf %113, %114 : vector<128x2xf32>
      %c1_87 = arith.constant 1 : index
      %c0_88 = arith.constant 0 : index
      %c0_89 = arith.constant 0 : index
      %116 = vector.load %arg4[%c1_87, %c0_88, %c0_89] : memref<2x128x128xf32, #tpu.memory_space<vmem>>, vector<1x128x128xf32>
      %117 = vector.shape_cast %116 : vector<1x128x128xf32> to vector<128x128xf32>
      %cst_90 = arith.constant dense<0.000000e+00> : vector<128x2xf32>
      %118 = tpu.matmul %117, %115, %cst_90 {dimension_numbers = #tpu.dot_dimension_numbers<[1], [0], [0], [1], [0, 0, 1, 1], [], []>} : vector<128x128xf32>, vector<128x2xf32>, vector<128x2xf32> -> vector<128x2xf32>
      %c1_91 = arith.constant 1 : index
      %c0_92 = arith.constant 0 : index
      %c0_93 = arith.constant 0 : index
      %119 = vector.load %arg5[%c1_91, %c0_92, %c0_93] : memref<2x128x1xf32, #tpu.memory_space<vmem>>, vector<1x128x1xf32>
      %120 = vector.shape_cast %119 : vector<1x128x1xf32> to vector<128x1xf32>
      %121 = vector.broadcast %120 : vector<128x1xf32> to vector<128x2xf32>
      %122 = arith.addf %118, %121 : vector<128x2xf32>
      %123 = arith.mulf %122, %122 : vector<128x2xf32>
      %124 = arith.mulf %122, %123 : vector<128x2xf32>
      %cst_94 = arith.constant 4.471500e-02 : f32
      %125 = vector.broadcast %cst_94 : f32 to vector<128x2xf32>
      %126 = arith.mulf %125, %124 : vector<128x2xf32>
      %127 = arith.addf %122, %126 : vector<128x2xf32>
      %cst_95 = arith.constant 0.797884583 : f32
      %128 = vector.broadcast %cst_95 : f32 to vector<128x2xf32>
      %129 = arith.mulf %128, %127 : vector<128x2xf32>
      %130 = math.tanh %129 : vector<128x2xf32>
      %cst_96 = arith.constant 1.000000e+00 : f32
      %131 = vector.broadcast %cst_96 : f32 to vector<128x2xf32>
      %132 = arith.addf %131, %130 : vector<128x2xf32>
      %cst_97 = arith.constant 5.000000e-01 : f32
      %133 = vector.broadcast %cst_97 : f32 to vector<128x2xf32>
      %134 = arith.mulf %133, %132 : vector<128x2xf32>
      %135 = arith.mulf %122, %134 : vector<128x2xf32>
      %c1_98 = arith.constant 1 : index
      %c0_99 = arith.constant 0 : index
      %c0_100 = arith.constant 0 : index
      %136 = vector.load %arg6[%c1_98, %c0_99, %c0_100] : memref<2x128x128xf32, #tpu.memory_space<vmem>>, vector<1x128x128xf32>
      %137 = vector.shape_cast %136 : vector<1x128x128xf32> to vector<128x128xf32>
      %cst_101 = arith.constant dense<0.000000e+00> : vector<128x2xf32>
      %138 = tpu.matmul %137, %135, %cst_101 {dimension_numbers = #tpu.dot_dimension_numbers<[1], [0], [0], [1], [0, 0, 1, 1], [], []>} : vector<128x128xf32>, vector<128x2xf32>, vector<128x2xf32> -> vector<128x2xf32>
      %c1_102 = arith.constant 1 : index
      %c0_103 = arith.constant 0 : index
      %c0_104 = arith.constant 0 : index
      %139 = vector.load %arg7[%c1_102, %c0_103, %c0_104] : memref<2x128x1xf32, #tpu.memory_space<vmem>>, vector<1x128x1xf32>
      %140 = vector.shape_cast %139 : vector<1x128x1xf32> to vector<128x1xf32>
      %141 = vector.broadcast %140 : vector<128x1xf32> to vector<128x2xf32>
      %142 = arith.addf %138, %141 : vector<128x2xf32>
      %c1_105 = arith.constant 1 : index
      %c0_106 = arith.constant 0 : index
      %c0_107 = arith.constant 0 : index
      %143 = vector.load %arg8[%c1_105, %c0_106, %c0_107] : memref<2x128x2xf32, #tpu.memory_space<vmem>>, vector<1x128x2xf32>
      %144 = vector.shape_cast %143 : vector<1x128x2xf32> to vector<128x2xf32>
      %145 = vector.shape_cast %142 : vector<128x2xf32> to vector<1x128x2xf32>
      tpu.vector_store %arg8[%c1_105, %c0_106, %c0_107], %145 {strides = array<i32>} : memref<2x128x2xf32, #tpu.memory_space<vmem>>, vector<1x128x2xf32>,
    } else {
    }
    return
  }
  func.func @transform_0(%arg0: i32) -> (i32, i32) {
    %c0_i32 = arith.constant 0 : i32
    %c0_i32_0 = arith.constant 0 : i32
    return %c0_i32, %arg0 : i32, i32
  }
  func.func @transform_1(%arg0: i32) -> (i32, i32, i32) {
    %c0_i32 = arith.constant 0 : i32
    %c0_i32_0 = arith.constant 0 : i32
    %c0_i32_1 = arith.constant 0 : i32
    %c0_i32_2 = arith.constant 0 : i32
    return %c0_i32, %c0_i32_0, %c0_i32_1 : i32, i32, i32
  }
  func.func @transform_2(%arg0: i32) -> (i32, i32, i32) {
    %c0_i32 = arith.constant 0 : i32
    %c0_i32_0 = arith.constant 0 : i32
    %c0_i32_1 = arith.constant 0 : i32
    %c0_i32_2 = arith.constant 0 : i32
    return %c0_i32, %c0_i32_0, %c0_i32_1 : i32, i32, i32
  }
  func.func @transform_3(%arg0: i32) -> (i32, i32, i32) {
    %c0_i32 = arith.constant 0 : i32
    %c0_i32_0 = arith.constant 0 : i32
    %c0_i32_1 = arith.constant 0 : i32
    %c0_i32_2 = arith.constant 0 : i32
    return %c0_i32, %c0_i32_0, %c0_i32_1 : i32, i32, i32
  }
  func.func @transform_4(%arg0: i32) -> (i32, i32, i32) {
    %c0_i32 = arith.constant 0 : i32
    %c0_i32_0 = arith.constant 0 : i32
    %c0_i32_1 = arith.constant 0 : i32
    %c0_i32_2 = arith.constant 0 : i32
    return %c0_i32, %c0_i32_0, %c0_i32_1 : i32, i32, i32
  }
  func.func @transform_5(%arg0: i32) -> (i32, i32, i32) {
    %c0_i32 = arith.constant 0 : i32
    %c0_i32_0 = arith.constant 0 : i32
    %c0_i32_1 = arith.constant 0 : i32
    %c0_i32_2 = arith.constant 0 : i32
    return %c0_i32, %c0_i32_0, %c0_i32_1 : i32, i32, i32
  }
  func.func @transform_6(%arg0: i32) -> (i32, i32, i32) {
    %c0_i32 = arith.constant 0 : i32
    %c0_i32_0 = arith.constant 0 : i32
    %c0_i32_1 = arith.constant 0 : i32
    %c0_i32_2 = arith.constant 0 : i32
    return %c0_i32, %c0_i32_0, %c0_i32_1 : i32, i32, i32
  }
  func.func @transform_7(%arg0: i32) -> (i32, i32, i32) {
    %c0_i32 = arith.constant 0 : i32
    %c0_i32_0 = arith.constant 0 : i32
    %c0_i32_1 = arith.constant 0 : i32
    %c0_i32_2 = arith.constant 0 : i32
    return %c0_i32, %c0_i32_0, %c0_i32_1 : i32, i32, i32
  }
}

</mosaic_0001>

<llo_original>
// kernel: teacher_student_forward.1
$region0: #{teacher_student_forward.1}
  #allocation0 [shape = 'u32[]', space=smem, size = 0x4, offset = 0x4, fixed_abs, tag = 'smem constant byte address 0x4 - core index']
  #allocation1 [shape = 'u32[144,128]{1,0:T(1,128)}', space=vmem, size = 0x12000, scoped, tag = 'internal scratch']
  #allocation2 [shape = 'f32[2,128,2]{2,1,0:T(8,128)}', space=vmem, size = 0x20000, scoped, tag = 'scratch operand']
  %s0 = inlined_call_operand.vmem [shape: f32[8,256], index: 0, kind: input, shape index: {}]
  %s1 = inlined_call_operand.vmem [shape: f32[2,128,4], index: 1, kind: input, shape index: {}]
  %s2 = inlined_call_operand.vmem [shape: f32[2,128,1], index: 2, kind: input, shape index: {}]
  %s3 = inlined_call_operand.vmem [shape: f32[2,128,128], index: 3, kind: input, shape index: {}]
  %s4 = inlined_call_operand.vmem [shape: f32[2,128,1], index: 4, kind: input, shape index: {}]
  %s5 = inlined_call_operand.vmem [shape: f32[2,128,128], index: 5, kind: input, shape index: {}]
  %s6 = inlined_call_operand.vmem [shape: f32[2,128,1], index: 6, kind: input, shape index: {}]
  %s7 = inlined_call_operand.vmem [shape: f32[2,128,2], index: 7, kind: output, shape index: {}]
  %s8 = sld [smem:[#allocation0]]
  $region69: #{teacher_student_forward.1} parent=0
    _
  %s10 = ssub.s32 1, %s8
  %s11 = scalar_select 0, %s10, %s8
  loop: start=0, step=1, limit=4
  $region2: #{teacher_student_forward.1} parent=0 // loop_pre_header
    _
  $region3: #{teacher_student_forward.1} parent=0 // loop_header
    %s13 = sphi 0, %s17
    %p14 = scmp.ge.s32.totalorder %s13, 4
    %s23 = sphi 0, %s25
    %s26 = sphi 0, %s23
    %s27 = sphi 0, %s26
    %s43 = sphi 0, %s27
    %s47 = sphi 0, %s47
    %s49 = sphi 0, %s47
    %s50 = sphi 0, %s49
    %s64 = sphi 0, %s50
    %s68 = sphi 0, %s68
    %s70 = sphi 0, %s68
    %s71 = sphi 0, %s70
    %s85 = sphi 0, %s71
    %s89 = sphi 0, %s89
    %s91 = sphi 0, %s89
    %s92 = sphi 0, %s91
    %s106 = sphi 0, %s92
    %s110 = sphi 0, %s110
    %s112 = sphi 0, %s110
    %s113 = sphi 0, %s112
    %s127 = sphi 0, %s113
    %s131 = sphi 0, %s131
    %s133 = sphi 0, %s131
    %s134 = sphi 0, %s133
    %s148 = sphi 0, %s134
    %s152 = sphi 0, %s152
    %s154 = sphi 0, %s152
    %s155 = sphi 0, %s154
    %s169 = sphi 0, %s155
    %s173 = sphi 0, %s173
    %s175 = sphi 0, %s173
    %s176 = sphi 0, %s175
    %s190 = sphi 0, %s176
  $region4: #{teacher_student_forward.1} parent=0 // loop_header_branch
    %16 = sbr.rel (%p14) target = $region8
  $region5: #{teacher_student_forward.1} parent=0 // loop_body
    %s18 = ssub.s32 %s13, 1
    %s19 = ssub.s32 %s13, 2
    %s20 = sadd.s32 %s13, 1
    %s21 = ssub.s32 %s13, %s20
    %p22 = scmp.eq.s32.totalorder %s21, 0
    %s24 = sadd.s32 %s23, 1
    %s25 = scalar_select %p22, %s23, %s24
    %p28 = pneg %p22
    %p29 = scmp.eq.s32.totalorder %s13, 1
    %p30 = por %p28, %p29
    %p31 = scmp.ne.s32.totalorder %s23, %s26
    %p32 = scmp.eq.s32.totalorder %s13, 0
    %p33 = por %p31, %p32
    %p34 = scmp.ne.s32.totalorder %s23, %s26
    %p35 = scmp.eq.s32.totalorder %s18, 1
    %p36 = por %p34, %p35
    %p37 = scmp.ne.s32.totalorder %s26, %s27
    %p38 = scmp.eq.s32.totalorder %s18, 0
    %p39 = por %p37, %p38
    %p40 = scmp.ne.s32.totalorder %s26, %s27
    %p41 = scmp.eq.s32.totalorder %s19, 1
    %p42 = por %p40, %p41
    %p44 = scmp.ne.s32.totalorder %s27, %s43
    %p45 = scmp.eq.s32.totalorder %s19, 0
    %p46 = por %p44, %p45
    %s48 = sadd.s32 %s47, 1
    %p51 = scmp.eq.s32.totalorder %s13, 1
    %p52 = scmp.ne.s32.totalorder %s47, %s49
    %p53 = scmp.eq.s32.totalorder %s13, 0
    %p54 = por %p52, %p53
    %p55 = scmp.ne.s32.totalorder %s47, %s49
    %p56 = scmp.eq.s32.totalorder %s18, 1
    %p57 = por %p55, %p56
    %p58 = scmp.ne.s32.totalorder %s49, %s50
    %p59 = scmp.eq.s32.totalorder %s18, 0
    %p60 = por %p58, %p59
    %p61 = scmp.ne.s32.totalorder %s49, %s50
    %p62 = scmp.eq.s32.totalorder %s19, 1
    %p63 = por %p61, %p62
    %p65 = scmp.ne.s32.totalorder %s50, %s64
    %p66 = scmp.eq.s32.totalorder %s19, 0
    %p67 = por %p65, %p66
    %s69 = sadd.s32 %s68, 1
    %p72 = scmp.eq.s32.totalorder %s13, 1
    %p73 = scmp.ne.s32.totalorder %s68, %s70
    %p74 = scmp.eq.s32.totalorder %s13, 0
    %p75 = por %p73, %p74
    %p76 = scmp.ne.s32.totalorder %s68, %s70
    %p77 = scmp.eq.s32.totalorder %s18, 1
    %p78 = por %p76, %p77
    %p79 = scmp.ne.s32.totalorder %s70, %s71
    %p80 = scmp.eq.s32.totalorder %s18, 0
    %p81 = por %p79, %p80
    %p82 = scmp.ne.s32.totalorder %s70, %s71
    %p83 = scmp.eq.s32.totalorder %s19, 1
    %p84 = por %p82, %p83
    %p86 = scmp.ne.s32.totalorder %s71, %s85
    %p87 = scmp.eq.s32.totalorder %s19, 0
    %p88 = por %p86, %p87
    %s90 = sadd.s32 %s89, 1
    %p93 = scmp.eq.s32.totalorder %s13, 1
    %p94 = scmp.ne.s32.totalorder %s89, %s91
    %p95 = scmp.eq.s32.totalorder %s13, 0
    %p96 = por %p94, %p95
    %p97 = scmp.ne.s32.totalorder %s89, %s91
    %p98 = scmp.eq.s32.totalorder %s18, 1
    %p99 = por %p97, %p98
    %p100 = scmp.ne.s32.totalorder %s91, %s92
    %p101 = scmp.eq.s32.totalorder %s18, 0
    %p102 = por %p100, %p101
    %p103 = scmp.ne.s32.totalorder %s91, %s92
    %p104 = scmp.eq.s32.totalorder %s19, 1
    %p105 = por %p103, %p104
    %p107 = scmp.ne.s32.totalorder %s92, %s106
    %p108 = scmp.eq.s32.totalorder %s19, 0
    %p109 = por %p107, %p108
    %s111 = sadd.s32 %s110, 1
    %p114 = scmp.eq.s32.totalorder %s13, 1
    %p115 = scmp.ne.s32.totalorder %s110, %s112
    %p116 = scmp.eq.s32.totalorder %s13, 0
    %p117 = por %p115, %p116
    %p118 = scmp.ne.s32.totalorder %s110, %s112
    %p119 = scmp.eq.s32.totalorder %s18, 1
    %p120 = por %p118, %p119
    %p121 = scmp.ne.s32.totalorder %s112, %s113
    %p122 = scmp.eq.s32.totalorder %s18, 0
    %p123 = por %p121, %p122
    %p124 = scmp.ne.s32.totalorder %s112, %s113
    %p125 = scmp.eq.s32.totalorder %s19, 1
    %p126 = por %p124, %p125
    %p128 = scmp.ne.s32.totalorder %s113, %s127
    %p129 = scmp.eq.s32.totalorder %s19, 0
    %p130 = por %p128, %p129
    %s132 = sadd.s32 %s131, 1
    %p135 = scmp.eq.s32.totalorder %s13, 1
    %p136 = scmp.ne.s32.totalorder %s131, %s133
    %p137 = scmp.eq.s32.totalorder %s13, 0
    %p138 = por %p136, %p137
    %p139 = scmp.ne.s32.totalorder %s131, %s133
    %p140 = scmp.eq.s32.totalorder %s18, 1
    %p141 = por %p139, %p140
    %p142 = scmp.ne.s32.totalorder %s133, %s134
    %p143 = scmp.eq.s32.totalorder %s18, 0
    %p144 = por %p142, %p143
    %p145 = scmp.ne.s32.totalorder %s133, %s134
    %p146 = scmp.eq.s32.totalorder %s19, 1
    %p147 = por %p145, %p146
    %p149 = scmp.ne.s32.totalorder %s134, %s148
    %p150 = scmp.eq.s32.totalorder %s19, 0
    %p151 = por %p149, %p150
    %s153 = sadd.s32 %s152, 1
    %p156 = scmp.eq.s32.totalorder %s13, 1
    %p157 = scmp.ne.s32.totalorder %s152, %s154
    %p158 = scmp.eq.s32.totalorder %s13, 0
    %p159 = por %p157, %p158
    %p160 = scmp.ne.s32.totalorder %s152, %s154
    %p161 = scmp.eq.s32.totalorder %s18, 1
    %p162 = por %p160, %p161
    %p163 = scmp.ne.s32.totalorder %s154, %s155
    %p164 = scmp.eq.s32.totalorder %s18, 0
    %p165 = por %p163, %p164
    %p166 = scmp.ne.s32.totalorder %s154, %s155
    %p167 = scmp.eq.s32.totalorder %s19, 1
    %p168 = por %p166, %p167
    %p170 = scmp.ne.s32.totalorder %s155, %s169
    %p171 = scmp.eq.s32.totalorder %s19, 0
    %p172 = por %p170, %p171
    %s174 = sadd.s32 %s173, 1
    %p177 = scmp.eq.s32.totalorder %s13, 1
    %p178 = scmp.ne.s32.totalorder %s173, %s175
    %p179 = scmp.eq.s32.totalorder %s13, 0
    %p180 = por %p178, %p179
    %p181 = scmp.ne.s32.totalorder %s173, %s175
    %p182 = scmp.eq.s32.totalorder %s18, 1
    %p183 = por %p181, %p182
    %p184 = scmp.ne.s32.totalorder %s175, %s176
    %p185 = scmp.eq.s32.totalorder %s18, 0
    %p186 = por %p184, %p185
    %p187 = scmp.ne.s32.totalorder %s175, %s176
    %p188 = scmp.eq.s32.totalorder %s19, 1
    %p189 = por %p187, %p188
    %p191 = scmp.ne.s32.totalorder %s176, %s190
    %p192 = scmp.eq.s32.totalorder %s19, 0
    %p193 = por %p191, %p192
    %p194 = scmp.le.s32.totalorder 1, %s13
    %p195 = scmp.lt.s32.totalorder %s13, 3
    %p196 = pnand %p194, %p195
    %p197 = pneg %p196
    // Predicated region
    $region9: #{teacher_student_forward.1} parent=5 // pred_check
      _
    $region10: #{teacher_student_forward.1} parent=5 // pred_check_branch
      %199 = sbr.rel (%p196) target = $region12
    $region11: #{teacher_student_forward.1} parent=5 // pred_region
      %s200 = ssub.s32 %s13, 1
      // Predicated region
      $region13: #{teacher_student_forward.1} parent=11 // pred_check
        %p201 = pneg %p60
      $region14: #{teacher_student_forward.1} parent=11 // pred_check_branch
        %203 = sbr.rel (%p201) target = $region16
      $region15: #{teacher_student_forward.1} parent=11 // pred_region
        _
      $region16: #{teacher_student_forward.1} parent=11 // pred_fallthru
        _
      // Predicated region
      $region17: #{teacher_student_forward.1} parent=11 // pred_check
        %p204 = pneg %p81
      $region18: #{teacher_student_forward.1} parent=11 // pred_check_branch
        %206 = sbr.rel (%p204) target = $region20
      $region19: #{teacher_student_forward.1} parent=11 // pred_region
        _
      $region20: #{teacher_student_forward.1} parent=11 // pred_fallthru
        _
      // Predicated region
      $region21: #{teacher_student_forward.1} parent=11 // pred_check
        %p207 = pneg %p102
      $region22: #{teacher_student_forward.1} parent=11 // pred_check_branch
        %209 = sbr.rel (%p207) target = $region24
      $region23: #{teacher_student_forward.1} parent=11 // pred_region
        _
      $region24: #{teacher_student_forward.1} parent=11 // pred_fallthru
        _
      // Predicated region
      $region25: #{teacher_student_forward.1} parent=11 // pred_check
        %p210 = pneg %p123
      $region26: #{teacher_student_forward.1} parent=11 // pred_check_branch
        %212 = sbr.rel (%p210) target = $region28
      $region27: #{teacher_student_forward.1} parent=11 // pred_region
        _
      $region28: #{teacher_student_forward.1} parent=11 // pred_fallthru
        _
      // Predicated region
      $region29: #{teacher_student_forward.1} parent=11 // pred_check
        %p213 = pneg %p144
      $region30: #{teacher_student_forward.1} parent=11 // pred_check_branch
        %215 = sbr.rel (%p213) target = $region32
      $region31: #{teacher_student_forward.1} parent=11 // pred_region
        _
      $region32: #{teacher_student_forward.1} parent=11 // pred_fallthru
        _
      // Predicated region
      $region33: #{teacher_student_forward.1} parent=11 // pred_check
        %p216 = pneg %p165
      $region34: #{teacher_student_forward.1} parent=11 // pred_check_branch
        %218 = sbr.rel (%p216) target = $region36
      $region35: #{teacher_student_forward.1} parent=11 // pred_region
        _
      $region36: #{teacher_student_forward.1} parent=11 // pred_fallthru
        _
    $region12: #{teacher_student_forward.1} parent=5 // pred_fallthru
      _
    %p219 = scmp.lt.s32.totalorder %s13, 2
    // Predicated region
    $region37: #{teacher_student_forward.1} parent=5 // pred_check
      %p220 = pneg %p219
    $region38: #{teacher_student_forward.1} parent=5 // pred_check_branch
      %222 = sbr.rel (%p220) target = $region40
    $region39: #{teacher_student_forward.1} parent=5 // pred_region
      // Predicated region
      $region41: #{teacher_student_forward.1} parent=39 // pred_check
        %p223 = pneg %p33
      $region42: #{teacher_student_forward.1} parent=39 // pred_check_branch
        %225 = sbr.rel (%p223) target = $region44
      $region43: #{teacher_student_forward.1} parent=39 // pred_region
        %p226 = scmp.lt.s32.totalorder %s13, 1
        %s227 = scalar_select %p226, %s13, 1
        %s228 = smul.addr %s227, 8
        %s229 = scalar_lea.vmem %s0, %s228
      $region44: #{teacher_student_forward.1} parent=39 // pred_fallthru
        _
    $region40: #{teacher_student_forward.1} parent=5 // pred_fallthru
      _
    %p230 = scmp.le.s32.totalorder 1, %s13
    %p231 = scmp.lt.s32.totalorder %s13, 3
    %p232 = pnand %p230, %p231
    %p233 = pneg %p232
    // Predicated region
    $region45: #{teacher_student_forward.1} parent=5 // pred_check
      _
    $region46: #{teacher_student_forward.1} parent=5 // pred_check_branch
      %235 = sbr.rel (%p232) target = $region48
    $region47: #{teacher_student_forward.1} parent=5 // pred_region
      %s236 = ssub.s32 %s13, 1
      %p237 = scmp.lt.s32.totalorder %s18, 1
      %s238 = scalar_select %p237, %s18, 1
      %s239 = smul.addr %s238, 8
      %s240 = scalar_lea.vmem %s0, %s239
      %p241 = pneg %p39
      %p242 = pneg %p36
      %p243 = pneg %p60
      %p244 = pneg %p57
      %p245 = pneg %p81
      %p246 = pneg %p78
      %p247 = pneg %p102
      %p248 = pneg %p99
      %p249 = pneg %p123
      %p250 = pneg %p120
      %p251 = pneg %p144
      %p252 = pneg %p141
      %p253 = pneg %p165
      %p254 = pneg %p162
      %p255 = pneg %p186
      %p256 = pneg %p183
      %p257 = scmp.lt.s32.totalorder %s18, 1
      %s258 = scalar_select %p257, %s18, 1
      %s259 = smul.addr %s258, 8
      %s260 = scalar_lea.vmem %s0, %s259
      %p261 = scmp.eq.s32.totalorder %s18, 0
      // Predicated region
      $region49: #{teacher_student_forward.1} parent=47 // pred_check
        %p262 = pneg %p261
      $region50: #{teacher_student_forward.1} parent=47 // pred_check_branch
        %264 = sbr.rel (%p262) target = $region52
      $region51: #{teacher_student_forward.1} parent=47 // pred_region
        %vm265 = vcmask 15360
        %266 = vst.msk [vmem:[#allocation2] sm:$0xff] %vm265, 0.0
        %267 = vst.msk [vmem:[#allocation2 + $0x8] sm:$0xff] %vm265, 0.0
        %268 = vst.msk [vmem:[#allocation2 + $0x10] sm:$0xff] %vm265, 0.0
        %269 = vst.msk [vmem:[#allocation2 + $0x18] sm:$0xff] %vm265, 0.0
        %270 = vst.msk [vmem:[#allocation2 + $0x20] sm:$0xff] %vm265, 0.0
        %271 = vst.msk [vmem:[#allocation2 + $0x28] sm:$0xff] %vm265, 0.0
        %272 = vst.msk [vmem:[#allocation2 + $0x30] sm:$0xff] %vm265, 0.0
        %273 = vst.msk [vmem:[#allocation2 + $0x38] sm:$0xff] %vm265, 0.0
        %274 = vst.msk [vmem:[#allocation2 + $0x40] sm:$0xff] %vm265, 0.0
        %275 = vst.msk [vmem:[#allocation2 + $0x48] sm:$0xff] %vm265, 0.0
        %276 = vst.msk [vmem:[#allocation2 + $0x50] sm:$0xff] %vm265, 0.0
        %277 = vst.msk [vmem:[#allocation2 + $0x58] sm:$0xff] %vm265, 0.0
        %278 = vst.msk [vmem:[#allocation2 + $0x60] sm:$0xff] %vm265, 0.0
        %279 = vst.msk [vmem:[#allocation2 + $0x68] sm:$0xff] %vm265, 0.0
        %280 = vst.msk [vmem:[#allocation2 + $0x70] sm:$0xff] %vm265, 0.0
        %281 = vst.msk [vmem:[#allocation2 + $0x78] sm:$0xff] %vm265, 0.0
        %282 = vst.msk [vmem:[#allocation2 + $0x80] sm:$0xff] %vm265, 0.0
        %283 = vst.msk [vmem:[#allocation2 + $0x88] sm:$0xff] %vm265, 0.0
        %284 = vst.msk [vmem:[#allocation2 + $0x90] sm:$0xff] %vm265, 0.0
        %285 = vst.msk [vmem:[#allocation2 + $0x98] sm:$0xff] %vm265, 0.0
        %286 = vst.msk [vmem:[#allocation2 + $0xa0] sm:$0xff] %vm265, 0.0
        %287 = vst.msk [vmem:[#allocation2 + $0xa8] sm:$0xff] %vm265, 0.0
        %288 = vst.msk [vmem:[#allocation2 + $0xb0] sm:$0xff] %vm265, 0.0
        %289 = vst.msk [vmem:[#allocation2 + $0xb8] sm:$0xff] %vm265, 0.0
        %290 = vst.msk [vmem:[#allocation2 + $0xc0] sm:$0xff] %vm265, 0.0
        %291 = vst.msk [vmem:[#allocation2 + $0xc8] sm:$0xff] %vm265, 0.0
        %292 = vst.msk [vmem:[#allocation2 + $0xd0] sm:$0xff] %vm265, 0.0
        %293 = vst.msk [vmem:[#allocation2 + $0xd8] sm:$0xff] %vm265, 0.0
        %294 = vst.msk [vmem:[#allocation2 + $0xe0] sm:$0xff] %vm265, 0.0
        %295 = vst.msk [vmem:[#allocation2 + $0xe8] sm:$0xff] %vm265, 0.0
        %296 = vst.msk [vmem:[#allocation2 + $0xf0] sm:$0xff] %vm265, 0.0
        %297 = vst.msk [vmem:[#allocation2 + $0xf8] sm:$0xff] %vm265, 0.0
      $region52: #{teacher_student_forward.1} parent=47 // pred_fallthru
        _
      %v298 = vld [vmem:[%s1] sm:$0xff]
      %v299 = vld [vmem:[%s1 + $0x8] sm:$0xff]
      %v300 = vld [vmem:[%s1 + $0x10] sm:$0xff]
      %v301 = vld [vmem:[%s1 + $0x18] sm:$0xff]
      %v302 = vld [vmem:[%s1 + $0x20] sm:$0xff]
      %v303 = vld [vmem:[%s1 + $0x28] sm:$0xff]
      %v304 = vld [vmem:[%s1 + $0x30] sm:$0xff]
      %v305 = vld [vmem:[%s1 + $0x38] sm:$0xff]
      %v306 = vld [vmem:[%s1 + $0x40] sm:$0xff]
      %v307 = vld [vmem:[%s1 + $0x48] sm:$0xff]
      %v308 = vld [vmem:[%s1 + $0x50] sm:$0xff]
      %v309 = vld [vmem:[%s1 + $0x58] sm:$0xff]
      %v310 = vld [vmem:[%s1 + $0x60] sm:$0xff]
      %v311 = vld [vmem:[%s1 + $0x68] sm:$0xff]
      %v312 = vld [vmem:[%s1 + $0x70] sm:$0xff]
      %v313 = vld [vmem:[%s1 + $0x78] sm:$0xff]
      %v314 = vld [vmem:[%s2] sm:$0xff]
      %v315 = vld [vmem:[%s2 + $0x8] sm:$0xff]
      %v316 = vld [vmem:[%s2 + $0x10] sm:$0xff]
      %v317 = vld [vmem:[%s2 + $0x18] sm:$0xff]
      %v318 = vld [vmem:[%s2 + $0x20] sm:$0xff]
      %v319 = vld [vmem:[%s2 + $0x28] sm:$0xff]
      %v320 = vld [vmem:[%s2 + $0x30] sm:$0xff]
      %v321 = vld [vmem:[%s2 + $0x38] sm:$0xff]
      %v322 = vld [vmem:[%s2 + $0x40] sm:$0xff]
      %v323 = vld [vmem:[%s2 + $0x48] sm:$0xff]
      %v324 = vld [vmem:[%s2 + $0x50] sm:$0xff]
      %v325 = vld [vmem:[%s2 + $0x58] sm:$0xff]
      %v326 = vld [vmem:[%s2 + $0x60] sm:$0xff]
      %v327 = vld [vmem:[%s2 + $0x68] sm:$0xff]
      %v328 = vld [vmem:[%s2 + $0x70] sm:$0xff]
      %v329 = vld [vmem:[%s2 + $0x78] sm:$0xff]
      %331 = vset.pattern.permute.xlu0 0
      %332 = vperm.xlu0 %331, %v314
      %v333 = vpop.permute.xlu0 %332
      %336 = vset.pattern.permute.xlu0 0
      %337 = vperm.xlu0 %336, %v315
      %v338 = vpop.permute.xlu0 %337
      %341 = vset.pattern.permute.xlu0 0
      %342 = vperm.xlu0 %341, %v316
      %v343 = vpop.permute.xlu0 %342
      %346 = vset.pattern.permute.xlu0 0
      %347 = vperm.xlu0 %346, %v317
      %v348 = vpop.permute.xlu0 %347
      %351 = vset.pattern.permute.xlu0 0
      %352 = vperm.xlu0 %351, %v318
      %v353 = vpop.permute.xlu0 %352
      %356 = vset.pattern.permute.xlu0 0
      %357 = vperm.xlu0 %356, %v319
      %v358 = vpop.permute.xlu0 %357
      %361 = vset.pattern.permute.xlu0 0
      %362 = vperm.xlu0 %361, %v320
      %v363 = vpop.permute.xlu0 %362
      %366 = vset.pattern.permute.xlu0 0
      %367 = vperm.xlu0 %366, %v321
      %v368 = vpop.permute.xlu0 %367
      %371 = vset.pattern.permute.xlu0 0
      %372 = vperm.xlu0 %371, %v322
      %v373 = vpop.permute.xlu0 %372
      %376 = vset.pattern.permute.xlu0 0
      %377 = vperm.xlu0 %376, %v323
      %v378 = vpop.permute.xlu0 %377
      %381 = vset.pattern.permute.xlu0 0
      %382 = vperm.xlu0 %381, %v324
      %v383 = vpop.permute.xlu0 %382
      %386 = vset.pattern.permute.xlu0 0
      %387 = vperm.xlu0 %386, %v325
      %v388 = vpop.permute.xlu0 %387
      %391 = vset.pattern.permute.xlu0 0
      %392 = vperm.xlu0 %391, %v326
      %v393 = vpop.permute.xlu0 %392
      %396 = vset.pattern.permute.xlu0 0
      %397 = vperm.xlu0 %396, %v327
      %v398 = vpop.permute.xlu0 %397
      %401 = vset.pattern.permute.xlu0 0
      %402 = vperm.xlu0 %401, %v328
      %v403 = vpop.permute.xlu0 %402
      %406 = vset.pattern.permute.xlu0 0
      %407 = vperm.xlu0 %406, %v329
      %v408 = vpop.permute.xlu0 %407
      %v410 = vld [vmem:[%s260] sm:$0xf]
      %vm411 = vcmask 31744
      %v413 = vsel %vm411, %v298, 0
      %v416 = vsel %vm411, %v299, 0
      %v419 = vsel %vm411, %v300, 0
      %v422 = vsel %vm411, %v301, 0
      %v425 = vsel %vm411, %v302, 0
      %v428 = vsel %vm411, %v303, 0
      %v431 = vsel %vm411, %v304, 0
      %v434 = vsel %vm411, %v305, 0
      %v437 = vsel %vm411, %v306, 0
      %v440 = vsel %vm411, %v307, 0
      %v443 = vsel %vm411, %v308, 0
      %v446 = vsel %vm411, %v309, 0
      %v449 = vsel %vm411, %v310, 0
      %v452 = vsel %vm411, %v311, 0
      %v455 = vsel %vm411, %v312, 0
      %v458 = vsel %vm411, %v313, 0
      %vm460 = vcmask 1043456
      %v462 = vsel %vm460, %v410, 0
      %464 = vmatprep.subr.mxu0 0.0
      %465 = vmatpush1.msra.mxu0 0.0
      %466 = vmatprep.subr.mxu0 0.0
      %467 = vmatpush1.msra.mxu0 0.0
      %468 = vmatprep.subr.mxu0 0.0
      %469 = vmatpush1.msra.mxu0 0.0
      %470 = vmatprep.subr.mxu0 0.0
      %471 = vmatpush1.msra.mxu0 0.0
      %472 = vmatprep.subr.mxu0 0.0
      %473 = vmatpush1.msra.mxu0 0.0
      %474 = vmatprep.subr.mxu0 0.0
      %475 = vmatpush1.msra.mxu0 0.0
      %476 = vmatprep.subr.mxu0 0.0
      %477 = vmatpush1.msra.mxu0 0.0
      %478 = vmatprep.subr.mxu0 0.0
      %479 = vmatpush1.msra.mxu0 0.0
      %480 = vmatprep.subr.mxu0 0.0
      %481 = vmatpush1.msra.mxu0 0.0
      %482 = vmatprep.subr.mxu0 0.0
      %483 = vmatpush1.msra.mxu0 0.0
      %484 = vmatprep.subr.mxu0 0.0
      %485 = vmatpush1.msra.mxu0 0.0
      %486 = vmatprep.subr.mxu0 0.0
      %487 = vmatpush1.msra.mxu0 0.0
      %488 = vmatprep.subr.mxu0 0.0
      %489 = vmatpush1.msra.mxu0 0.0
      %490 = vmatprep.subr.mxu0 0.0
      %491 = vmatpush1.msra.mxu0 0.0
      %492 = vmatprep.subr.mxu0 0.0
      %493 = vmatpush1.msra.mxu0 0.0
      %494 = vmatprep.subr.mxu0 0.0
      %495 = vmatpush1.msra.mxu0 %v462
      %496 = vmatprep.subr.mxu0 0.0
      %497 = vmatpush2.msra.mxu0 0.0
      %498 = vmatprep.subr.mxu0 0.0
      %499 = vmatpush2.msra.mxu0 0.0
      %500 = vmatprep.subr.mxu0 0.0
      %501 = vmatpush2.msra.mxu0 0.0
      %502 = vmatprep.subr.mxu0 0.0
      %503 = vmatpush2.msra.mxu0 0.0
      %504 = vmatprep.subr.mxu0 0.0
      %505 = vmatpush2.msra.mxu0 0.0
      %506 = vmatprep.subr.mxu0 0.0
      %507 = vmatpush2.msra.mxu0 0.0
      %508 = vmatprep.subr.mxu0 0.0
      %509 = vmatpush2.msra.mxu0 0.0
      %510 = vmatprep.subr.mxu0 0.0
      %511 = vmatpush2.msra.mxu0 0.0
      %512 = vmatprep.subr.mxu0 0.0
      %513 = vmatpush2.msra.mxu0 0.0
      %514 = vmatprep.subr.mxu0 0.0
      %515 = vmatpush2.msra.mxu0 0.0
      %516 = vmatprep.subr.mxu0 0.0
      %517 = vmatpush2.msra.mxu0 0.0
      %518 = vmatprep.subr.mxu0 0.0
      %519 = vmatpush2.msra.mxu0 0.0
      %520 = vmatprep.subr.mxu0 0.0
      %521 = vmatpush2.msra.mxu0 0.0
      %522 = vmatprep.subr.mxu0 0.0
      %523 = vmatpush2.msra.mxu0 0.0
      %524 = vmatprep.subr.mxu0 0.0
      %525 = vmatpush2.msra.mxu0 0.0
      %526 = vmatprep.subr.mxu0 0.0
      %527 = vmatpush2.msra.mxu0 0.0
      %528 = vmatprep.mubr.f32.mxu0 0.0
      %529 = vmatmul.mubr.f32.gmra.mxu0 %v413
      %v530 = vpop.f32.mrf.mxu0
      %v531 = vadd.f32 %v333, %v530
      %v532 = vpop.f32.mrf.mxu0
      %533 = vmatprep.mubr.f32.mxu0 0.0
      %534 = vmatmul.mubr.f32.gmra.mxu0 %v416
      %v535 = vpop.f32.mrf.mxu0
      %v536 = vadd.f32 %v338, %v535
      %v537 = vpop.f32.mrf.mxu0
      %538 = vmatprep.mubr.f32.mxu0 0.0
      %539 = vmatmul.mubr.f32.gmra.mxu0 %v419
      %v540 = vpop.f32.mrf.mxu0
      %v541 = vadd.f32 %v343, %v540
      %v542 = vpop.f32.mrf.mxu0
      %543 = vmatprep.mubr.f32.mxu0 0.0
      %544 = vmatmul.mubr.f32.gmra.mxu0 %v422
      %v545 = vpop.f32.mrf.mxu0
      %v546 = vadd.f32 %v348, %v545
      %v547 = vpop.f32.mrf.mxu0
      %548 = vmatprep.mubr.f32.mxu0 0.0
      %549 = vmatmul.mubr.f32.gmra.mxu0 %v425
      %v550 = vpop.f32.mrf.mxu0
      %v551 = vadd.f32 %v353, %v550
      %v552 = vpop.f32.mrf.mxu0
      %553 = vmatprep.mubr.f32.mxu0 0.0
      %554 = vmatmul.mubr.f32.gmra.mxu0 %v428
      %v555 = vpop.f32.mrf.mxu0
      %v556 = vadd.f32 %v358, %v555
      %v557 = vpop.f32.mrf.mxu0
      %558 = vmatprep.mubr.f32.mxu0 0.0
      %559 = vmatmul.mubr.f32.gmra.mxu0 %v431
      %v560 = vpop.f32.mrf.mxu0
      %v561 = vadd.f32 %v363, %v560
      %v562 = vpop.f32.mrf.mxu0
      %563 = vmatprep.mubr.f32.mxu0 0.0
      %564 = vmatmul.mubr.f32.gmra.mxu0 %v434
      %v565 = vpop.f32.mrf.mxu0
      %v566 = vadd.f32 %v368, %v565
      %v567 = vpop.f32.mrf.mxu0
      %568 = vmatprep.mubr.f32.mxu0 0.0
      %569 = vmatmul.mubr.f32.gmra.mxu0 %v437
      %v570 = vpop.f32.mrf.mxu0
      %v571 = vadd.f32 %v373, %v570
      %v572 = vpop.f32.mrf.mxu0
      %573 = vmatprep.mubr.f32.mxu0 0.0
      %574 = vmatmul.mubr.f32.gmra.mxu0 %v440
      %v575 = vpop.f32.mrf.mxu0
      %v576 = vadd.f32 %v378, %v575
      %v577 = vpop.f32.mrf.mxu0
      %578 = vmatprep.mubr.f32.mxu0 0.0
      %579 = vmatmul.mubr.f32.gmra.mxu0 %v443
      %v580 = vpop.f32.mrf.mxu0
      %v581 = vadd.f32 %v383, %v580
      %v582 = vpop.f32.mrf.mxu0
      %583 = vmatprep.mubr.f32.mxu0 0.0
      %584 = vmatmul.mubr.f32.gmra.mxu0 %v446
      %v585 = vpop.f32.mrf.mxu0
      %v586 = vadd.f32 %v388, %v585
      %v587 = vpop.f32.mrf.mxu0
      %588 = vmatprep.mubr.f32.mxu0 0.0
      %589 = vmatmul.mubr.f32.gmra.mxu0 %v449
      %v590 = vpop.f32.mrf.mxu0
      %v591 = vadd.f32 %v393, %v590
      %v592 = vpop.f32.mrf.mxu0
      %593 = vmatprep.mubr.f32.mxu0 0.0
      %594 = vmatmul.mubr.f32.gmra.mxu0 %v452
      %v595 = vpop.f32.mrf.mxu0
      %v596 = vadd.f32 %v398, %v595
      %v597 = vpop.f32.mrf.mxu0
      %598 = vmatprep.mubr.f32.mxu0 0.0
      %599 = vmatmul.mubr.f32.gmra.mxu0 %v455
      %v600 = vpop.f32.mrf.mxu0
      %v601 = vadd.f32 %v403, %v600
      %v602 = vpop.f32.mrf.mxu0
      %603 = vmatprep.mubr.f32.mxu0 0.0
      %604 = vmatmul.mubr.f32.gmra.mxu0 %v458
      %v605 = vpop.f32.mrf.mxu0
      %v606 = vadd.f32 %v408, %v605
      %v607 = vpop.f32.mrf.mxu0
      %608 = vdwg.mxu0
      %v609 = vmax.f32 %v531, 0.0
      %v610 = vmax.f32 %v536, 0.0
      %v611 = vmax.f32 %v541, 0.0
      %v612 = vmax.f32 %v546, 0.0
      %v613 = vmax.f32 %v551, 0.0
      %v614 = vmax.f32 %v556, 0.0
      %v615 = vmax.f32 %v561, 0.0
      %v616 = vmax.f32 %v566, 0.0
      %v617 = vmax.f32 %v571, 0.0
      %v618 = vmax.f32 %v576, 0.0
      %v619 = vmax.f32 %v581, 0.0
      %v620 = vmax.f32 %v586, 0.0
      %v621 = vmax.f32 %v591, 0.0
      %v622 = vmax.f32 %v596, 0.0
      %v623 = vmax.f32 %v601, 0.0
      %v624 = vmax.f32 %v606, 0.0
      %625 = vadd.xlane.f32.xlu0 %v609
      %v626 = vpop.xlane.xlu0 %625
      %627 = vadd.xlane.f32.xlu0 %v610
      %v628 = vpop.xlane.xlu0 %627
      %629 = vadd.xlane.f32.xlu0 %v611
      %v630 = vpop.xlane.xlu0 %629
      %631 = vadd.xlane.f32.xlu0 %v612
      %v632 = vpop.xlane.xlu0 %631
      %633 = vadd.xlane.f32.xlu0 %v613
      %v634 = vpop.xlane.xlu0 %633
      %635 = vadd.xlane.f32.xlu0 %v614
      %v636 = vpop.xlane.xlu0 %635
      %637 = vadd.xlane.f32.xlu0 %v615
      %v638 = vpop.xlane.xlu0 %637
      %639 = vadd.xlane.f32.xlu0 %v616
      %v640 = vpop.xlane.xlu0 %639
      %641 = vadd.xlane.f32.xlu0 %v617
      %v642 = vpop.xlane.xlu0 %641
      %643 = vadd.xlane.f32.xlu0 %v618
      %v644 = vpop.xlane.xlu0 %643
      %645 = vadd.xlane.f32.xlu0 %v619
      %v646 = vpop.xlane.xlu0 %645
      %647 = vadd.xlane.f32.xlu0 %v620
      %v648 = vpop.xlane.xlu0 %647
      %649 = vadd.xlane.f32.xlu0 %v621
      %v650 = vpop.xlane.xlu0 %649
      %651 = vadd.xlane.f32.xlu0 %v622
      %v652 = vpop.xlane.xlu0 %651
      %653 = vadd.xlane.f32.xlu0 %v623
      %v654 = vpop.xlane.xlu0 %653
      %655 = vadd.xlane.f32.xlu0 %v624
      %v656 = vpop.xlane.xlu0 %655
      %v657 = vadd.f32 %v626, 0.0
      %v658 = vadd.f32 %v628, 0.0
      %v659 = vadd.f32 %v630, 0.0
      %v660 = vadd.f32 %v632, 0.0
      %v661 = vadd.f32 %v634, 0.0
      %v662 = vadd.f32 %v636, 0.0
      %v663 = vadd.f32 %v638, 0.0
      %v664 = vadd.f32 %v640, 0.0
      %v665 = vadd.f32 %v642, 0.0
      %v666 = vadd.f32 %v644, 0.0
      %v667 = vadd.f32 %v646, 0.0
      %v668 = vadd.f32 %v648, 0.0
      %v669 = vadd.f32 %v650, 0.0
      %v670 = vadd.f32 %v652, 0.0
      %v671 = vadd.f32 %v654, 0.0
      %v672 = vadd.f32 %v656, 0.0
      %v673 = vld [vmem:[#allocation2] sm:$0xff]
      %v674 = vld [vmem:[#allocation2 + $0x8] sm:$0xff]
      %v675 = vld [vmem:[#allocation2 + $0x10] sm:$0xff]
      %v676 = vld [vmem:[#allocation2 + $0x18] sm:$0xff]
      %v677 = vld [vmem:[#allocation2 + $0x20] sm:$0xff]
      %v678 = vld [vmem:[#allocation2 + $0x28] sm:$0xff]
      %v679 = vld [vmem:[#allocation2 + $0x30] sm:$0xff]
      %v680 = vld [vmem:[#allocation2 + $0x38] sm:$0xff]
      %v681 = vld [vmem:[#allocation2 + $0x40] sm:$0xff]
      %v682 = vld [vmem:[#allocation2 + $0x48] sm:$0xff]
      %v683 = vld [vmem:[#allocation2 + $0x50] sm:$0xff]
      %v684 = vld [vmem:[#allocation2 + $0x58] sm:$0xff]
      %v685 = vld [vmem:[#allocation2 + $0x60] sm:$0xff]
      %v686 = vld [vmem:[#allocation2 + $0x68] sm:$0xff]
      %v687 = vld [vmem:[#allocation2 + $0x70] sm:$0xff]
      %v688 = vld [vmem:[#allocation2 + $0x78] sm:$0xff]
      %v689 = vadd.f32 %v673, %v657
      %v690 = vadd.f32 %v674, %v658
      %v691 = vadd.f32 %v675, %v659
      %v692 = vadd.f32 %v676, %v660
      %v693 = vadd.f32 %v677, %v661
      %v694 = vadd.f32 %v678, %v662
      %v695 = vadd.f32 %v679, %v663
      %v696 = vadd.f32 %v680, %v664
      %v697 = vadd.f32 %v681, %v665
      %v698 = vadd.f32 %v682, %v666
      %v699 = vadd.f32 %v683, %v667
      %v700 = vadd.f32 %v684, %v668
      %v701 = vadd.f32 %v685, %v669
      %v702 = vadd.f32 %v686, %v670
      %v703 = vadd.f32 %v687, %v671
      %v704 = vadd.f32 %v688, %v672
      %vm705 = vcmask 7168
      %706 = vst.msk [vmem:[#allocation2] sm:$0xff] %vm705, %v689
      %707 = vst.msk [vmem:[#allocation2 + $0x8] sm:$0xff] %vm705, %v690
      %708 = vst.msk [vmem:[#allocation2 + $0x10] sm:$0xff] %vm705, %v691
      %709 = vst.msk [vmem:[#allocation2 + $0x18] sm:$0xff] %vm705, %v692
      %710 = vst.msk [vmem:[#allocation2 + $0x20] sm:$0xff] %vm705, %v693
      %711 = vst.msk [vmem:[#allocation2 + $0x28] sm:$0xff] %vm705, %v694
      %712 = vst.msk [vmem:[#allocation2 + $0x30] sm:$0xff] %vm705, %v695
      %713 = vst.msk [vmem:[#allocation2 + $0x38] sm:$0xff] %vm705, %v696
      %714 = vst.msk [vmem:[#allocation2 + $0x40] sm:$0xff] %vm705, %v697
      %715 = vst.msk [vmem:[#allocation2 + $0x48] sm:$0xff] %vm705, %v698
      %716 = vst.msk [vmem:[#allocation2 + $0x50] sm:$0xff] %vm705, %v699
      %717 = vst.msk [vmem:[#allocation2 + $0x58] sm:$0xff] %vm705, %v700
      %718 = vst.msk [vmem:[#allocation2 + $0x60] sm:$0xff] %vm705, %v701
      %719 = vst.msk [vmem:[#allocation2 + $0x68] sm:$0xff] %vm705, %v702
      %720 = vst.msk [vmem:[#allocation2 + $0x70] sm:$0xff] %vm705, %v703
      %721 = vst.msk [vmem:[#allocation2 + $0x78] sm:$0xff] %vm705, %v704
      %v722 = vld [vmem:[%s260 + $0x4] sm:$0xf]
      %v724 = vsel %vm460, %v722, 0
      %726 = vmatprep.subr.mxu0 0.0
      %727 = vmatpush1.msra.mxu0 0.0
      %728 = vmatprep.subr.mxu0 0.0
      %729 = vmatpush1.msra.mxu0 0.0
      %730 = vmatprep.subr.mxu0 0.0
      %731 = vmatpush1.msra.mxu0 0.0
      %732 = vmatprep.subr.mxu0 0.0
      %733 = vmatpush1.msra.mxu0 0.0
      %734 = vmatprep.subr.mxu0 0.0
      %735 = vmatpush1.msra.mxu0 0.0
      %736 = vmatprep.subr.mxu0 0.0
      %737 = vmatpush1.msra.mxu0 0.0
      %738 = vmatprep.subr.mxu0 0.0
      %739 = vmatpush1.msra.mxu0 0.0
      %740 = vmatprep.subr.mxu0 0.0
      %741 = vmatpush1.msra.mxu0 0.0
      %742 = vmatprep.subr.mxu0 0.0
      %743 = vmatpush1.msra.mxu0 0.0
      %744 = vmatprep.subr.mxu0 0.0
      %745 = vmatpush1.msra.mxu0 0.0
      %746 = vmatprep.subr.mxu0 0.0
      %747 = vmatpush1.msra.mxu0 0.0
      %748 = vmatprep.subr.mxu0 0.0
      %749 = vmatpush1.msra.mxu0 0.0
      %750 = vmatprep.subr.mxu0 0.0
      %751 = vmatpush1.msra.mxu0 0.0
      %752 = vmatprep.subr.mxu0 0.0
      %753 = vmatpush1.msra.mxu0 0.0
      %754 = vmatprep.subr.mxu0 0.0
      %755 = vmatpush1.msra.mxu0 0.0
      %756 = vmatprep.subr.mxu0 0.0
      %757 = vmatpush1.msra.mxu0 %v724
      %758 = vmatprep.subr.mxu0 0.0
      %759 = vmatpush2.msra.mxu0 0.0
      %760 = vmatprep.subr.mxu0 0.0
      %761 = vmatpush2.msra.mxu0 0.0
      %762 = vmatprep.subr.mxu0 0.0
      %763 = vmatpush2.msra.mxu0 0.0
      %764 = vmatprep.subr.mxu0 0.0
      %765 = vmatpush2.msra.mxu0 0.0
      %766 = vmatprep.subr.mxu0 0.0
      %767 = vmatpush2.msra.mxu0 0.0
      %768 = vmatprep.subr.mxu0 0.0
      %769 = vmatpush2.msra.mxu0 0.0
      %770 = vmatprep.subr.mxu0 0.0
      %771 = vmatpush2.msra.mxu0 0.0
      %772 = vmatprep.subr.mxu0 0.0
      %773 = vmatpush2.msra.mxu0 0.0
      %774 = vmatprep.subr.mxu0 0.0
      %775 = vmatpush2.msra.mxu0 0.0
      %776 = vmatprep.subr.mxu0 0.0
      %777 = vmatpush2.msra.mxu0 0.0
      %778 = vmatprep.subr.mxu0 0.0
      %779 = vmatpush2.msra.mxu0 0.0
      %780 = vmatprep.subr.mxu0 0.0
      %781 = vmatpush2.msra.mxu0 0.0
      %782 = vmatprep.subr.mxu0 0.0
      %783 = vmatpush2.msra.mxu0 0.0
      %784 = vmatprep.subr.mxu0 0.0
      %785 = vmatpush2.msra.mxu0 0.0
      %786 = vmatprep.subr.mxu0 0.0
      %787 = vmatpush2.msra.mxu0 0.0
      %788 = vmatprep.subr.mxu0 0.0
      %789 = vmatpush2.msra.mxu0 0.0
      %790 = vmatprep.mubr.f32.mxu0 0.0
      %791 = vmatmul.mubr.f32.gmra.mxu0 %v413
      %v792 = vpop.f32.mrf.mxu0
      %v793 = vadd.f32 %v333, %v792
      %v794 = vpop.f32.mrf.mxu0
      %795 = vmatprep.mubr.f32.mxu0 0.0
      %796 = vmatmul.mubr.f32.gmra.mxu0 %v416
      %v797 = vpop.f32.mrf.mxu0
      %v798 = vadd.f32 %v338, %v797
      %v799 = vpop.f32.mrf.mxu0
      %800 = vmatprep.mubr.f32.mxu0 0.0
      %801 = vmatmul.mubr.f32.gmra.mxu0 %v419
      %v802 = vpop.f32.mrf.mxu0
      %v803 = vadd.f32 %v343, %v802
      %v804 = vpop.f32.mrf.mxu0
      %805 = vmatprep.mubr.f32.mxu0 0.0
      %806 = vmatmul.mubr.f32.gmra.mxu0 %v422
      %v807 = vpop.f32.mrf.mxu0
      %v808 = vadd.f32 %v348, %v807
      %v809 = vpop.f32.mrf.mxu0
      %810 = vmatprep.mubr.f32.mxu0 0.0
      %811 = vmatmul.mubr.f32.gmra.mxu0 %v425
      %v812 = vpop.f32.mrf.mxu0
      %v813 = vadd.f32 %v353, %v812
      %v814 = vpop.f32.mrf.mxu0
      %815 = vmatprep.mubr.f32.mxu0 0.0
      %816 = vmatmul.mubr.f32.gmra.mxu0 %v428
      %v817 = vpop.f32.mrf.mxu0
      %v818 = vadd.f32 %v358, %v817
      %v819 = vpop.f32.mrf.mxu0
      %820 = vmatprep.mubr.f32.mxu0 0.0
      %821 = vmatmul.mubr.f32.gmra.mxu0 %v431
      %v822 = vpop.f32.mrf.mxu0
      %v823 = vadd.f32 %v363, %v822
      %v824 = vpop.f32.mrf.mxu0
      %825 = vmatprep.mubr.f32.mxu0 0.0
      %826 = vmatmul.mubr.f32.gmra.mxu0 %v434
      %v827 = vpop.f32.mrf.mxu0
      %v828 = vadd.f32 %v368, %v827
      %v829 = vpop.f32.mrf.mxu0
      %830 = vmatprep.mubr.f32.mxu0 0.0
      %831 = vmatmul.mubr.f32.gmra.mxu0 %v437
      %v832 = vpop.f32.mrf.mxu0
      %v833 = vadd.f32 %v373, %v832
      %v834 = vpop.f32.mrf.mxu0
      %835 = vmatprep.mubr.f32.mxu0 0.0
      %836 = vmatmul.mubr.f32.gmra.mxu0 %v440
      %v837 = vpop.f32.mrf.mxu0
      %v838 = vadd.f32 %v378, %v837
      %v839 = vpop.f32.mrf.mxu0
      %840 = vmatprep.mubr.f32.mxu0 0.0
      %841 = vmatmul.mubr.f32.gmra.mxu0 %v443
      %v842 = vpop.f32.mrf.mxu0
      %v843 = vadd.f32 %v383, %v842
      %v844 = vpop.f32.mrf.mxu0
      %845 = vmatprep.mubr.f32.mxu0 0.0
      %846 = vmatmul.mubr.f32.gmra.mxu0 %v446
      %v847 = vpop.f32.mrf.mxu0
      %v848 = vadd.f32 %v388, %v847
      %v849 = vpop.f32.mrf.mxu0
      %850 = vmatprep.mubr.f32.mxu0 0.0
      %851 = vmatmul.mubr.f32.gmra.mxu0 %v449
      %v852 = vpop.f32.mrf.mxu0
      %v853 = vadd.f32 %v393, %v852
      %v854 = vpop.f32.mrf.mxu0
      %855 = vmatprep.mubr.f32.mxu0 0.0
      %856 = vmatmul.mubr.f32.gmra.mxu0 %v452
      %v857 = vpop.f32.mrf.mxu0
      %v858 = vadd.f32 %v398, %v857
      %v859 = vpop.f32.mrf.mxu0
      %860 = vmatprep.mubr.f32.mxu0 0.0
      %861 = vmatmul.mubr.f32.gmra.mxu0 %v455
      %v862 = vpop.f32.mrf.mxu0
      %v863 = vadd.f32 %v403, %v862
      %v864 = vpop.f32.mrf.mxu0
      %865 = vmatprep.mubr.f32.mxu0 0.0
      %866 = vmatmul.mubr.f32.gmra.mxu0 %v458
      %v867 = vpop.f32.mrf.mxu0
      %v868 = vadd.f32 %v408, %v867
      %v869 = vpop.f32.mrf.mxu0
      %870 = vdwg.mxu0
      %v871 = vmax.f32 %v793, 0.0
      %v872 = vmax.f32 %v798, 0.0
      %v873 = vmax.f32 %v803, 0.0
      %v874 = vmax.f32 %v808, 0.0
      %v875 = vmax.f32 %v813, 0.0
      %v876 = vmax.f32 %v818, 0.0
      %v877 = vmax.f32 %v823, 0.0
      %v878 = vmax.f32 %v828, 0.0
      %v879 = vmax.f32 %v833, 0.0
      %v880 = vmax.f32 %v838, 0.0
      %v881 = vmax.f32 %v843, 0.0
      %v882 = vmax.f32 %v848, 0.0
      %v883 = vmax.f32 %v853, 0.0
      %v884 = vmax.f32 %v858, 0.0
      %v885 = vmax.f32 %v863, 0.0
      %v886 = vmax.f32 %v868, 0.0
      %887 = vadd.xlane.f32.xlu0 %v871
      %v888 = vpop.xlane.xlu0 %887
      %889 = vadd.xlane.f32.xlu0 %v872
      %v890 = vpop.xlane.xlu0 %889
      %891 = vadd.xlane.f32.xlu0 %v873
      %v892 = vpop.xlane.xlu0 %891
      %893 = vadd.xlane.f32.xlu0 %v874
      %v894 = vpop.xlane.xlu0 %893
      %895 = vadd.xlane.f32.xlu0 %v875
      %v896 = vpop.xlane.xlu0 %895
      %897 = vadd.xlane.f32.xlu0 %v876
      %v898 = vpop.xlane.xlu0 %897
      %899 = vadd.xlane.f32.xlu0 %v877
      %v900 = vpop.xlane.xlu0 %899
      %901 = vadd.xlane.f32.xlu0 %v878
      %v902 = vpop.xlane.xlu0 %901
      %903 = vadd.xlane.f32.xlu0 %v879
      %v904 = vpop.xlane.xlu0 %903
      %905 = vadd.xlane.f32.xlu0 %v880
      %v906 = vpop.xlane.xlu0 %905
      %907 = vadd.xlane.f32.xlu0 %v881
      %v908 = vpop.xlane.xlu0 %907
      %909 = vadd.xlane.f32.xlu0 %v882
      %v910 = vpop.xlane.xlu0 %909
      %911 = vadd.xlane.f32.xlu0 %v883
      %v912 = vpop.xlane.xlu0 %911
      %913 = vadd.xlane.f32.xlu0 %v884
      %v914 = vpop.xlane.xlu0 %913
      %915 = vadd.xlane.f32.xlu0 %v885
      %v916 = vpop.xlane.xlu0 %915
      %917 = vadd.xlane.f32.xlu0 %v886
      %v918 = vpop.xlane.xlu0 %917
      %v919 = vadd.f32 %v888, 0.0
      %v920 = vadd.f32 %v890, 0.0
      %v921 = vadd.f32 %v892, 0.0
      %v922 = vadd.f32 %v894, 0.0
      %v923 = vadd.f32 %v896, 0.0
      %v924 = vadd.f32 %v898, 0.0
      %v925 = vadd.f32 %v900, 0.0
      %v926 = vadd.f32 %v902, 0.0
      %v927 = vadd.f32 %v904, 0.0
      %v928 = vadd.f32 %v906, 0.0
      %v929 = vadd.f32 %v908, 0.0
      %v930 = vadd.f32 %v910, 0.0
      %v931 = vadd.f32 %v912, 0.0
      %v932 = vadd.f32 %v914, 0.0
      %v933 = vadd.f32 %v916, 0.0
      %v934 = vadd.f32 %v918, 0.0
      %v935 = vld [vmem:[#allocation2] sm:$0xff]
      %v936 = vld [vmem:[#allocation2 + $0x8] sm:$0xff]
      %v937 = vld [vmem:[#allocation2 + $0x10] sm:$0xff]
      %v938 = vld [vmem:[#allocation2 + $0x18] sm:$0xff]
      %v939 = vld [vmem:[#allocation2 + $0x20] sm:$0xff]
      %v940 = vld [vmem:[#allocation2 + $0x28] sm:$0xff]
      %v941 = vld [vmem:[#allocation2 + $0x30] sm:$0xff]
      %v942 = vld [vmem:[#allocation2 + $0x38] sm:$0xff]
      %v943 = vld [vmem:[#allocation2 + $0x40] sm:$0xff]
      %v944 = vld [vmem:[#allocation2 + $0x48] sm:$0xff]
      %v945 = vld [vmem:[#allocation2 + $0x50] sm:$0xff]
      %v946 = vld [vmem:[#allocation2 + $0x58] sm:$0xff]
      %v947 = vld [vmem:[#allocation2 + $0x60] sm:$0xff]
      %v948 = vld [vmem:[#allocation2 + $0x68] sm:$0xff]
      %v949 = vld [vmem:[#allocation2 + $0x70] sm:$0xff]
      %v950 = vld [vmem:[#allocation2 + $0x78] sm:$0xff]
      %v951 = vadd.f32 %v935, %v919
      %v952 = vadd.f32 %v936, %v920
      %v953 = vadd.f32 %v937, %v921
      %v954 = vadd.f32 %v938, %v922
      %v955 = vadd.f32 %v939, %v923
      %v956 = vadd.f32 %v940, %v924
      %v957 = vadd.f32 %v941, %v925
      %v958 = vadd.f32 %v942, %v926
      %v959 = vadd.f32 %v943, %v927
      %v960 = vadd.f32 %v944, %v928
      %v961 = vadd.f32 %v945, %v929
      %v962 = vadd.f32 %v946, %v930
      %v963 = vadd.f32 %v947, %v931
      %v964 = vadd.f32 %v948, %v932
      %v965 = vadd.f32 %v949, %v933
      %v966 = vadd.f32 %v950, %v934
      %vm967 = vcmask 15368
      %968 = vst.msk [vmem:[#allocation2] sm:$0xff] %vm967, %v951
      %969 = vst.msk [vmem:[#allocation2 + $0x8] sm:$0xff] %vm967, %v952
      %970 = vst.msk [vmem:[#allocation2 + $0x10] sm:$0xff] %vm967, %v953
      %971 = vst.msk [vmem:[#allocation2 + $0x18] sm:$0xff] %vm967, %v954
      %972 = vst.msk [vmem:[#allocation2 + $0x20] sm:$0xff] %vm967, %v955
      %973 = vst.msk [vmem:[#allocation2 + $0x28] sm:$0xff] %vm967, %v956
      %974 = vst.msk [vmem:[#allocation2 + $0x30] sm:$0xff] %vm967, %v957
      %975 = vst.msk [vmem:[#allocation2 + $0x38] sm:$0xff] %vm967, %v958
      %976 = vst.msk [vmem:[#allocation2 + $0x40] sm:$0xff] %vm967, %v959
      %977 = vst.msk [vmem:[#allocation2 + $0x48] sm:$0xff] %vm967, %v960
      %978 = vst.msk [vmem:[#allocation2 + $0x50] sm:$0xff] %vm967, %v961
      %979 = vst.msk [vmem:[#allocation2 + $0x58] sm:$0xff] %vm967, %v962
      %980 = vst.msk [vmem:[#allocation2 + $0x60] sm:$0xff] %vm967, %v963
      %981 = vst.msk [vmem:[#allocation2 + $0x68] sm:$0xff] %vm967, %v964
      %982 = vst.msk [vmem:[#allocation2 + $0x70] sm:$0xff] %vm967, %v965
      %983 = vst.msk [vmem:[#allocation2 + $0x78] sm:$0xff] %vm967, %v966
      %s984 = scalar_lea.vmem %s1, 128
      %v985 = vld [vmem:[%s984] sm:$0xff]
      %v986 = vld [vmem:[%s984 + $0x8] sm:$0xff]
      %v987 = vld [vmem:[%s984 + $0x10] sm:$0xff]
      %v988 = vld [vmem:[%s984 + $0x18] sm:$0xff]
      %v989 = vld [vmem:[%s984 + $0x20] sm:$0xff]
      %v990 = vld [vmem:[%s984 + $0x28] sm:$0xff]
      %v991 = vld [vmem:[%s984 + $0x30] sm:$0xff]
      %v992 = vld [vmem:[%s984 + $0x38] sm:$0xff]
      %v993 = vld [vmem:[%s984 + $0x40] sm:$0xff]
      %v994 = vld [vmem:[%s984 + $0x48] sm:$0xff]
      %v995 = vld [vmem:[%s984 + $0x50] sm:$0xff]
      %v996 = vld [vmem:[%s984 + $0x58] sm:$0xff]
      %v997 = vld [vmem:[%s984 + $0x60] sm:$0xff]
      %v998 = vld [vmem:[%s984 + $0x68] sm:$0xff]
      %v999 = vld [vmem:[%s984 + $0x70] sm:$0xff]
      %v1000 = vld [vmem:[%s984 + $0x78] sm:$0xff]
      %s1001 = scalar_lea.vmem %s2, 128
      %v1002 = vld [vmem:[%s1001] sm:$0xff]
      %v1003 = vld [vmem:[%s1001 + $0x8] sm:$0xff]
      %v1004 = vld [vmem:[%s1001 + $0x10] sm:$0xff]
      %v1005 = vld [vmem:[%s1001 + $0x18] sm:$0xff]
      %v1006 = vld [vmem:[%s1001 + $0x20] sm:$0xff]
      %v1007 = vld [vmem:[%s1001 + $0x28] sm:$0xff]
      %v1008 = vld [vmem:[%s1001 + $0x30] sm:$0xff]
      %v1009 = vld [vmem:[%s1001 + $0x38] sm:$0xff]
      %v1010 = vld [vmem:[%s1001 + $0x40] sm:$0xff]
      %v1011 = vld [vmem:[%s1001 + $0x48] sm:$0xff]
      %v1012 = vld [vmem:[%s1001 + $0x50] sm:$0xff]
      %v1013 = vld [vmem:[%s1001 + $0x58] sm:$0xff]
      %v1014 = vld [vmem:[%s1001 + $0x60] sm:$0xff]
      %v1015 = vld [vmem:[%s1001 + $0x68] sm:$0xff]
      %v1016 = vld [vmem:[%s1001 + $0x70] sm:$0xff]
      %v1017 = vld [vmem:[%s1001 + $0x78] sm:$0xff]
      %1019 = vset.pattern.permute.xlu0 0
      %1020 = vperm.xlu0 %1019, %v1002
      %v1021 = vpop.permute.xlu0 %1020
      %1024 = vset.pattern.permute.xlu0 0
      %1025 = vperm.xlu0 %1024, %v1003
      %v1026 = vpop.permute.xlu0 %1025
      %1029 = vset.pattern.permute.xlu0 0
      %1030 = vperm.xlu0 %1029, %v1004
      %v1031 = vpop.permute.xlu0 %1030
      %1034 = vset.pattern.permute.xlu0 0
      %1035 = vperm.xlu0 %1034, %v1005
      %v1036 = vpop.permute.xlu0 %1035
      %1039 = vset.pattern.permute.xlu0 0
      %1040 = vperm.xlu0 %1039, %v1006
      %v1041 = vpop.permute.xlu0 %1040
      %1044 = vset.pattern.permute.xlu0 0
      %1045 = vperm.xlu0 %1044, %v1007
      %v1046 = vpop.permute.xlu0 %1045
      %1049 = vset.pattern.permute.xlu0 0
      %1050 = vperm.xlu0 %1049, %v1008
      %v1051 = vpop.permute.xlu0 %1050
      %1054 = vset.pattern.permute.xlu0 0
      %1055 = vperm.xlu0 %1054, %v1009
      %v1056 = vpop.permute.xlu0 %1055
      %1059 = vset.pattern.permute.xlu0 0
      %1060 = vperm.xlu0 %1059, %v1010
      %v1061 = vpop.permute.xlu0 %1060
      %1064 = vset.pattern.permute.xlu0 0
      %1065 = vperm.xlu0 %1064, %v1011
      %v1066 = vpop.permute.xlu0 %1065
      %1069 = vset.pattern.permute.xlu0 0
      %1070 = vperm.xlu0 %1069, %v1012
      %v1071 = vpop.permute.xlu0 %1070
      %1074 = vset.pattern.permute.xlu0 0
      %1075 = vperm.xlu0 %1074, %v1013
      %v1076 = vpop.permute.xlu0 %1075
      %1079 = vset.pattern.permute.xlu0 0
      %1080 = vperm.xlu0 %1079, %v1014
      %v1081 = vpop.permute.xlu0 %1080
      %1084 = vset.pattern.permute.xlu0 0
      %1085 = vperm.xlu0 %1084, %v1015
      %v1086 = vpop.permute.xlu0 %1085
      %1089 = vset.pattern.permute.xlu0 0
      %1090 = vperm.xlu0 %1089, %v1016
      %v1091 = vpop.permute.xlu0 %1090
      %1094 = vset.pattern.permute.xlu0 0
      %1095 = vperm.xlu0 %1094, %v1017
      %v1096 = vpop.permute.xlu0 %1095
      %v1098 = vld [vmem:[%s260] sm:$0xf]
      %v1100 = vsel %vm411, %v985, 0
      %v1103 = vsel %vm411, %v986, 0
      %v1106 = vsel %vm411, %v987, 0
      %v1109 = vsel %vm411, %v988, 0
      %v1112 = vsel %vm411, %v989, 0
      %v1115 = vsel %vm411, %v990, 0
      %v1118 = vsel %vm411, %v991, 0
      %v1121 = vsel %vm411, %v992, 0
      %v1124 = vsel %vm411, %v993, 0
      %v1127 = vsel %vm411, %v994, 0
      %v1130 = vsel %vm411, %v995, 0
      %v1133 = vsel %vm411, %v996, 0
      %v1136 = vsel %vm411, %v997, 0
      %v1139 = vsel %vm411, %v998, 0
      %v1142 = vsel %vm411, %v999, 0
      %v1145 = vsel %vm411, %v1000, 0
      %v1148 = vsel %vm460, %v1098, 0
      %1150 = vmatprep.subr.mxu0 0.0
      %1151 = vmatpush1.msra.mxu0 0.0
      %1152 = vmatprep.subr.mxu0 0.0
      %1153 = vmatpush1.msra.mxu0 0.0
      %1154 = vmatprep.subr.mxu0 0.0
      %1155 = vmatpush1.msra.mxu0 0.0
      %1156 = vmatprep.subr.mxu0 0.0
      %1157 = vmatpush1.msra.mxu0 0.0
      %1158 = vmatprep.subr.mxu0 0.0
      %1159 = vmatpush1.msra.mxu0 0.0
      %1160 = vmatprep.subr.mxu0 0.0
      %1161 = vmatpush1.msra.mxu0 0.0
      %1162 = vmatprep.subr.mxu0 0.0
      %1163 = vmatpush1.msra.mxu0 0.0
      %1164 = vmatprep.subr.mxu0 0.0
      %1165 = vmatpush1.msra.mxu0 0.0
      %1166 = vmatprep.subr.mxu0 0.0
      %1167 = vmatpush1.msra.mxu0 0.0
      %1168 = vmatprep.subr.mxu0 0.0
      %1169 = vmatpush1.msra.mxu0 0.0
      %1170 = vmatprep.subr.mxu0 0.0
      %1171 = vmatpush1.msra.mxu0 0.0
      %1172 = vmatprep.subr.mxu0 0.0
      %1173 = vmatpush1.msra.mxu0 0.0
      %1174 = vmatprep.subr.mxu0 0.0
      %1175 = vmatpush1.msra.mxu0 0.0
      %1176 = vmatprep.subr.mxu0 0.0
      %1177 = vmatpush1.msra.mxu0 0.0
      %1178 = vmatprep.subr.mxu0 0.0
      %1179 = vmatpush1.msra.mxu0 0.0
      %1180 = vmatprep.subr.mxu0 0.0
      %1181 = vmatpush1.msra.mxu0 %v1148
      %1182 = vmatprep.subr.mxu0 0.0
      %1183 = vmatpush2.msra.mxu0 0.0
      %1184 = vmatprep.subr.mxu0 0.0
      %1185 = vmatpush2.msra.mxu0 0.0
      %1186 = vmatprep.subr.mxu0 0.0
      %1187 = vmatpush2.msra.mxu0 0.0
      %1188 = vmatprep.subr.mxu0 0.0
      %1189 = vmatpush2.msra.mxu0 0.0
      %1190 = vmatprep.subr.mxu0 0.0
      %1191 = vmatpush2.msra.mxu0 0.0
      %1192 = vmatprep.subr.mxu0 0.0
      %1193 = vmatpush2.msra.mxu0 0.0
      %1194 = vmatprep.subr.mxu0 0.0
      %1195 = vmatpush2.msra.mxu0 0.0
      %1196 = vmatprep.subr.mxu0 0.0
      %1197 = vmatpush2.msra.mxu0 0.0
      %1198 = vmatprep.subr.mxu0 0.0
      %1199 = vmatpush2.msra.mxu0 0.0
      %1200 = vmatprep.subr.mxu0 0.0
      %1201 = vmatpush2.msra.mxu0 0.0
      %1202 = vmatprep.subr.mxu0 0.0
      %1203 = vmatpush2.msra.mxu0 0.0
      %1204 = vmatprep.subr.mxu0 0.0
      %1205 = vmatpush2.msra.mxu0 0.0
      %1206 = vmatprep.subr.mxu0 0.0
      %1207 = vmatpush2.msra.mxu0 0.0
      %1208 = vmatprep.subr.mxu0 0.0
      %1209 = vmatpush2.msra.mxu0 0.0
      %1210 = vmatprep.subr.mxu0 0.0
      %1211 = vmatpush2.msra.mxu0 0.0
      %1212 = vmatprep.subr.mxu0 0.0
      %1213 = vmatpush2.msra.mxu0 0.0
      %1214 = vmatprep.mubr.f32.mxu0 0.0
      %1215 = vmatmul.mubr.f32.gmra.mxu0 %v1100
      %v1216 = vpop.f32.mrf.mxu0
      %v1217 = vadd.f32 %v1021, %v1216
      %v1218 = vpop.f32.mrf.mxu0
      %1219 = vmatprep.mubr.f32.mxu0 0.0
      %1220 = vmatmul.mubr.f32.gmra.mxu0 %v1103
      %v1221 = vpop.f32.mrf.mxu0
      %v1222 = vadd.f32 %v1026, %v1221
      %v1223 = vpop.f32.mrf.mxu0
      %1224 = vmatprep.mubr.f32.mxu0 0.0
      %1225 = vmatmul.mubr.f32.gmra.mxu0 %v1106
      %v1226 = vpop.f32.mrf.mxu0
      %v1227 = vadd.f32 %v1031, %v1226
      %v1228 = vpop.f32.mrf.mxu0
      %1229 = vmatprep.mubr.f32.mxu0 0.0
      %1230 = vmatmul.mubr.f32.gmra.mxu0 %v1109
      %v1231 = vpop.f32.mrf.mxu0
      %v1232 = vadd.f32 %v1036, %v1231
      %v1233 = vpop.f32.mrf.mxu0
      %1234 = vmatprep.mubr.f32.mxu0 0.0
      %1235 = vmatmul.mubr.f32.gmra.mxu0 %v1112
      %v1236 = vpop.f32.mrf.mxu0
      %v1237 = vadd.f32 %v1041, %v1236
      %v1238 = vpop.f32.mrf.mxu0
      %1239 = vmatprep.mubr.f32.mxu0 0.0
      %1240 = vmatmul.mubr.f32.gmra.mxu0 %v1115
      %v1241 = vpop.f32.mrf.mxu0
      %v1242 = vadd.f32 %v1046, %v1241
      %v1243 = vpop.f32.mrf.mxu0
      %1244 = vmatprep.mubr.f32.mxu0 0.0
      %1245 = vmatmul.mubr.f32.gmra.mxu0 %v1118
      %v1246 = vpop.f32.mrf.mxu0
      %v1247 = vadd.f32 %v1051, %v1246
      %v1248 = vpop.f32.mrf.mxu0
      %1249 = vmatprep.mubr.f32.mxu0 0.0
      %1250 = vmatmul.mubr.f32.gmra.mxu0 %v1121
      %v1251 = vpop.f32.mrf.mxu0
      %v1252 = vadd.f32 %v1056, %v1251
      %v1253 = vpop.f32.mrf.mxu0
      %1254 = vmatprep.mubr.f32.mxu0 0.0
      %1255 = vmatmul.mubr.f32.gmra.mxu0 %v1124
      %v1256 = vpop.f32.mrf.mxu0
      %v1257 = vadd.f32 %v1061, %v1256
      %v1258 = vpop.f32.mrf.mxu0
      %1259 = vmatprep.mubr.f32.mxu0 0.0
      %1260 = vmatmul.mubr.f32.gmra.mxu0 %v1127
      %v1261 = vpop.f32.mrf.mxu0
      %v1262 = vadd.f32 %v1066, %v1261
      %v1263 = vpop.f32.mrf.mxu0
      %1264 = vmatprep.mubr.f32.mxu0 0.0
      %1265 = vmatmul.mubr.f32.gmra.mxu0 %v1130
      %v1266 = vpop.f32.mrf.mxu0
      %v1267 = vadd.f32 %v1071, %v1266
      %v1268 = vpop.f32.mrf.mxu0
      %1269 = vmatprep.mubr.f32.mxu0 0.0
      %1270 = vmatmul.mubr.f32.gmra.mxu0 %v1133
      %v1271 = vpop.f32.mrf.mxu0
      %v1272 = vadd.f32 %v1076, %v1271
      %v1273 = vpop.f32.mrf.mxu0
      %1274 = vmatprep.mubr.f32.mxu0 0.0
      %1275 = vmatmul.mubr.f32.gmra.mxu0 %v1136
      %v1276 = vpop.f32.mrf.mxu0
      %v1277 = vadd.f32 %v1081, %v1276
      %v1278 = vpop.f32.mrf.mxu0
      %1279 = vmatprep.mubr.f32.mxu0 0.0
      %1280 = vmatmul.mubr.f32.gmra.mxu0 %v1139
      %v1281 = vpop.f32.mrf.mxu0
      %v1282 = vadd.f32 %v1086, %v1281
      %v1283 = vpop.f32.mrf.mxu0
      %1284 = vmatprep.mubr.f32.mxu0 0.0
      %1285 = vmatmul.mubr.f32.gmra.mxu0 %v1142
      %v1286 = vpop.f32.mrf.mxu0
      %v1287 = vadd.f32 %v1091, %v1286
      %v1288 = vpop.f32.mrf.mxu0
      %1289 = vmatprep.mubr.f32.mxu0 0.0
      %1290 = vmatmul.mubr.f32.gmra.mxu0 %v1145
      %v1291 = vpop.f32.mrf.mxu0
      %v1292 = vadd.f32 %v1096, %v1291
      %v1293 = vpop.f32.mrf.mxu0
      %1294 = vdwg.mxu0
      %v1295 = vmax.f32 %v1217, 0.0
      %v1296 = vmax.f32 %v1222, 0.0
      %v1297 = vmax.f32 %v1227, 0.0
      %v1298 = vmax.f32 %v1232, 0.0
      %v1299 = vmax.f32 %v1237, 0.0
      %v1300 = vmax.f32 %v1242, 0.0
      %v1301 = vmax.f32 %v1247, 0.0
      %v1302 = vmax.f32 %v1252, 0.0
      %v1303 = vmax.f32 %v1257, 0.0
      %v1304 = vmax.f32 %v1262, 0.0
      %v1305 = vmax.f32 %v1267, 0.0
      %v1306 = vmax.f32 %v1272, 0.0
      %v1307 = vmax.f32 %v1277, 0.0
      %v1308 = vmax.f32 %v1282, 0.0
      %v1309 = vmax.f32 %v1287, 0.0
      %v1310 = vmax.f32 %v1292, 0.0
      %1311 = vadd.xlane.f32.xlu0 %v1295
      %v1312 = vpop.xlane.xlu0 %1311
      %1313 = vadd.xlane.f32.xlu0 %v1296
      %v1314 = vpop.xlane.xlu0 %1313
      %1315 = vadd.xlane.f32.xlu0 %v1297
      %v1316 = vpop.xlane.xlu0 %1315
      %1317 = vadd.xlane.f32.xlu0 %v1298
      %v1318 = vpop.xlane.xlu0 %1317
      %1319 = vadd.xlane.f32.xlu0 %v1299
      %v1320 = vpop.xlane.xlu0 %1319
      %1321 = vadd.xlane.f32.xlu0 %v1300
      %v1322 = vpop.xlane.xlu0 %1321
      %1323 = vadd.xlane.f32.xlu0 %v1301
      %v1324 = vpop.xlane.xlu0 %1323
      %1325 = vadd.xlane.f32.xlu0 %v1302
      %v1326 = vpop.xlane.xlu0 %1325
      %1327 = vadd.xlane.f32.xlu0 %v1303
      %v1328 = vpop.xlane.xlu0 %1327
      %1329 = vadd.xlane.f32.xlu0 %v1304
      %v1330 = vpop.xlane.xlu0 %1329
      %1331 = vadd.xlane.f32.xlu0 %v1305
      %v1332 = vpop.xlane.xlu0 %1331
      %1333 = vadd.xlane.f32.xlu0 %v1306
      %v1334 = vpop.xlane.xlu0 %1333
      %1335 = vadd.xlane.f32.xlu0 %v1307
      %v1336 = vpop.xlane.xlu0 %1335
      %1337 = vadd.xlane.f32.xlu0 %v1308
      %v1338 = vpop.xlane.xlu0 %1337
      %1339 = vadd.xlane.f32.xlu0 %v1309
      %v1340 = vpop.xlane.xlu0 %1339
      %1341 = vadd.xlane.f32.xlu0 %v1310
      %v1342 = vpop.xlane.xlu0 %1341
      %v1343 = vadd.f32 %v1312, 0.0
      %v1344 = vadd.f32 %v1314, 0.0
      %v1345 = vadd.f32 %v1316, 0.0
      %v1346 = vadd.f32 %v1318, 0.0
      %v1347 = vadd.f32 %v1320, 0.0
      %v1348 = vadd.f32 %v1322, 0.0
      %v1349 = vadd.f32 %v1324, 0.0
      %v1350 = vadd.f32 %v1326, 0.0
      %v1351 = vadd.f32 %v1328, 0.0
      %v1352 = vadd.f32 %v1330, 0.0
      %v1353 = vadd.f32 %v1332, 0.0
      %v1354 = vadd.f32 %v1334, 0.0
      %v1355 = vadd.f32 %v1336, 0.0
      %v1356 = vadd.f32 %v1338, 0.0
      %v1357 = vadd.f32 %v1340, 0.0
      %v1358 = vadd.f32 %v1342, 0.0
      %s1359 = scalar_lea.vmem [#allocation2], 128
      %v1360 = vld [vmem:[%s1359] sm:$0xff]
      %v1361 = vld [vmem:[%s1359 + $0x8] sm:$0xff]
      %v1362 = vld [vmem:[%s1359 + $0x10] sm:$0xff]
      %v1363 = vld [vmem:[%s1359 + $0x18] sm:$0xff]
      %v1364 = vld [vmem:[%s1359 + $0x20] sm:$0xff]
      %v1365 = vld [vmem:[%s1359 + $0x28] sm:$0xff]
      %v1366 = vld [vmem:[%s1359 + $0x30] sm:$0xff]
      %v1367 = vld [vmem:[%s1359 + $0x38] sm:$0xff]
      %v1368 = vld [vmem:[%s1359 + $0x40] sm:$0xff]
      %v1369 = vld [vmem:[%s1359 + $0x48] sm:$0xff]
      %v1370 = vld [vmem:[%s1359 + $0x50] sm:$0xff]
      %v1371 = vld [vmem:[%s1359 + $0x58] sm:$0xff]
      %v1372 = vld [vmem:[%s1359 + $0x60] sm:$0xff]
      %v1373 = vld [vmem:[%s1359 + $0x68] sm:$0xff]
      %v1374 = vld [vmem:[%s1359 + $0x70] sm:$0xff]
      %v1375 = vld [vmem:[%s1359 + $0x78] sm:$0xff]
      %v1376 = vadd.f32 %v1360, %v1343
      %v1377 = vadd.f32 %v1361, %v1344
      %v1378 = vadd.f32 %v1362, %v1345
      %v1379 = vadd.f32 %v1363, %v1346
      %v1380 = vadd.f32 %v1364, %v1347
      %v1381 = vadd.f32 %v1365, %v1348
      %v1382 = vadd.f32 %v1366, %v1349
      %v1383 = vadd.f32 %v1367, %v1350
      %v1384 = vadd.f32 %v1368, %v1351
      %v1385 = vadd.f32 %v1369, %v1352
      %v1386 = vadd.f32 %v1370, %v1353
      %v1387 = vadd.f32 %v1371, %v1354
      %v1388 = vadd.f32 %v1372, %v1355
      %v1389 = vadd.f32 %v1373, %v1356
      %v1390 = vadd.f32 %v1374, %v1357
      %v1391 = vadd.f32 %v1375, %v1358
      %1392 = vst.msk [vmem:[%s1359] sm:$0xff] %vm705, %v1376
      %1393 = vst.msk [vmem:[%s1359 + $0x8] sm:$0xff] %vm705, %v1377
      %1394 = vst.msk [vmem:[%s1359 + $0x10] sm:$0xff] %vm705, %v1378
      %1395 = vst.msk [vmem:[%s1359 + $0x18] sm:$0xff] %vm705, %v1379
      %1396 = vst.msk [vmem:[%s1359 + $0x20] sm:$0xff] %vm705, %v1380
      %1397 = vst.msk [vmem:[%s1359 + $0x28] sm:$0xff] %vm705, %v1381
      %1398 = vst.msk [vmem:[%s1359 + $0x30] sm:$0xff] %vm705, %v1382
      %1399 = vst.msk [vmem:[%s1359 + $0x38] sm:$0xff] %vm705, %v1383
      %1400 = vst.msk [vmem:[%s1359 + $0x40] sm:$0xff] %vm705, %v1384
      %1401 = vst.msk [vmem:[%s1359 + $0x48] sm:$0xff] %vm705, %v1385
      %1402 = vst.msk [vmem:[%s1359 + $0x50] sm:$0xff] %vm705, %v1386
      %1403 = vst.msk [vmem:[%s1359 + $0x58] sm:$0xff] %vm705, %v1387
      %1404 = vst.msk [vmem:[%s1359 + $0x60] sm:$0xff] %vm705, %v1388
      %1405 = vst.msk [vmem:[%s1359 + $0x68] sm:$0xff] %vm705, %v1389
      %1406 = vst.msk [vmem:[%s1359 + $0x70] sm:$0xff] %vm705, %v1390
      %1407 = vst.msk [vmem:[%s1359 + $0x78] sm:$0xff] %vm705, %v1391
      %v1408 = vld [vmem:[%s260 + $0x4] sm:$0xf]
      %v1410 = vsel %vm460, %v1408, 0
      %1412 = vmatprep.subr.mxu0 0.0
      %1413 = vmatpush1.msra.mxu0 0.0
      %1414 = vmatprep.subr.mxu0 0.0
      %1415 = vmatpush1.msra.mxu0 0.0
      %1416 = vmatprep.subr.mxu0 0.0
      %1417 = vmatpush1.msra.mxu0 0.0
      %1418 = vmatprep.subr.mxu0 0.0
      %1419 = vmatpush1.msra.mxu0 0.0
      %1420 = vmatprep.subr.mxu0 0.0
      %1421 = vmatpush1.msra.mxu0 0.0
      %1422 = vmatprep.subr.mxu0 0.0
      %1423 = vmatpush1.msra.mxu0 0.0
      %1424 = vmatprep.subr.mxu0 0.0
      %1425 = vmatpush1.msra.mxu0 0.0
      %1426 = vmatprep.subr.mxu0 0.0
      %1427 = vmatpush1.msra.mxu0 0.0
      %1428 = vmatprep.subr.mxu0 0.0
      %1429 = vmatpush1.msra.mxu0 0.0
      %1430 = vmatprep.subr.mxu0 0.0
      %1431 = vmatpush1.msra.mxu0 0.0
      %1432 = vmatprep.subr.mxu0 0.0
      %1433 = vmatpush1.msra.mxu0 0.0
      %1434 = vmatprep.subr.mxu0 0.0
      %1435 = vmatpush1.msra.mxu0 0.0
      %1436 = vmatprep.subr.mxu0 0.0
      %1437 = vmatpush1.msra.mxu0 0.0
      %1438 = vmatprep.subr.mxu0 0.0
      %1439 = vmatpush1.msra.mxu0 0.0
      %1440 = vmatprep.subr.mxu0 0.0
      %1441 = vmatpush1.msra.mxu0 0.0
      %1442 = vmatprep.subr.mxu0 0.0
      %1443 = vmatpush1.msra.mxu0 %v1410
      %1444 = vmatprep.subr.mxu0 0.0
      %1445 = vmatpush2.msra.mxu0 0.0
      %1446 = vmatprep.subr.mxu0 0.0
      %1447 = vmatpush2.msra.mxu0 0.0
      %1448 = vmatprep.subr.mxu0 0.0
      %1449 = vmatpush2.msra.mxu0 0.0
      %1450 = vmatprep.subr.mxu0 0.0
      %1451 = vmatpush2.msra.mxu0 0.0
      %1452 = vmatprep.subr.mxu0 0.0
      %1453 = vmatpush2.msra.mxu0 0.0
      %1454 = vmatprep.subr.mxu0 0.0
      %1455 = vmatpush2.msra.mxu0 0.0
      %1456 = vmatprep.subr.mxu0 0.0
      %1457 = vmatpush2.msra.mxu0 0.0
      %1458 = vmatprep.subr.mxu0 0.0
      %1459 = vmatpush2.msra.mxu0 0.0
      %1460 = vmatprep.subr.mxu0 0.0
      %1461 = vmatpush2.msra.mxu0 0.0
      %1462 = vmatprep.subr.mxu0 0.0
      %1463 = vmatpush2.msra.mxu0 0.0
      %1464 = vmatprep.subr.mxu0 0.0
      %1465 = vmatpush2.msra.mxu0 0.0
      %1466 = vmatprep.subr.mxu0 0.0
      %1467 = vmatpush2.msra.mxu0 0.0
      %1468 = vmatprep.subr.mxu0 0.0
      %1469 = vmatpush2.msra.mxu0 0.0
      %1470 = vmatprep.subr.mxu0 0.0
      %1471 = vmatpush2.msra.mxu0 0.0
      %1472 = vmatprep.subr.mxu0 0.0
      %1473 = vmatpush2.msra.mxu0 0.0
      %1474 = vmatprep.subr.mxu0 0.0
      %1475 = vmatpush2.msra.mxu0 0.0
      %1476 = vmatprep.mubr.f32.mxu0 0.0
      %1477 = vmatmul.mubr.f32.gmra.mxu0 %v1100
      %v1478 = vpop.f32.mrf.mxu0
      %v1479 = vadd.f32 %v1021, %v1478
      %v1480 = vpop.f32.mrf.mxu0
      %1481 = vmatprep.mubr.f32.mxu0 0.0
      %1482 = vmatmul.mubr.f32.gmra.mxu0 %v1103
      %v1483 = vpop.f32.mrf.mxu0
      %v1484 = vadd.f32 %v1026, %v1483
      %v1485 = vpop.f32.mrf.mxu0
      %1486 = vmatprep.mubr.f32.mxu0 0.0
      %1487 = vmatmul.mubr.f32.gmra.mxu0 %v1106
      %v1488 = vpop.f32.mrf.mxu0
      %v1489 = vadd.f32 %v1031, %v1488
      %v1490 = vpop.f32.mrf.mxu0
      %1491 = vmatprep.mubr.f32.mxu0 0.0
      %1492 = vmatmul.mubr.f32.gmra.mxu0 %v1109
      %v1493 = vpop.f32.mrf.mxu0
      %v1494 = vadd.f32 %v1036, %v1493
      %v1495 = vpop.f32.mrf.mxu0
      %1496 = vmatprep.mubr.f32.mxu0 0.0
      %1497 = vmatmul.mubr.f32.gmra.mxu0 %v1112
      %v1498 = vpop.f32.mrf.mxu0
      %v1499 = vadd.f32 %v1041, %v1498
      %v1500 = vpop.f32.mrf.mxu0
      %1501 = vmatprep.mubr.f32.mxu0 0.0
      %1502 = vmatmul.mubr.f32.gmra.mxu0 %v1115
      %v1503 = vpop.f32.mrf.mxu0
      %v1504 = vadd.f32 %v1046, %v1503
      %v1505 = vpop.f32.mrf.mxu0
      %1506 = vmatprep.mubr.f32.mxu0 0.0
      %1507 = vmatmul.mubr.f32.gmra.mxu0 %v1118
      %v1508 = vpop.f32.mrf.mxu0
      %v1509 = vadd.f32 %v1051, %v1508
      %v1510 = vpop.f32.mrf.mxu0
      %1511 = vmatprep.mubr.f32.mxu0 0.0
      %1512 = vmatmul.mubr.f32.gmra.mxu0 %v1121
      %v1513 = vpop.f32.mrf.mxu0
      %v1514 = vadd.f32 %v1056, %v1513
      %v1515 = vpop.f32.mrf.mxu0
      %1516 = vmatprep.mubr.f32.mxu0 0.0
      %1517 = vmatmul.mubr.f32.gmra.mxu0 %v1124
      %v1518 = vpop.f32.mrf.mxu0
      %v1519 = vadd.f32 %v1061, %v1518
      %v1520 = vpop.f32.mrf.mxu0
      %1521 = vmatprep.mubr.f32.mxu0 0.0
      %1522 = vmatmul.mubr.f32.gmra.mxu0 %v1127
      %v1523 = vpop.f32.mrf.mxu0
      %v1524 = vadd.f32 %v1066, %v1523
      %v1525 = vpop.f32.mrf.mxu0
      %1526 = vmatprep.mubr.f32.mxu0 0.0
      %1527 = vmatmul.mubr.f32.gmra.mxu0 %v1130
      %v1528 = vpop.f32.mrf.mxu0
      %v1529 = vadd.f32 %v1071, %v1528
      %v1530 = vpop.f32.mrf.mxu0
      %1531 = vmatprep.mubr.f32.mxu0 0.0
      %1532 = vmatmul.mubr.f32.gmra.mxu0 %v1133
      %v1533 = vpop.f32.mrf.mxu0
      %v1534 = vadd.f32 %v1076, %v1533
      %v1535 = vpop.f32.mrf.mxu0
      %1536 = vmatprep.mubr.f32.mxu0 0.0
      %1537 = vmatmul.mubr.f32.gmra.mxu0 %v1136
      %v1538 = vpop.f32.mrf.mxu0
      %v1539 = vadd.f32 %v1081, %v1538
      %v1540 = vpop.f32.mrf.mxu0
      %1541 = vmatprep.mubr.f32.mxu0 0.0
      %1542 = vmatmul.mubr.f32.gmra.mxu0 %v1139
      %v1543 = vpop.f32.mrf.mxu0
      %v1544 = vadd.f32 %v1086, %v1543
      %v1545 = vpop.f32.mrf.mxu0
      %1546 = vmatprep.mubr.f32.mxu0 0.0
      %1547 = vmatmul.mubr.f32.gmra.mxu0 %v1142
      %v1548 = vpop.f32.mrf.mxu0
      %v1549 = vadd.f32 %v1091, %v1548
      %v1550 = vpop.f32.mrf.mxu0
      %1551 = vmatprep.mubr.f32.mxu0 0.0
      %1552 = vmatmul.mubr.f32.gmra.mxu0 %v1145
      %v1553 = vpop.f32.mrf.mxu0
      %v1554 = vadd.f32 %v1096, %v1553
      %v1555 = vpop.f32.mrf.mxu0
      %1556 = vdwg.mxu0
      %v1557 = vmax.f32 %v1479, 0.0
      %v1558 = vmax.f32 %v1484, 0.0
      %v1559 = vmax.f32 %v1489, 0.0
      %v1560 = vmax.f32 %v1494, 0.0
      %v1561 = vmax.f32 %v1499, 0.0
      %v1562 = vmax.f32 %v1504, 0.0
      %v1563 = vmax.f32 %v1509, 0.0
      %v1564 = vmax.f32 %v1514, 0.0
      %v1565 = vmax.f32 %v1519, 0.0
      %v1566 = vmax.f32 %v1524, 0.0
      %v1567 = vmax.f32 %v1529, 0.0
      %v1568 = vmax.f32 %v1534, 0.0
      %v1569 = vmax.f32 %v1539, 0.0
      %v1570 = vmax.f32 %v1544, 0.0
      %v1571 = vmax.f32 %v1549, 0.0
      %v1572 = vmax.f32 %v1554, 0.0
      %1573 = vadd.xlane.f32.xlu0 %v1557
      %v1574 = vpop.xlane.xlu0 %1573
      %1575 = vadd.xlane.f32.xlu0 %v1558
      %v1576 = vpop.xlane.xlu0 %1575
      %1577 = vadd.xlane.f32.xlu0 %v1559
      %v1578 = vpop.xlane.xlu0 %1577
      %1579 = vadd.xlane.f32.xlu0 %v1560
      %v1580 = vpop.xlane.xlu0 %1579
      %1581 = vadd.xlane.f32.xlu0 %v1561
      %v1582 = vpop.xlane.xlu0 %1581
      %1583 = vadd.xlane.f32.xlu0 %v1562
      %v1584 = vpop.xlane.xlu0 %1583
      %1585 = vadd.xlane.f32.xlu0 %v1563
      %v1586 = vpop.xlane.xlu0 %1585
      %1587 = vadd.xlane.f32.xlu0 %v1564
      %v1588 = vpop.xlane.xlu0 %1587
      %1589 = vadd.xlane.f32.xlu0 %v1565
      %v1590 = vpop.xlane.xlu0 %1589
      %1591 = vadd.xlane.f32.xlu0 %v1566
      %v1592 = vpop.xlane.xlu0 %1591
      %1593 = vadd.xlane.f32.xlu0 %v1567
      %v1594 = vpop.xlane.xlu0 %1593
      %1595 = vadd.xlane.f32.xlu0 %v1568
      %v1596 = vpop.xlane.xlu0 %1595
      %1597 = vadd.xlane.f32.xlu0 %v1569
      %v1598 = vpop.xlane.xlu0 %1597
      %1599 = vadd.xlane.f32.xlu0 %v1570
      %v1600 = vpop.xlane.xlu0 %1599
      %1601 = vadd.xlane.f32.xlu0 %v1571
      %v1602 = vpop.xlane.xlu0 %1601
      %1603 = vadd.xlane.f32.xlu0 %v1572
      %v1604 = vpop.xlane.xlu0 %1603
      %v1605 = vadd.f32 %v1574, 0.0
      %v1606 = vadd.f32 %v1576, 0.0
      %v1607 = vadd.f32 %v1578, 0.0
      %v1608 = vadd.f32 %v1580, 0.0
      %v1609 = vadd.f32 %v1582, 0.0
      %v1610 = vadd.f32 %v1584, 0.0
      %v1611 = vadd.f32 %v1586, 0.0
      %v1612 = vadd.f32 %v1588, 0.0
      %v1613 = vadd.f32 %v1590, 0.0
      %v1614 = vadd.f32 %v1592, 0.0
      %v1615 = vadd.f32 %v1594, 0.0
      %v1616 = vadd.f32 %v1596, 0.0
      %v1617 = vadd.f32 %v1598, 0.0
      %v1618 = vadd.f32 %v1600, 0.0
      %v1619 = vadd.f32 %v1602, 0.0
      %v1620 = vadd.f32 %v1604, 0.0
      %v1621 = vld [vmem:[%s1359] sm:$0xff]
      %v1622 = vld [vmem:[%s1359 + $0x8] sm:$0xff]
      %v1623 = vld [vmem:[%s1359 + $0x10] sm:$0xff]
      %v1624 = vld [vmem:[%s1359 + $0x18] sm:$0xff]
      %v1625 = vld [vmem:[%s1359 + $0x20] sm:$0xff]
      %v1626 = vld [vmem:[%s1359 + $0x28] sm:$0xff]
      %v1627 = vld [vmem:[%s1359 + $0x30] sm:$0xff]
      %v1628 = vld [vmem:[%s1359 + $0x38] sm:$0xff]
      %v1629 = vld [vmem:[%s1359 + $0x40] sm:$0xff]
      %v1630 = vld [vmem:[%s1359 + $0x48] sm:$0xff]
      %v1631 = vld [vmem:[%s1359 + $0x50] sm:$0xff]
      %v1632 = vld [vmem:[%s1359 + $0x58] sm:$0xff]
      %v1633 = vld [vmem:[%s1359 + $0x60] sm:$0xff]
      %v1634 = vld [vmem:[%s1359 + $0x68] sm:$0xff]
      %v1635 = vld [vmem:[%s1359 + $0x70] sm:$0xff]
      %v1636 = vld [vmem:[%s1359 + $0x78] sm:$0xff]
      %v1637 = vadd.f32 %v1621, %v1605
      %v1638 = vadd.f32 %v1622, %v1606
      %v1639 = vadd.f32 %v1623, %v1607
      %v1640 = vadd.f32 %v1624, %v1608
      %v1641 = vadd.f32 %v1625, %v1609
      %v1642 = vadd.f32 %v1626, %v1610
      %v1643 = vadd.f32 %v1627, %v1611
      %v1644 = vadd.f32 %v1628, %v1612
      %v1645 = vadd.f32 %v1629, %v1613
      %v1646 = vadd.f32 %v1630, %v1614
      %v1647 = vadd.f32 %v1631, %v1615
      %v1648 = vadd.f32 %v1632, %v1616
      %v1649 = vadd.f32 %v1633, %v1617
      %v1650 = vadd.f32 %v1634, %v1618
      %v1651 = vadd.f32 %v1635, %v1619
      %v1652 = vadd.f32 %v1636, %v1620
      %1653 = vst.msk [vmem:[%s1359] sm:$0xff] %vm967, %v1637
      %1654 = vst.msk [vmem:[%s1359 + $0x8] sm:$0xff] %vm967, %v1638
      %1655 = vst.msk [vmem:[%s1359 + $0x10] sm:$0xff] %vm967, %v1639
      %1656 = vst.msk [vmem:[%s1359 + $0x18] sm:$0xff] %vm967, %v1640
      %1657 = vst.msk [vmem:[%s1359 + $0x20] sm:$0xff] %vm967, %v1641
      %1658 = vst.msk [vmem:[%s1359 + $0x28] sm:$0xff] %vm967, %v1642
      %1659 = vst.msk [vmem:[%s1359 + $0x30] sm:$0xff] %vm967, %v1643
      %1660 = vst.msk [vmem:[%s1359 + $0x38] sm:$0xff] %vm967, %v1644
      %1661 = vst.msk [vmem:[%s1359 + $0x40] sm:$0xff] %vm967, %v1645
      %1662 = vst.msk [vmem:[%s1359 + $0x48] sm:$0xff] %vm967, %v1646
      %1663 = vst.msk [vmem:[%s1359 + $0x50] sm:$0xff] %vm967, %v1647
      %1664 = vst.msk [vmem:[%s1359 + $0x58] sm:$0xff] %vm967, %v1648
      %1665 = vst.msk [vmem:[%s1359 + $0x60] sm:$0xff] %vm967, %v1649
      %1666 = vst.msk [vmem:[%s1359 + $0x68] sm:$0xff] %vm967, %v1650
      %1667 = vst.msk [vmem:[%s1359 + $0x70] sm:$0xff] %vm967, %v1651
      %1668 = vst.msk [vmem:[%s1359 + $0x78] sm:$0xff] %vm967, %v1652
      %p1669 = scmp.eq.s32.totalorder %s18, 1
      // Predicated region
      $region53: #{teacher_student_forward.1} parent=47 // pred_check
        %p1670 = pneg %p1669
      $region54: #{teacher_student_forward.1} parent=47 // pred_check_branch
        %1672 = sbr.rel (%p1670) target = $region56
      $region55: #{teacher_student_forward.1} parent=47 // pred_region
        %v1673 = vld [vmem:[#allocation2] sm:$0xff]
        %v1674 = vld [vmem:[#allocation2 + $0x8] sm:$0xff]
        %v1675 = vld [vmem:[#allocation2 + $0x10] sm:$0xff]
        %v1676 = vld [vmem:[#allocation2 + $0x18] sm:$0xff]
        %v1677 = vld [vmem:[#allocation2 + $0x20] sm:$0xff]
        %v1678 = vld [vmem:[#allocation2 + $0x28] sm:$0xff]
        %v1679 = vld [vmem:[#allocation2 + $0x30] sm:$0xff]
        %v1680 = vld [vmem:[#allocation2 + $0x38] sm:$0xff]
        %v1681 = vld [vmem:[#allocation2 + $0x40] sm:$0xff]
        %v1682 = vld [vmem:[#allocation2 + $0x48] sm:$0xff]
        %v1683 = vld [vmem:[#allocation2 + $0x50] sm:$0xff]
        %v1684 = vld [vmem:[#allocation2 + $0x58] sm:$0xff]
        %v1685 = vld [vmem:[#allocation2 + $0x60] sm:$0xff]
        %v1686 = vld [vmem:[#allocation2 + $0x68] sm:$0xff]
        %v1687 = vld [vmem:[#allocation2 + $0x70] sm:$0xff]
        %v1688 = vld [vmem:[#allocation2 + $0x78] sm:$0xff]
        %v1689 = vmul.f32 %v1673, 0.00390625
        %v1690 = vmul.f32 %v1674, 0.00390625
        %v1691 = vmul.f32 %v1675, 0.00390625
        %v1692 = vmul.f32 %v1676, 0.00390625
        %v1693 = vmul.f32 %v1677, 0.00390625
        %v1694 = vmul.f32 %v1678, 0.00390625
        %v1695 = vmul.f32 %v1679, 0.00390625
        %v1696 = vmul.f32 %v1680, 0.00390625
        %v1697 = vmul.f32 %v1681, 0.00390625
        %v1698 = vmul.f32 %v1682, 0.00390625
        %v1699 = vmul.f32 %v1683, 0.00390625
        %v1700 = vmul.f32 %v1684, 0.00390625
        %v1701 = vmul.f32 %v1685, 0.00390625
        %v1702 = vmul.f32 %v1686, 0.00390625
        %v1703 = vmul.f32 %v1687, 0.00390625
        %v1704 = vmul.f32 %v1688, 0.00390625
        %v1705 = vld [vmem:[%s3] sm:$0xff]
        %v1706 = vld [vmem:[%s3 + $0x8] sm:$0xff]
        %v1707 = vld [vmem:[%s3 + $0x10] sm:$0xff]
        %v1708 = vld [vmem:[%s3 + $0x18] sm:$0xff]
        %v1709 = vld [vmem:[%s3 + $0x20] sm:$0xff]
        %v1710 = vld [vmem:[%s3 + $0x28] sm:$0xff]
        %v1711 = vld [vmem:[%s3 + $0x30] sm:$0xff]
        %v1712 = vld [vmem:[%s3 + $0x38] sm:$0xff]
        %v1713 = vld [vmem:[%s3 + $0x40] sm:$0xff]
        %v1714 = vld [vmem:[%s3 + $0x48] sm:$0xff]
        %v1715 = vld [vmem:[%s3 + $0x50] sm:$0xff]
        %v1716 = vld [vmem:[%s3 + $0x58] sm:$0xff]
        %v1717 = vld [vmem:[%s3 + $0x60] sm:$0xff]
        %v1718 = vld [vmem:[%s3 + $0x68] sm:$0xff]
        %v1719 = vld [vmem:[%s3 + $0x70] sm:$0xff]
        %v1720 = vld [vmem:[%s3 + $0x78] sm:$0xff]
        %v1721 = vld [vmem:[%s4] sm:$0xff]
        %v1722 = vld [vmem:[%s4 + $0x8] sm:$0xff]
        %v1723 = vld [vmem:[%s4 + $0x10] sm:$0xff]
        %v1724 = vld [vmem:[%s4 + $0x18] sm:$0xff]
        %v1725 = vld [vmem:[%s4 + $0x20] sm:$0xff]
        %v1726 = vld [vmem:[%s4 + $0x28] sm:$0xff]
        %v1727 = vld [vmem:[%s4 + $0x30] sm:$0xff]
        %v1728 = vld [vmem:[%s4 + $0x38] sm:$0xff]
        %v1729 = vld [vmem:[%s4 + $0x40] sm:$0xff]
        %v1730 = vld [vmem:[%s4 + $0x48] sm:$0xff]
        %v1731 = vld [vmem:[%s4 + $0x50] sm:$0xff]
        %v1732 = vld [vmem:[%s4 + $0x58] sm:$0xff]
        %v1733 = vld [vmem:[%s4 + $0x60] sm:$0xff]
        %v1734 = vld [vmem:[%s4 + $0x68] sm:$0xff]
        %v1735 = vld [vmem:[%s4 + $0x70] sm:$0xff]
        %v1736 = vld [vmem:[%s4 + $0x78] sm:$0xff]
        %1738 = vset.pattern.permute.xlu0 0
        %1739 = vperm.xlu0 %1738, %v1721
        %v1740 = vpop.permute.xlu0 %1739
        %1743 = vset.pattern.permute.xlu0 0
        %1744 = vperm.xlu0 %1743, %v1722
        %v1745 = vpop.permute.xlu0 %1744
        %1748 = vset.pattern.permute.xlu0 0
        %1749 = vperm.xlu0 %1748, %v1723
        %v1750 = vpop.permute.xlu0 %1749
        %1753 = vset.pattern.permute.xlu0 0
        %1754 = vperm.xlu0 %1753, %v1724
        %v1755 = vpop.permute.xlu0 %1754
        %1758 = vset.pattern.permute.xlu0 0
        %1759 = vperm.xlu0 %1758, %v1725
        %v1760 = vpop.permute.xlu0 %1759
        %1763 = vset.pattern.permute.xlu0 0
        %1764 = vperm.xlu0 %1763, %v1726
        %v1765 = vpop.permute.xlu0 %1764
        %1768 = vset.pattern.permute.xlu0 0
        %1769 = vperm.xlu0 %1768, %v1727
        %v1770 = vpop.permute.xlu0 %1769
        %1773 = vset.pattern.permute.xlu0 0
        %1774 = vperm.xlu0 %1773, %v1728
        %v1775 = vpop.permute.xlu0 %1774
        %1778 = vset.pattern.permute.xlu0 0
        %1779 = vperm.xlu0 %1778, %v1729
        %v1780 = vpop.permute.xlu0 %1779
        %1783 = vset.pattern.permute.xlu0 0
        %1784 = vperm.xlu0 %1783, %v1730
        %v1785 = vpop.permute.xlu0 %1784
        %1788 = vset.pattern.permute.xlu0 0
        %1789 = vperm.xlu0 %1788, %v1731
        %v1790 = vpop.permute.xlu0 %1789
        %1793 = vset.pattern.permute.xlu0 0
        %1794 = vperm.xlu0 %1793, %v1732
        %v1795 = vpop.permute.xlu0 %1794
        %1798 = vset.pattern.permute.xlu0 0
        %1799 = vperm.xlu0 %1798, %v1733
        %v1800 = vpop.permute.xlu0 %1799
        %1803 = vset.pattern.permute.xlu0 0
        %1804 = vperm.xlu0 %1803, %v1734
        %v1805 = vpop.permute.xlu0 %1804
        %1808 = vset.pattern.permute.xlu0 0
        %1809 = vperm.xlu0 %1808, %v1735
        %v1810 = vpop.permute.xlu0 %1809
        %1813 = vset.pattern.permute.xlu0 0
        %1814 = vperm.xlu0 %1813, %v1736
        %v1815 = vpop.permute.xlu0 %1814
        %1817 = vmatprep.subr.mxu0 0.0
        %1818 = vmatpush1.msra.mxu0 %v1704
        %1819 = vmatprep.subr.mxu0 0.0
        %1820 = vmatpush1.msra.mxu0 %v1703
        %1821 = vmatprep.subr.mxu0 0.0
        %1822 = vmatpush1.msra.mxu0 %v1702
        %1823 = vmatprep.subr.mxu0 0.0
        %1824 = vmatpush1.msra.mxu0 %v1701
        %1825 = vmatprep.subr.mxu0 0.0
        %1826 = vmatpush1.msra.mxu0 %v1700
        %1827 = vmatprep.subr.mxu0 0.0
        %1828 = vmatpush1.msra.mxu0 %v1699
        %1829 = vmatprep.subr.mxu0 0.0
        %1830 = vmatpush1.msra.mxu0 %v1698
        %1831 = vmatprep.subr.mxu0 0.0
        %1832 = vmatpush1.msra.mxu0 %v1697
        %1833 = vmatprep.subr.mxu0 0.0
        %1834 = vmatpush1.msra.mxu0 %v1696
        %1835 = vmatprep.subr.mxu0 0.0
        %1836 = vmatpush1.msra.mxu0 %v1695
        %1837 = vmatprep.subr.mxu0 0.0
        %1838 = vmatpush1.msra.mxu0 %v1694
        %1839 = vmatprep.subr.mxu0 0.0
        %1840 = vmatpush1.msra.mxu0 %v1693
        %1841 = vmatprep.subr.mxu0 0.0
        %1842 = vmatpush1.msra.mxu0 %v1692
        %1843 = vmatprep.subr.mxu0 0.0
        %1844 = vmatpush1.msra.mxu0 %v1691
        %1845 = vmatprep.subr.mxu0 0.0
        %1846 = vmatpush1.msra.mxu0 %v1690
        %1847 = vmatprep.subr.mxu0 0.0
        %1848 = vmatpush1.msra.mxu0 %v1689
        %1849 = vmatprep.subr.mxu0 0.0
        %1850 = vmatpush2.msra.mxu0 0.0
        %1851 = vmatprep.subr.mxu0 0.0
        %1852 = vmatpush2.msra.mxu0 0.0
        %1853 = vmatprep.subr.mxu0 0.0
        %1854 = vmatpush2.msra.mxu0 0.0
        %1855 = vmatprep.subr.mxu0 0.0
        %1856 = vmatpush2.msra.mxu0 0.0
        %1857 = vmatprep.subr.mxu0 0.0
        %1858 = vmatpush2.msra.mxu0 0.0
        %1859 = vmatprep.subr.mxu0 0.0
        %1860 = vmatpush2.msra.mxu0 0.0
        %1861 = vmatprep.subr.mxu0 0.0
        %1862 = vmatpush2.msra.mxu0 0.0
        %1863 = vmatprep.subr.mxu0 0.0
        %1864 = vmatpush2.msra.mxu0 0.0
        %1865 = vmatprep.subr.mxu0 0.0
        %1866 = vmatpush2.msra.mxu0 0.0
        %1867 = vmatprep.subr.mxu0 0.0
        %1868 = vmatpush2.msra.mxu0 0.0
        %1869 = vmatprep.subr.mxu0 0.0
        %1870 = vmatpush2.msra.mxu0 0.0
        %1871 = vmatprep.subr.mxu0 0.0
        %1872 = vmatpush2.msra.mxu0 0.0
        %1873 = vmatprep.subr.mxu0 0.0
        %1874 = vmatpush2.msra.mxu0 0.0
        %1875 = vmatprep.subr.mxu0 0.0
        %1876 = vmatpush2.msra.mxu0 0.0
        %1877 = vmatprep.subr.mxu0 0.0
        %1878 = vmatpush2.msra.mxu0 0.0
        %1879 = vmatprep.subr.mxu0 0.0
        %1880 = vmatpush2.msra.mxu0 0.0
        %1881 = vmatprep.mubr.f32.mxu0 0.0
        %1882 = vmatmul.mubr.f32.gmra.mxu0 %v1705
        %v1883 = vpop.f32.mrf.mxu0
        %v1884 = vadd.f32 %v1740, %v1883
        %v1885 = vpop.f32.mrf.mxu0
        %1886 = vmatprep.mubr.f32.mxu0 0.0
        %1887 = vmatmul.mubr.f32.gmra.mxu0 %v1706
        %v1888 = vpop.f32.mrf.mxu0
        %v1889 = vadd.f32 %v1745, %v1888
        %v1890 = vpop.f32.mrf.mxu0
        %1891 = vmatprep.mubr.f32.mxu0 0.0
        %1892 = vmatmul.mubr.f32.gmra.mxu0 %v1707
        %v1893 = vpop.f32.mrf.mxu0
        %v1894 = vadd.f32 %v1750, %v1893
        %v1895 = vpop.f32.mrf.mxu0
        %1896 = vmatprep.mubr.f32.mxu0 0.0
        %1897 = vmatmul.mubr.f32.gmra.mxu0 %v1708
        %v1898 = vpop.f32.mrf.mxu0
        %v1899 = vadd.f32 %v1755, %v1898
        %v1900 = vpop.f32.mrf.mxu0
        %1901 = vmatprep.mubr.f32.mxu0 0.0
        %1902 = vmatmul.mubr.f32.gmra.mxu0 %v1709
        %v1903 = vpop.f32.mrf.mxu0
        %v1904 = vadd.f32 %v1760, %v1903
        %v1905 = vpop.f32.mrf.mxu0
        %1906 = vmatprep.mubr.f32.mxu0 0.0
        %1907 = vmatmul.mubr.f32.gmra.mxu0 %v1710
        %v1908 = vpop.f32.mrf.mxu0
        %v1909 = vadd.f32 %v1765, %v1908
        %v1910 = vpop.f32.mrf.mxu0
        %1911 = vmatprep.mubr.f32.mxu0 0.0
        %1912 = vmatmul.mubr.f32.gmra.mxu0 %v1711
        %v1913 = vpop.f32.mrf.mxu0
        %v1914 = vadd.f32 %v1770, %v1913
        %v1915 = vpop.f32.mrf.mxu0
        %1916 = vmatprep.mubr.f32.mxu0 0.0
        %1917 = vmatmul.mubr.f32.gmra.mxu0 %v1712
        %v1918 = vpop.f32.mrf.mxu0
        %v1919 = vadd.f32 %v1775, %v1918
        %v1920 = vpop.f32.mrf.mxu0
        %1921 = vmatprep.mubr.f32.mxu0 0.0
        %1922 = vmatmul.mubr.f32.gmra.mxu0 %v1713
        %v1923 = vpop.f32.mrf.mxu0
        %v1924 = vadd.f32 %v1780, %v1923
        %v1925 = vpop.f32.mrf.mxu0
        %1926 = vmatprep.mubr.f32.mxu0 0.0
        %1927 = vmatmul.mubr.f32.gmra.mxu0 %v1714
        %v1928 = vpop.f32.mrf.mxu0
        %v1929 = vadd.f32 %v1785, %v1928
        %v1930 = vpop.f32.mrf.mxu0
        %1931 = vmatprep.mubr.f32.mxu0 0.0
        %1932 = vmatmul.mubr.f32.gmra.mxu0 %v1715
        %v1933 = vpop.f32.mrf.mxu0
        %v1934 = vadd.f32 %v1790, %v1933
        %v1935 = vpop.f32.mrf.mxu0
        %1936 = vmatprep.mubr.f32.mxu0 0.0
        %1937 = vmatmul.mubr.f32.gmra.mxu0 %v1716
        %v1938 = vpop.f32.mrf.mxu0
        %v1939 = vadd.f32 %v1795, %v1938
        %v1940 = vpop.f32.mrf.mxu0
        %1941 = vmatprep.mubr.f32.mxu0 0.0
        %1942 = vmatmul.mubr.f32.gmra.mxu0 %v1717
        %v1943 = vpop.f32.mrf.mxu0
        %v1944 = vadd.f32 %v1800, %v1943
        %v1945 = vpop.f32.mrf.mxu0
        %1946 = vmatprep.mubr.f32.mxu0 0.0
        %1947 = vmatmul.mubr.f32.gmra.mxu0 %v1718
        %v1948 = vpop.f32.mrf.mxu0
        %v1949 = vadd.f32 %v1805, %v1948
        %v1950 = vpop.f32.mrf.mxu0
        %1951 = vmatprep.mubr.f32.mxu0 0.0
        %1952 = vmatmul.mubr.f32.gmra.mxu0 %v1719
        %v1953 = vpop.f32.mrf.mxu0
        %v1954 = vadd.f32 %v1810, %v1953
        %v1955 = vpop.f32.mrf.mxu0
        %1956 = vmatprep.mubr.f32.mxu0 0.0
        %1957 = vmatmul.mubr.f32.gmra.mxu0 %v1720
        %v1958 = vpop.f32.mrf.mxu0
        %v1959 = vadd.f32 %v1815, %v1958
        %v1960 = vpop.f32.mrf.mxu0
        %1961 = vdwg.mxu0
        %v1962 = vmul.f32 %v1884, %v1884
        %v1963 = vmul.f32 %v1889, %v1889
        %v1964 = vmul.f32 %v1894, %v1894
        %v1965 = vmul.f32 %v1899, %v1899
        %v1966 = vmul.f32 %v1904, %v1904
        %v1967 = vmul.f32 %v1909, %v1909
        %v1968 = vmul.f32 %v1914, %v1914
        %v1969 = vmul.f32 %v1919, %v1919
        %v1970 = vmul.f32 %v1924, %v1924
        %v1971 = vmul.f32 %v1929, %v1929
        %v1972 = vmul.f32 %v1934, %v1934
        %v1973 = vmul.f32 %v1939, %v1939
        %v1974 = vmul.f32 %v1944, %v1944
        %v1975 = vmul.f32 %v1949, %v1949
        %v1976 = vmul.f32 %v1954, %v1954
        %v1977 = vmul.f32 %v1959, %v1959
        %v1978 = vmul.f32 %v1884, %v1962
        %v1979 = vmul.f32 %v1889, %v1963
        %v1980 = vmul.f32 %v1894, %v1964
        %v1981 = vmul.f32 %v1899, %v1965
        %v1982 = vmul.f32 %v1904, %v1966
        %v1983 = vmul.f32 %v1909, %v1967
        %v1984 = vmul.f32 %v1914, %v1968
        %v1985 = vmul.f32 %v1919, %v1969
        %v1986 = vmul.f32 %v1924, %v1970
        %v1987 = vmul.f32 %v1929, %v1971
        %v1988 = vmul.f32 %v1934, %v1972
        %v1989 = vmul.f32 %v1939, %v1973
        %v1990 = vmul.f32 %v1944, %v1974
        %v1991 = vmul.f32 %v1949, %v1975
        %v1992 = vmul.f32 %v1954, %v1976
        %v1993 = vmul.f32 %v1959, %v1977
        %v1994 = vmul.f32 %v1978, 0.044715
        %v1995 = vmul.f32 %v1979, 0.044715
        %v1996 = vmul.f32 %v1980, 0.044715
        %v1997 = vmul.f32 %v1981, 0.044715
        %v1998 = vmul.f32 %v1982, 0.044715
        %v1999 = vmul.f32 %v1983, 0.044715
        %v2000 = vmul.f32 %v1984, 0.044715
        %v2001 = vmul.f32 %v1985, 0.044715
        %v2002 = vmul.f32 %v1986, 0.044715
        %v2003 = vmul.f32 %v1987, 0.044715
        %v2004 = vmul.f32 %v1988, 0.044715
        %v2005 = vmul.f32 %v1989, 0.044715
        %v2006 = vmul.f32 %v1990, 0.044715
        %v2007 = vmul.f32 %v1991, 0.044715
        %v2008 = vmul.f32 %v1992, 0.044715
        %v2009 = vmul.f32 %v1993, 0.044715
        %v2010 = vadd.f32 %v1884, %v1994
        %v2011 = vadd.f32 %v1889, %v1995
        %v2012 = vadd.f32 %v1894, %v1996
        %v2013 = vadd.f32 %v1899, %v1997
        %v2014 = vadd.f32 %v1904, %v1998
        %v2015 = vadd.f32 %v1909, %v1999
        %v2016 = vadd.f32 %v1914, %v2000
        %v2017 = vadd.f32 %v1919, %v2001
        %v2018 = vadd.f32 %v1924, %v2002
        %v2019 = vadd.f32 %v1929, %v2003
        %v2020 = vadd.f32 %v1934, %v2004
        %v2021 = vadd.f32 %v1939, %v2005
        %v2022 = vadd.f32 %v1944, %v2006
        %v2023 = vadd.f32 %v1949, %v2007
        %v2024 = vadd.f32 %v1954, %v2008
        %v2025 = vadd.f32 %v1959, %v2009
        %v2026 = vmul.f32 %v2010, 0.7978846
        %v2027 = vmul.f32 %v2011, 0.7978846
        %v2028 = vmul.f32 %v2012, 0.7978846
        %v2029 = vmul.f32 %v2013, 0.7978846
        %v2030 = vmul.f32 %v2014, 0.7978846
        %v2031 = vmul.f32 %v2015, 0.7978846
        %v2032 = vmul.f32 %v2016, 0.7978846
        %v2033 = vmul.f32 %v2017, 0.7978846
        %v2034 = vmul.f32 %v2018, 0.7978846
        %v2035 = vmul.f32 %v2019, 0.7978846
        %v2036 = vmul.f32 %v2020, 0.7978846
        %v2037 = vmul.f32 %v2021, 0.7978846
        %v2038 = vmul.f32 %v2022, 0.7978846
        %v2039 = vmul.f32 %v2023, 0.7978846
        %v2040 = vmul.f32 %v2024, 0.7978846
        %v2041 = vmul.f32 %v2025, 0.7978846
        %v2042 = vtanh.pop %v2026
        %v2043 = vtanh.pop %v2027
        %v2044 = vtanh.pop %v2028
        %v2045 = vtanh.pop %v2029
        %v2046 = vtanh.pop %v2030
        %v2047 = vtanh.pop %v2031
        %v2048 = vtanh.pop %v2032
        %v2049 = vtanh.pop %v2033
        %v2050 = vtanh.pop %v2034
        %v2051 = vtanh.pop %v2035
        %v2052 = vtanh.pop %v2036
        %v2053 = vtanh.pop %v2037
        %v2054 = vtanh.pop %v2038
        %v2055 = vtanh.pop %v2039
        %v2056 = vtanh.pop %v2040
        %v2057 = vtanh.pop %v2041
        %v2058 = vadd.f32 %v2042, 1.0
        %v2059 = vadd.f32 %v2043, 1.0
        %v2060 = vadd.f32 %v2044, 1.0
        %v2061 = vadd.f32 %v2045, 1.0
        %v2062 = vadd.f32 %v2046, 1.0
        %v2063 = vadd.f32 %v2047, 1.0
        %v2064 = vadd.f32 %v2048, 1.0
        %v2065 = vadd.f32 %v2049, 1.0
        %v2066 = vadd.f32 %v2050, 1.0
        %v2067 = vadd.f32 %v2051, 1.0
        %v2068 = vadd.f32 %v2052, 1.0
        %v2069 = vadd.f32 %v2053, 1.0
        %v2070 = vadd.f32 %v2054, 1.0
        %v2071 = vadd.f32 %v2055, 1.0
        %v2072 = vadd.f32 %v2056, 1.0
        %v2073 = vadd.f32 %v2057, 1.0
        %v2074 = vmul.f32 %v2058, 0.5
        %v2075 = vmul.f32 %v2059, 0.5
        %v2076 = vmul.f32 %v2060, 0.5
        %v2077 = vmul.f32 %v2061, 0.5
        %v2078 = vmul.f32 %v2062, 0.5
        %v2079 = vmul.f32 %v2063, 0.5
        %v2080 = vmul.f32 %v2064, 0.5
        %v2081 = vmul.f32 %v2065, 0.5
        %v2082 = vmul.f32 %v2066, 0.5
        %v2083 = vmul.f32 %v2067, 0.5
        %v2084 = vmul.f32 %v2068, 0.5
        %v2085 = vmul.f32 %v2069, 0.5
        %v2086 = vmul.f32 %v2070, 0.5
        %v2087 = vmul.f32 %v2071, 0.5
        %v2088 = vmul.f32 %v2072, 0.5
        %v2089 = vmul.f32 %v2073, 0.5
        %v2090 = vmul.f32 %v1884, %v2074
        %v2091 = vmul.f32 %v1889, %v2075
        %v2092 = vmul.f32 %v1894, %v2076
        %v2093 = vmul.f32 %v1899, %v2077
        %v2094 = vmul.f32 %v1904, %v2078
        %v2095 = vmul.f32 %v1909, %v2079
        %v2096 = vmul.f32 %v1914, %v2080
        %v2097 = vmul.f32 %v1919, %v2081
        %v2098 = vmul.f32 %v1924, %v2082
        %v2099 = vmul.f32 %v1929, %v2083
        %v2100 = vmul.f32 %v1934, %v2084
        %v2101 = vmul.f32 %v1939, %v2085
        %v2102 = vmul.f32 %v1944, %v2086
        %v2103 = vmul.f32 %v1949, %v2087
        %v2104 = vmul.f32 %v1954, %v2088
        %v2105 = vmul.f32 %v1959, %v2089
        %v2106 = vld [vmem:[%s5] sm:$0xff]
        %v2107 = vld [vmem:[%s5 + $0x8] sm:$0xff]
        %v2108 = vld [vmem:[%s5 + $0x10] sm:$0xff]
        %v2109 = vld [vmem:[%s5 + $0x18] sm:$0xff]
        %v2110 = vld [vmem:[%s5 + $0x20] sm:$0xff]
        %v2111 = vld [vmem:[%s5 + $0x28] sm:$0xff]
        %v2112 = vld [vmem:[%s5 + $0x30] sm:$0xff]
        %v2113 = vld [vmem:[%s5 + $0x38] sm:$0xff]
        %v2114 = vld [vmem:[%s5 + $0x40] sm:$0xff]
        %v2115 = vld [vmem:[%s5 + $0x48] sm:$0xff]
        %v2116 = vld [vmem:[%s5 + $0x50] sm:$0xff]
        %v2117 = vld [vmem:[%s5 + $0x58] sm:$0xff]
        %v2118 = vld [vmem:[%s5 + $0x60] sm:$0xff]
        %v2119 = vld [vmem:[%s5 + $0x68] sm:$0xff]
        %v2120 = vld [vmem:[%s5 + $0x70] sm:$0xff]
        %v2121 = vld [vmem:[%s5 + $0x78] sm:$0xff]
        %v2122 = vld [vmem:[%s6] sm:$0xff]
        %v2123 = vld [vmem:[%s6 + $0x8] sm:$0xff]
        %v2124 = vld [vmem:[%s6 + $0x10] sm:$0xff]
        %v2125 = vld [vmem:[%s6 + $0x18] sm:$0xff]
        %v2126 = vld [vmem:[%s6 + $0x20] sm:$0xff]
        %v2127 = vld [vmem:[%s6 + $0x28] sm:$0xff]
        %v2128 = vld [vmem:[%s6 + $0x30] sm:$0xff]
        %v2129 = vld [vmem:[%s6 + $0x38] sm:$0xff]
        %v2130 = vld [vmem:[%s6 + $0x40] sm:$0xff]
        %v2131 = vld [vmem:[%s6 + $0x48] sm:$0xff]
        %v2132 = vld [vmem:[%s6 + $0x50] sm:$0xff]
        %v2133 = vld [vmem:[%s6 + $0x58] sm:$0xff]
        %v2134 = vld [vmem:[%s6 + $0x60] sm:$0xff]
        %v2135 = vld [vmem:[%s6 + $0x68] sm:$0xff]
        %v2136 = vld [vmem:[%s6 + $0x70] sm:$0xff]
        %v2137 = vld [vmem:[%s6 + $0x78] sm:$0xff]
        %2139 = vset.pattern.permute.xlu0 0
        %2140 = vperm.xlu0 %2139, %v2122
        %v2141 = vpop.permute.xlu0 %2140
        %2144 = vset.pattern.permute.xlu0 0
        %2145 = vperm.xlu0 %2144, %v2123
        %v2146 = vpop.permute.xlu0 %2145
        %2149 = vset.pattern.permute.xlu0 0
        %2150 = vperm.xlu0 %2149, %v2124
        %v2151 = vpop.permute.xlu0 %2150
        %2154 = vset.pattern.permute.xlu0 0
        %2155 = vperm.xlu0 %2154, %v2125
        %v2156 = vpop.permute.xlu0 %2155
        %2159 = vset.pattern.permute.xlu0 0
        %2160 = vperm.xlu0 %2159, %v2126
        %v2161 = vpop.permute.xlu0 %2160
        %2164 = vset.pattern.permute.xlu0 0
        %2165 = vperm.xlu0 %2164, %v2127
        %v2166 = vpop.permute.xlu0 %2165
        %2169 = vset.pattern.permute.xlu0 0
        %2170 = vperm.xlu0 %2169, %v2128
        %v2171 = vpop.permute.xlu0 %2170
        %2174 = vset.pattern.permute.xlu0 0
        %2175 = vperm.xlu0 %2174, %v2129
        %v2176 = vpop.permute.xlu0 %2175
        %2179 = vset.pattern.permute.xlu0 0
        %2180 = vperm.xlu0 %2179, %v2130
        %v2181 = vpop.permute.xlu0 %2180
        %2184 = vset.pattern.permute.xlu0 0
        %2185 = vperm.xlu0 %2184, %v2131
        %v2186 = vpop.permute.xlu0 %2185
        %2189 = vset.pattern.permute.xlu0 0
        %2190 = vperm.xlu0 %2189, %v2132
        %v2191 = vpop.permute.xlu0 %2190
        %2194 = vset.pattern.permute.xlu0 0
        %2195 = vperm.xlu0 %2194, %v2133
        %v2196 = vpop.permute.xlu0 %2195
        %2199 = vset.pattern.permute.xlu0 0
        %2200 = vperm.xlu0 %2199, %v2134
        %v2201 = vpop.permute.xlu0 %2200
        %2204 = vset.pattern.permute.xlu0 0
        %2205 = vperm.xlu0 %2204, %v2135
        %v2206 = vpop.permute.xlu0 %2205
        %2209 = vset.pattern.permute.xlu0 0
        %2210 = vperm.xlu0 %2209, %v2136
        %v2211 = vpop.permute.xlu0 %2210
        %2214 = vset.pattern.permute.xlu0 0
        %2215 = vperm.xlu0 %2214, %v2137
        %v2216 = vpop.permute.xlu0 %2215
        %2218 = vmatprep.subr.mxu0 0.0
        %2219 = vmatpush1.msra.mxu0 %v2105
        %2220 = vmatprep.subr.mxu0 0.0
        %2221 = vmatpush1.msra.mxu0 %v2104
        %2222 = vmatprep.subr.mxu0 0.0
        %2223 = vmatpush1.msra.mxu0 %v2103
        %2224 = vmatprep.subr.mxu0 0.0
        %2225 = vmatpush1.msra.mxu0 %v2102
        %2226 = vmatprep.subr.mxu0 0.0
        %2227 = vmatpush1.msra.mxu0 %v2101
        %2228 = vmatprep.subr.mxu0 0.0
        %2229 = vmatpush1.msra.mxu0 %v2100
        %2230 = vmatprep.subr.mxu0 0.0
        %2231 = vmatpush1.msra.mxu0 %v2099
        %2232 = vmatprep.subr.mxu0 0.0
        %2233 = vmatpush1.msra.mxu0 %v2098
        %2234 = vmatprep.subr.mxu0 0.0
        %2235 = vmatpush1.msra.mxu0 %v2097
        %2236 = vmatprep.subr.mxu0 0.0
        %2237 = vmatpush1.msra.mxu0 %v2096
        %2238 = vmatprep.subr.mxu0 0.0
        %2239 = vmatpush1.msra.mxu0 %v2095
        %2240 = vmatprep.subr.mxu0 0.0
        %2241 = vmatpush1.msra.mxu0 %v2094
        %2242 = vmatprep.subr.mxu0 0.0
        %2243 = vmatpush1.msra.mxu0 %v2093
        %2244 = vmatprep.subr.mxu0 0.0
        %2245 = vmatpush1.msra.mxu0 %v2092
        %2246 = vmatprep.subr.mxu0 0.0
        %2247 = vmatpush1.msra.mxu0 %v2091
        %2248 = vmatprep.subr.mxu0 0.0
        %2249 = vmatpush1.msra.mxu0 %v2090
        %2250 = vmatprep.subr.mxu0 0.0
        %2251 = vmatpush2.msra.mxu0 0.0
        %2252 = vmatprep.subr.mxu0 0.0
        %2253 = vmatpush2.msra.mxu0 0.0
        %2254 = vmatprep.subr.mxu0 0.0
        %2255 = vmatpush2.msra.mxu0 0.0
        %2256 = vmatprep.subr.mxu0 0.0
        %2257 = vmatpush2.msra.mxu0 0.0
        %2258 = vmatprep.subr.mxu0 0.0
        %2259 = vmatpush2.msra.mxu0 0.0
        %2260 = vmatprep.subr.mxu0 0.0
        %2261 = vmatpush2.msra.mxu0 0.0
        %2262 = vmatprep.subr.mxu0 0.0
        %2263 = vmatpush2.msra.mxu0 0.0
        %2264 = vmatprep.subr.mxu0 0.0
        %2265 = vmatpush2.msra.mxu0 0.0
        %2266 = vmatprep.subr.mxu0 0.0
        %2267 = vmatpush2.msra.mxu0 0.0
        %2268 = vmatprep.subr.mxu0 0.0
        %2269 = vmatpush2.msra.mxu0 0.0
        %2270 = vmatprep.subr.mxu0 0.0
        %2271 = vmatpush2.msra.mxu0 0.0
        %2272 = vmatprep.subr.mxu0 0.0
        %2273 = vmatpush2.msra.mxu0 0.0
        %2274 = vmatprep.subr.mxu0 0.0
        %2275 = vmatpush2.msra.mxu0 0.0
        %2276 = vmatprep.subr.mxu0 0.0
        %2277 = vmatpush2.msra.mxu0 0.0
        %2278 = vmatprep.subr.mxu0 0.0
        %2279 = vmatpush2.msra.mxu0 0.0
        %2280 = vmatprep.subr.mxu0 0.0
        %2281 = vmatpush2.msra.mxu0 0.0
        %2282 = vmatprep.mubr.f32.mxu0 0.0
        %2283 = vmatmul.mubr.f32.gmra.mxu0 %v2106
        %v2284 = vpop.f32.mrf.mxu0
        %v2285 = vadd.f32 %v2141, %v2284
        %v2286 = vpop.f32.mrf.mxu0
        %2287 = vmatprep.mubr.f32.mxu0 0.0
        %2288 = vmatmul.mubr.f32.gmra.mxu0 %v2107
        %v2289 = vpop.f32.mrf.mxu0
        %v2290 = vadd.f32 %v2146, %v2289
        %v2291 = vpop.f32.mrf.mxu0
        %2292 = vmatprep.mubr.f32.mxu0 0.0
        %2293 = vmatmul.mubr.f32.gmra.mxu0 %v2108
        %v2294 = vpop.f32.mrf.mxu0
        %v2295 = vadd.f32 %v2151, %v2294
        %v2296 = vpop.f32.mrf.mxu0
        %2297 = vmatprep.mubr.f32.mxu0 0.0
        %2298 = vmatmul.mubr.f32.gmra.mxu0 %v2109
        %v2299 = vpop.f32.mrf.mxu0
        %v2300 = vadd.f32 %v2156, %v2299
        %v2301 = vpop.f32.mrf.mxu0
        %2302 = vmatprep.mubr.f32.mxu0 0.0
        %2303 = vmatmul.mubr.f32.gmra.mxu0 %v2110
        %v2304 = vpop.f32.mrf.mxu0
        %v2305 = vadd.f32 %v2161, %v2304
        %v2306 = vpop.f32.mrf.mxu0
        %2307 = vmatprep.mubr.f32.mxu0 0.0
        %2308 = vmatmul.mubr.f32.gmra.mxu0 %v2111
        %v2309 = vpop.f32.mrf.mxu0
        %v2310 = vadd.f32 %v2166, %v2309
        %v2311 = vpop.f32.mrf.mxu0
        %2312 = vmatprep.mubr.f32.mxu0 0.0
        %2313 = vmatmul.mubr.f32.gmra.mxu0 %v2112
        %v2314 = vpop.f32.mrf.mxu0
        %v2315 = vadd.f32 %v2171, %v2314
        %v2316 = vpop.f32.mrf.mxu0
        %2317 = vmatprep.mubr.f32.mxu0 0.0
        %2318 = vmatmul.mubr.f32.gmra.mxu0 %v2113
        %v2319 = vpop.f32.mrf.mxu0
        %v2320 = vadd.f32 %v2176, %v2319
        %v2321 = vpop.f32.mrf.mxu0
        %2322 = vmatprep.mubr.f32.mxu0 0.0
        %2323 = vmatmul.mubr.f32.gmra.mxu0 %v2114
        %v2324 = vpop.f32.mrf.mxu0
        %v2325 = vadd.f32 %v2181, %v2324
        %v2326 = vpop.f32.mrf.mxu0
        %2327 = vmatprep.mubr.f32.mxu0 0.0
        %2328 = vmatmul.mubr.f32.gmra.mxu0 %v2115
        %v2329 = vpop.f32.mrf.mxu0
        %v2330 = vadd.f32 %v2186, %v2329
        %v2331 = vpop.f32.mrf.mxu0
        %2332 = vmatprep.mubr.f32.mxu0 0.0
        %2333 = vmatmul.mubr.f32.gmra.mxu0 %v2116
        %v2334 = vpop.f32.mrf.mxu0
        %v2335 = vadd.f32 %v2191, %v2334
        %v2336 = vpop.f32.mrf.mxu0
        %2337 = vmatprep.mubr.f32.mxu0 0.0
        %2338 = vmatmul.mubr.f32.gmra.mxu0 %v2117
        %v2339 = vpop.f32.mrf.mxu0
        %v2340 = vadd.f32 %v2196, %v2339
        %v2341 = vpop.f32.mrf.mxu0
        %2342 = vmatprep.mubr.f32.mxu0 0.0
        %2343 = vmatmul.mubr.f32.gmra.mxu0 %v2118
        %v2344 = vpop.f32.mrf.mxu0
        %v2345 = vadd.f32 %v2201, %v2344
        %v2346 = vpop.f32.mrf.mxu0
        %2347 = vmatprep.mubr.f32.mxu0 0.0
        %2348 = vmatmul.mubr.f32.gmra.mxu0 %v2119
        %v2349 = vpop.f32.mrf.mxu0
        %v2350 = vadd.f32 %v2206, %v2349
        %v2351 = vpop.f32.mrf.mxu0
        %2352 = vmatprep.mubr.f32.mxu0 0.0
        %2353 = vmatmul.mubr.f32.gmra.mxu0 %v2120
        %v2354 = vpop.f32.mrf.mxu0
        %v2355 = vadd.f32 %v2211, %v2354
        %v2356 = vpop.f32.mrf.mxu0
        %2357 = vmatprep.mubr.f32.mxu0 0.0
        %2358 = vmatmul.mubr.f32.gmra.mxu0 %v2121
        %v2359 = vpop.f32.mrf.mxu0
        %v2360 = vadd.f32 %v2216, %v2359
        %v2361 = vpop.f32.mrf.mxu0
        %2362 = vdwg.mxu0
        %vm2363 = vcmask 15360
        %2364 = vst.msk [vmem:[%s7] sm:$0xff] %vm2363, %v2285
        %2365 = vst.msk [vmem:[%s7 + $0x8] sm:$0xff] %vm2363, %v2290
        %2366 = vst.msk [vmem:[%s7 + $0x10] sm:$0xff] %vm2363, %v2295
        %2367 = vst.msk [vmem:[%s7 + $0x18] sm:$0xff] %vm2363, %v2300
        %2368 = vst.msk [vmem:[%s7 + $0x20] sm:$0xff] %vm2363, %v2305
        %2369 = vst.msk [vmem:[%s7 + $0x28] sm:$0xff] %vm2363, %v2310
        %2370 = vst.msk [vmem:[%s7 + $0x30] sm:$0xff] %vm2363, %v2315
        %2371 = vst.msk [vmem:[%s7 + $0x38] sm:$0xff] %vm2363, %v2320
        %2372 = vst.msk [vmem:[%s7 + $0x40] sm:$0xff] %vm2363, %v2325
        %2373 = vst.msk [vmem:[%s7 + $0x48] sm:$0xff] %vm2363, %v2330
        %2374 = vst.msk [vmem:[%s7 + $0x50] sm:$0xff] %vm2363, %v2335
        %2375 = vst.msk [vmem:[%s7 + $0x58] sm:$0xff] %vm2363, %v2340
        %2376 = vst.msk [vmem:[%s7 + $0x60] sm:$0xff] %vm2363, %v2345
        %2377 = vst.msk [vmem:[%s7 + $0x68] sm:$0xff] %vm2363, %v2350
        %2378 = vst.msk [vmem:[%s7 + $0x70] sm:$0xff] %vm2363, %v2355
        %2379 = vst.msk [vmem:[%s7 + $0x78] sm:$0xff] %vm2363, %v2360
        %v2380 = vld [vmem:[%s1359] sm:$0xff]
        %v2381 = vld [vmem:[%s1359 + $0x8] sm:$0xff]
        %v2382 = vld [vmem:[%s1359 + $0x10] sm:$0xff]
        %v2383 = vld [vmem:[%s1359 + $0x18] sm:$0xff]
        %v2384 = vld [vmem:[%s1359 + $0x20] sm:$0xff]
        %v2385 = vld [vmem:[%s1359 + $0x28] sm:$0xff]
        %v2386 = vld [vmem:[%s1359 + $0x30] sm:$0xff]
        %v2387 = vld [vmem:[%s1359 + $0x38] sm:$0xff]
        %v2388 = vld [vmem:[%s1359 + $0x40] sm:$0xff]
        %v2389 = vld [vmem:[%s1359 + $0x48] sm:$0xff]
        %v2390 = vld [vmem:[%s1359 + $0x50] sm:$0xff]
        %v2391 = vld [vmem:[%s1359 + $0x58] sm:$0xff]
        %v2392 = vld [vmem:[%s1359 + $0x60] sm:$0xff]
        %v2393 = vld [vmem:[%s1359 + $0x68] sm:$0xff]
        %v2394 = vld [vmem:[%s1359 + $0x70] sm:$0xff]
        %v2395 = vld [vmem:[%s1359 + $0x78] sm:$0xff]
        %v2396 = vmul.f32 %v2380, 0.00390625
        %v2397 = vmul.f32 %v2381, 0.00390625
        %v2398 = vmul.f32 %v2382, 0.00390625
        %v2399 = vmul.f32 %v2383, 0.00390625
        %v2400 = vmul.f32 %v2384, 0.00390625
        %v2401 = vmul.f32 %v2385, 0.00390625
        %v2402 = vmul.f32 %v2386, 0.00390625
        %v2403 = vmul.f32 %v2387, 0.00390625
        %v2404 = vmul.f32 %v2388, 0.00390625
        %v2405 = vmul.f32 %v2389, 0.00390625
        %v2406 = vmul.f32 %v2390, 0.00390625
        %v2407 = vmul.f32 %v2391, 0.00390625
        %v2408 = vmul.f32 %v2392, 0.00390625
        %v2409 = vmul.f32 %v2393, 0.00390625
        %v2410 = vmul.f32 %v2394, 0.00390625
        %v2411 = vmul.f32 %v2395, 0.00390625
        %s2412 = scalar_lea.vmem %s3, 128
        %v2413 = vld [vmem:[%s2412] sm:$0xff]
        %v2414 = vld [vmem:[%s2412 + $0x8] sm:$0xff]
        %v2415 = vld [vmem:[%s2412 + $0x10] sm:$0xff]
        %v2416 = vld [vmem:[%s2412 + $0x18] sm:$0xff]
        %v2417 = vld [vmem:[%s2412 + $0x20] sm:$0xff]
        %v2418 = vld [vmem:[%s2412 + $0x28] sm:$0xff]
        %v2419 = vld [vmem:[%s2412 + $0x30] sm:$0xff]
        %v2420 = vld [vmem:[%s2412 + $0x38] sm:$0xff]
        %v2421 = vld [vmem:[%s2412 + $0x40] sm:$0xff]
        %v2422 = vld [vmem:[%s2412 + $0x48] sm:$0xff]
        %v2423 = vld [vmem:[%s2412 + $0x50] sm:$0xff]
        %v2424 = vld [vmem:[%s2412 + $0x58] sm:$0xff]
        %v2425 = vld [vmem:[%s2412 + $0x60] sm:$0xff]
        %v2426 = vld [vmem:[%s2412 + $0x68] sm:$0xff]
        %v2427 = vld [vmem:[%s2412 + $0x70] sm:$0xff]
        %v2428 = vld [vmem:[%s2412 + $0x78] sm:$0xff]
        %s2429 = scalar_lea.vmem %s4, 128
        %v2430 = vld [vmem:[%s2429] sm:$0xff]
        %v2431 = vld [vmem:[%s2429 + $0x8] sm:$0xff]
        %v2432 = vld [vmem:[%s2429 + $0x10] sm:$0xff]
        %v2433 = vld [vmem:[%s2429 + $0x18] sm:$0xff]
        %v2434 = vld [vmem:[%s2429 + $0x20] sm:$0xff]
        %v2435 = vld [vmem:[%s2429 + $0x28] sm:$0xff]
        %v2436 = vld [vmem:[%s2429 + $0x30] sm:$0xff]
        %v2437 = vld [vmem:[%s2429 + $0x38] sm:$0xff]
        %v2438 = vld [vmem:[%s2429 + $0x40] sm:$0xff]
        %v2439 = vld [vmem:[%s2429 + $0x48] sm:$0xff]
        %v2440 = vld [vmem:[%s2429 + $0x50] sm:$0xff]
        %v2441 = vld [vmem:[%s2429 + $0x58] sm:$0xff]
        %v2442 = vld [vmem:[%s2429 + $0x60] sm:$0xff]
        %v2443 = vld [vmem:[%s2429 + $0x68] sm:$0xff]
        %v2444 = vld [vmem:[%s2429 + $0x70] sm:$0xff]
        %v2445 = vld [vmem:[%s2429 + $0x78] sm:$0xff]
        %2447 = vset.pattern.permute.xlu0 0
        %2448 = vperm.xlu0 %2447, %v2430
        %v2449 = vpop.permute.xlu0 %2448
        %2452 = vset.pattern.permute.xlu0 0
        %2453 = vperm.xlu0 %2452, %v2431
        %v2454 = vpop.permute.xlu0 %2453
        %2457 = vset.pattern.permute.xlu0 0
        %2458 = vperm.xlu0 %2457, %v2432
        %v2459 = vpop.permute.xlu0 %2458
        %2462 = vset.pattern.permute.xlu0 0
        %2463 = vperm.xlu0 %2462, %v2433
        %v2464 = vpop.permute.xlu0 %2463
        %2467 = vset.pattern.permute.xlu0 0
        %2468 = vperm.xlu0 %2467, %v2434
        %v2469 = vpop.permute.xlu0 %2468
        %2472 = vset.pattern.permute.xlu0 0
        %2473 = vperm.xlu0 %2472, %v2435
        %v2474 = vpop.permute.xlu0 %2473
        %2477 = vset.pattern.permute.xlu0 0
        %2478 = vperm.xlu0 %2477, %v2436
        %v2479 = vpop.permute.xlu0 %2478
        %2482 = vset.pattern.permute.xlu0 0
        %2483 = vperm.xlu0 %2482, %v2437
        %v2484 = vpop.permute.xlu0 %2483
        %2487 = vset.pattern.permute.xlu0 0
        %2488 = vperm.xlu0 %2487, %v2438
        %v2489 = vpop.permute.xlu0 %2488
        %2492 = vset.pattern.permute.xlu0 0
        %2493 = vperm.xlu0 %2492, %v2439
        %v2494 = vpop.permute.xlu0 %2493
        %2497 = vset.pattern.permute.xlu0 0
        %2498 = vperm.xlu0 %2497, %v2440
        %v2499 = vpop.permute.xlu0 %2498
        %2502 = vset.pattern.permute.xlu0 0
        %2503 = vperm.xlu0 %2502, %v2441
        %v2504 = vpop.permute.xlu0 %2503
        %2507 = vset.pattern.permute.xlu0 0
        %2508 = vperm.xlu0 %2507, %v2442
        %v2509 = vpop.permute.xlu0 %2508
        %2512 = vset.pattern.permute.xlu0 0
        %2513 = vperm.xlu0 %2512, %v2443
        %v2514 = vpop.permute.xlu0 %2513
        %2517 = vset.pattern.permute.xlu0 0
        %2518 = vperm.xlu0 %2517, %v2444
        %v2519 = vpop.permute.xlu0 %2518
        %2522 = vset.pattern.permute.xlu0 0
        %2523 = vperm.xlu0 %2522, %v2445
        %v2524 = vpop.permute.xlu0 %2523
        %2526 = vmatprep.subr.mxu0 0.0
        %2527 = vmatpush1.msra.mxu0 %v2411
        %2528 = vmatprep.subr.mxu0 0.0
        %2529 = vmatpush1.msra.mxu0 %v2410
        %2530 = vmatprep.subr.mxu0 0.0
        %2531 = vmatpush1.msra.mxu0 %v2409
        %2532 = vmatprep.subr.mxu0 0.0
        %2533 = vmatpush1.msra.mxu0 %v2408
        %2534 = vmatprep.subr.mxu0 0.0
        %2535 = vmatpush1.msra.mxu0 %v2407
        %2536 = vmatprep.subr.mxu0 0.0
        %2537 = vmatpush1.msra.mxu0 %v2406
        %2538 = vmatprep.subr.mxu0 0.0
        %2539 = vmatpush1.msra.mxu0 %v2405
        %2540 = vmatprep.subr.mxu0 0.0
        %2541 = vmatpush1.msra.mxu0 %v2404
        %2542 = vmatprep.subr.mxu0 0.0
        %2543 = vmatpush1.msra.mxu0 %v2403
        %2544 = vmatprep.subr.mxu0 0.0
        %2545 = vmatpush1.msra.mxu0 %v2402
        %2546 = vmatprep.subr.mxu0 0.0
        %2547 = vmatpush1.msra.mxu0 %v2401
        %2548 = vmatprep.subr.mxu0 0.0
        %2549 = vmatpush1.msra.mxu0 %v2400
        %2550 = vmatprep.subr.mxu0 0.0
        %2551 = vmatpush1.msra.mxu0 %v2399
        %2552 = vmatprep.subr.mxu0 0.0
        %2553 = vmatpush1.msra.mxu0 %v2398
        %2554 = vmatprep.subr.mxu0 0.0
        %2555 = vmatpush1.msra.mxu0 %v2397
        %2556 = vmatprep.subr.mxu0 0.0
        %2557 = vmatpush1.msra.mxu0 %v2396
        %2558 = vmatprep.subr.mxu0 0.0
        %2559 = vmatpush2.msra.mxu0 0.0
        %2560 = vmatprep.subr.mxu0 0.0
        %2561 = vmatpush2.msra.mxu0 0.0
        %2562 = vmatprep.subr.mxu0 0.0
        %2563 = vmatpush2.msra.mxu0 0.0
        %2564 = vmatprep.subr.mxu0 0.0
        %2565 = vmatpush2.msra.mxu0 0.0
        %2566 = vmatprep.subr.mxu0 0.0
        %2567 = vmatpush2.msra.mxu0 0.0
        %2568 = vmatprep.subr.mxu0 0.0
        %2569 = vmatpush2.msra.mxu0 0.0
        %2570 = vmatprep.subr.mxu0 0.0
        %2571 = vmatpush2.msra.mxu0 0.0
        %2572 = vmatprep.subr.mxu0 0.0
        %2573 = vmatpush2.msra.mxu0 0.0
        %2574 = vmatprep.subr.mxu0 0.0
        %2575 = vmatpush2.msra.mxu0 0.0
        %2576 = vmatprep.subr.mxu0 0.0
        %2577 = vmatpush2.msra.mxu0 0.0
        %2578 = vmatprep.subr.mxu0 0.0
        %2579 = vmatpush2.msra.mxu0 0.0
        %2580 = vmatprep.subr.mxu0 0.0
        %2581 = vmatpush2.msra.mxu0 0.0
        %2582 = vmatprep.subr.mxu0 0.0
        %2583 = vmatpush2.msra.mxu0 0.0
        %2584 = vmatprep.subr.mxu0 0.0
        %2585 = vmatpush2.msra.mxu0 0.0
        %2586 = vmatprep.subr.mxu0 0.0
        %2587 = vmatpush2.msra.mxu0 0.0
        %2588 = vmatprep.subr.mxu0 0.0
        %2589 = vmatpush2.msra.mxu0 0.0
        %2590 = vmatprep.mubr.f32.mxu0 0.0
        %2591 = vmatmul.mubr.f32.gmra.mxu0 %v2413
        %v2592 = vpop.f32.mrf.mxu0
        %v2593 = vadd.f32 %v2449, %v2592
        %v2594 = vpop.f32.mrf.mxu0
        %2595 = vmatprep.mubr.f32.mxu0 0.0
        %2596 = vmatmul.mubr.f32.gmra.mxu0 %v2414
        %v2597 = vpop.f32.mrf.mxu0
        %v2598 = vadd.f32 %v2454, %v2597
        %v2599 = vpop.f32.mrf.mxu0
        %2600 = vmatprep.mubr.f32.mxu0 0.0
        %2601 = vmatmul.mubr.f32.gmra.mxu0 %v2415
        %v2602 = vpop.f32.mrf.mxu0
        %v2603 = vadd.f32 %v2459, %v2602
        %v2604 = vpop.f32.mrf.mxu0
        %2605 = vmatprep.mubr.f32.mxu0 0.0
        %2606 = vmatmul.mubr.f32.gmra.mxu0 %v2416
        %v2607 = vpop.f32.mrf.mxu0
        %v2608 = vadd.f32 %v2464, %v2607
        %v2609 = vpop.f32.mrf.mxu0
        %2610 = vmatprep.mubr.f32.mxu0 0.0
        %2611 = vmatmul.mubr.f32.gmra.mxu0 %v2417
        %v2612 = vpop.f32.mrf.mxu0
        %v2613 = vadd.f32 %v2469, %v2612
        %v2614 = vpop.f32.mrf.mxu0
        %2615 = vmatprep.mubr.f32.mxu0 0.0
        %2616 = vmatmul.mubr.f32.gmra.mxu0 %v2418
        %v2617 = vpop.f32.mrf.mxu0
        %v2618 = vadd.f32 %v2474, %v2617
        %v2619 = vpop.f32.mrf.mxu0
        %2620 = vmatprep.mubr.f32.mxu0 0.0
        %2621 = vmatmul.mubr.f32.gmra.mxu0 %v2419
        %v2622 = vpop.f32.mrf.mxu0
        %v2623 = vadd.f32 %v2479, %v2622
        %v2624 = vpop.f32.mrf.mxu0
        %2625 = vmatprep.mubr.f32.mxu0 0.0
        %2626 = vmatmul.mubr.f32.gmra.mxu0 %v2420
        %v2627 = vpop.f32.mrf.mxu0
        %v2628 = vadd.f32 %v2484, %v2627
        %v2629 = vpop.f32.mrf.mxu0
        %2630 = vmatprep.mubr.f32.mxu0 0.0
        %2631 = vmatmul.mubr.f32.gmra.mxu0 %v2421
        %v2632 = vpop.f32.mrf.mxu0
        %v2633 = vadd.f32 %v2489, %v2632
        %v2634 = vpop.f32.mrf.mxu0
        %2635 = vmatprep.mubr.f32.mxu0 0.0
        %2636 = vmatmul.mubr.f32.gmra.mxu0 %v2422
        %v2637 = vpop.f32.mrf.mxu0
        %v2638 = vadd.f32 %v2494, %v2637
        %v2639 = vpop.f32.mrf.mxu0
        %2640 = vmatprep.mubr.f32.mxu0 0.0
        %2641 = vmatmul.mubr.f32.gmra.mxu0 %v2423
        %v2642 = vpop.f32.mrf.mxu0
        %v2643 = vadd.f32 %v2499, %v2642
        %v2644 = vpop.f32.mrf.mxu0
        %2645 = vmatprep.mubr.f32.mxu0 0.0
        %2646 = vmatmul.mubr.f32.gmra.mxu0 %v2424
        %v2647 = vpop.f32.mrf.mxu0
        %v2648 = vadd.f32 %v2504, %v2647
        %v2649 = vpop.f32.mrf.mxu0
        %2650 = vmatprep.mubr.f32.mxu0 0.0
        %2651 = vmatmul.mubr.f32.gmra.mxu0 %v2425
        %v2652 = vpop.f32.mrf.mxu0
        %v2653 = vadd.f32 %v2509, %v2652
        %v2654 = vpop.f32.mrf.mxu0
        %2655 = vmatprep.mubr.f32.mxu0 0.0
        %2656 = vmatmul.mubr.f32.gmra.mxu0 %v2426
        %v2657 = vpop.f32.mrf.mxu0
        %v2658 = vadd.f32 %v2514, %v2657
        %v2659 = vpop.f32.mrf.mxu0
        %2660 = vmatprep.mubr.f32.mxu0 0.0
        %2661 = vmatmul.mubr.f32.gmra.mxu0 %v2427
        %v2662 = vpop.f32.mrf.mxu0
        %v2663 = vadd.f32 %v2519, %v2662
        %v2664 = vpop.f32.mrf.mxu0
        %2665 = vmatprep.mubr.f32.mxu0 0.0
        %2666 = vmatmul.mubr.f32.gmra.mxu0 %v2428
        %v2667 = vpop.f32.mrf.mxu0
        %v2668 = vadd.f32 %v2524, %v2667
        %v2669 = vpop.f32.mrf.mxu0
        %2670 = vdwg.mxu0
        %v2671 = vmul.f32 %v2593, %v2593
        %v2672 = vmul.f32 %v2598, %v2598
        %v2673 = vmul.f32 %v2603, %v2603
        %v2674 = vmul.f32 %v2608, %v2608
        %v2675 = vmul.f32 %v2613, %v2613
        %v2676 = vmul.f32 %v2618, %v2618
        %v2677 = vmul.f32 %v2623, %v2623
        %v2678 = vmul.f32 %v2628, %v2628
        %v2679 = vmul.f32 %v2633, %v2633
        %v2680 = vmul.f32 %v2638, %v2638
        %v2681 = vmul.f32 %v2643, %v2643
        %v2682 = vmul.f32 %v2648, %v2648
        %v2683 = vmul.f32 %v2653, %v2653
        %v2684 = vmul.f32 %v2658, %v2658
        %v2685 = vmul.f32 %v2663, %v2663
        %v2686 = vmul.f32 %v2668, %v2668
        %v2687 = vmul.f32 %v2593, %v2671
        %v2688 = vmul.f32 %v2598, %v2672
        %v2689 = vmul.f32 %v2603, %v2673
        %v2690 = vmul.f32 %v2608, %v2674
        %v2691 = vmul.f32 %v2613, %v2675
        %v2692 = vmul.f32 %v2618, %v2676
        %v2693 = vmul.f32 %v2623, %v2677
        %v2694 = vmul.f32 %v2628, %v2678
        %v2695 = vmul.f32 %v2633, %v2679
        %v2696 = vmul.f32 %v2638, %v2680
        %v2697 = vmul.f32 %v2643, %v2681
        %v2698 = vmul.f32 %v2648, %v2682
        %v2699 = vmul.f32 %v2653, %v2683
        %v2700 = vmul.f32 %v2658, %v2684
        %v2701 = vmul.f32 %v2663, %v2685
        %v2702 = vmul.f32 %v2668, %v2686
        %v2703 = vmul.f32 %v2687, 0.044715
        %v2704 = vmul.f32 %v2688, 0.044715
        %v2705 = vmul.f32 %v2689, 0.044715
        %v2706 = vmul.f32 %v2690, 0.044715
        %v2707 = vmul.f32 %v2691, 0.044715
        %v2708 = vmul.f32 %v2692, 0.044715
        %v2709 = vmul.f32 %v2693, 0.044715
        %v2710 = vmul.f32 %v2694, 0.044715
        %v2711 = vmul.f32 %v2695, 0.044715
        %v2712 = vmul.f32 %v2696, 0.044715
        %v2713 = vmul.f32 %v2697, 0.044715
        %v2714 = vmul.f32 %v2698, 0.044715
        %v2715 = vmul.f32 %v2699, 0.044715
        %v2716 = vmul.f32 %v2700, 0.044715
        %v2717 = vmul.f32 %v2701, 0.044715
        %v2718 = vmul.f32 %v2702, 0.044715
        %v2719 = vadd.f32 %v2593, %v2703
        %v2720 = vadd.f32 %v2598, %v2704
        %v2721 = vadd.f32 %v2603, %v2705
        %v2722 = vadd.f32 %v2608, %v2706
        %v2723 = vadd.f32 %v2613, %v2707
        %v2724 = vadd.f32 %v2618, %v2708
        %v2725 = vadd.f32 %v2623, %v2709
        %v2726 = vadd.f32 %v2628, %v2710
        %v2727 = vadd.f32 %v2633, %v2711
        %v2728 = vadd.f32 %v2638, %v2712
        %v2729 = vadd.f32 %v2643, %v2713
        %v2730 = vadd.f32 %v2648, %v2714
        %v2731 = vadd.f32 %v2653, %v2715
        %v2732 = vadd.f32 %v2658, %v2716
        %v2733 = vadd.f32 %v2663, %v2717
        %v2734 = vadd.f32 %v2668, %v2718
        %v2735 = vmul.f32 %v2719, 0.7978846
        %v2736 = vmul.f32 %v2720, 0.7978846
        %v2737 = vmul.f32 %v2721, 0.7978846
        %v2738 = vmul.f32 %v2722, 0.7978846
        %v2739 = vmul.f32 %v2723, 0.7978846
        %v2740 = vmul.f32 %v2724, 0.7978846
        %v2741 = vmul.f32 %v2725, 0.7978846
        %v2742 = vmul.f32 %v2726, 0.7978846
        %v2743 = vmul.f32 %v2727, 0.7978846
        %v2744 = vmul.f32 %v2728, 0.7978846
        %v2745 = vmul.f32 %v2729, 0.7978846
        %v2746 = vmul.f32 %v2730, 0.7978846
        %v2747 = vmul.f32 %v2731, 0.7978846
        %v2748 = vmul.f32 %v2732, 0.7978846
        %v2749 = vmul.f32 %v2733, 0.7978846
        %v2750 = vmul.f32 %v2734, 0.7978846
        %v2751 = vtanh.pop %v2735
        %v2752 = vtanh.pop %v2736
        %v2753 = vtanh.pop %v2737
        %v2754 = vtanh.pop %v2738
        %v2755 = vtanh.pop %v2739
        %v2756 = vtanh.pop %v2740
        %v2757 = vtanh.pop %v2741
        %v2758 = vtanh.pop %v2742
        %v2759 = vtanh.pop %v2743
        %v2760 = vtanh.pop %v2744
        %v2761 = vtanh.pop %v2745
        %v2762 = vtanh.pop %v2746
        %v2763 = vtanh.pop %v2747
        %v2764 = vtanh.pop %v2748
        %v2765 = vtanh.pop %v2749
        %v2766 = vtanh.pop %v2750
        %v2767 = vadd.f32 %v2751, 1.0
        %v2768 = vadd.f32 %v2752, 1.0
        %v2769 = vadd.f32 %v2753, 1.0
        %v2770 = vadd.f32 %v2754, 1.0
        %v2771 = vadd.f32 %v2755, 1.0
        %v2772 = vadd.f32 %v2756, 1.0
        %v2773 = vadd.f32 %v2757, 1.0
        %v2774 = vadd.f32 %v2758, 1.0
        %v2775 = vadd.f32 %v2759, 1.0
        %v2776 = vadd.f32 %v2760, 1.0
        %v2777 = vadd.f32 %v2761, 1.0
        %v2778 = vadd.f32 %v2762, 1.0
        %v2779 = vadd.f32 %v2763, 1.0
        %v2780 = vadd.f32 %v2764, 1.0
        %v2781 = vadd.f32 %v2765, 1.0
        %v2782 = vadd.f32 %v2766, 1.0
        %v2783 = vmul.f32 %v2767, 0.5
        %v2784 = vmul.f32 %v2768, 0.5
        %v2785 = vmul.f32 %v2769, 0.5
        %v2786 = vmul.f32 %v2770, 0.5
        %v2787 = vmul.f32 %v2771, 0.5
        %v2788 = vmul.f32 %v2772, 0.5
        %v2789 = vmul.f32 %v2773, 0.5
        %v2790 = vmul.f32 %v2774, 0.5
        %v2791 = vmul.f32 %v2775, 0.5
        %v2792 = vmul.f32 %v2776, 0.5
        %v2793 = vmul.f32 %v2777, 0.5
        %v2794 = vmul.f32 %v2778, 0.5
        %v2795 = vmul.f32 %v2779, 0.5
        %v2796 = vmul.f32 %v2780, 0.5
        %v2797 = vmul.f32 %v2781, 0.5
        %v2798 = vmul.f32 %v2782, 0.5
        %v2799 = vmul.f32 %v2593, %v2783
        %v2800 = vmul.f32 %v2598, %v2784
        %v2801 = vmul.f32 %v2603, %v2785
        %v2802 = vmul.f32 %v2608, %v2786
        %v2803 = vmul.f32 %v2613, %v2787
        %v2804 = vmul.f32 %v2618, %v2788
        %v2805 = vmul.f32 %v2623, %v2789
        %v2806 = vmul.f32 %v2628, %v2790
        %v2807 = vmul.f32 %v2633, %v2791
        %v2808 = vmul.f32 %v2638, %v2792
        %v2809 = vmul.f32 %v2643, %v2793
        %v2810 = vmul.f32 %v2648, %v2794
        %v2811 = vmul.f32 %v2653, %v2795
        %v2812 = vmul.f32 %v2658, %v2796
        %v2813 = vmul.f32 %v2663, %v2797
        %v2814 = vmul.f32 %v2668, %v2798
        %s2815 = scalar_lea.vmem %s5, 128
        %v2816 = vld [vmem:[%s2815] sm:$0xff]
        %v2817 = vld [vmem:[%s2815 + $0x8] sm:$0xff]
        %v2818 = vld [vmem:[%s2815 + $0x10] sm:$0xff]
        %v2819 = vld [vmem:[%s2815 + $0x18] sm:$0xff]
        %v2820 = vld [vmem:[%s2815 + $0x20] sm:$0xff]
        %v2821 = vld [vmem:[%s2815 + $0x28] sm:$0xff]
        %v2822 = vld [vmem:[%s2815 + $0x30] sm:$0xff]
        %v2823 = vld [vmem:[%s2815 + $0x38] sm:$0xff]
        %v2824 = vld [vmem:[%s2815 + $0x40] sm:$0xff]
        %v2825 = vld [vmem:[%s2815 + $0x48] sm:$0xff]
        %v2826 = vld [vmem:[%s2815 + $0x50] sm:$0xff]
        %v2827 = vld [vmem:[%s2815 + $0x58] sm:$0xff]
        %v2828 = vld [vmem:[%s2815 + $0x60] sm:$0xff]
        %v2829 = vld [vmem:[%s2815 + $0x68] sm:$0xff]
        %v2830 = vld [vmem:[%s2815 + $0x70] sm:$0xff]
        %v2831 = vld [vmem:[%s2815 + $0x78] sm:$0xff]
        %s2832 = scalar_lea.vmem %s6, 128
        %v2833 = vld [vmem:[%s2832] sm:$0xff]
        %v2834 = vld [vmem:[%s2832 + $0x8] sm:$0xff]
        %v2835 = vld [vmem:[%s2832 + $0x10] sm:$0xff]
        %v2836 = vld [vmem:[%s2832 + $0x18] sm:$0xff]
        %v2837 = vld [vmem:[%s2832 + $0x20] sm:$0xff]
        %v2838 = vld [vmem:[%s2832 + $0x28] sm:$0xff]
        %v2839 = vld [vmem:[%s2832 + $0x30] sm:$0xff]
        %v2840 = vld [vmem:[%s2832 + $0x38] sm:$0xff]
        %v2841 = vld [vmem:[%s2832 + $0x40] sm:$0xff]
        %v2842 = vld [vmem:[%s2832 + $0x48] sm:$0xff]
        %v2843 = vld [vmem:[%s2832 + $0x50] sm:$0xff]
        %v2844 = vld [vmem:[%s2832 + $0x58] sm:$0xff]
        %v2845 = vld [vmem:[%s2832 + $0x60] sm:$0xff]
        %v2846 = vld [vmem:[%s2832 + $0x68] sm:$0xff]
        %v2847 = vld [vmem:[%s2832 + $0x70] sm:$0xff]
        %v2848 = vld [vmem:[%s2832 + $0x78] sm:$0xff]
        %2850 = vset.pattern.permute.xlu0 0
        %2851 = vperm.xlu0 %2850, %v2833
        %v2852 = vpop.permute.xlu0 %2851
        %2855 = vset.pattern.permute.xlu0 0
        %2856 = vperm.xlu0 %2855, %v2834
        %v2857 = vpop.permute.xlu0 %2856
        %2860 = vset.pattern.permute.xlu0 0
        %2861 = vperm.xlu0 %2860, %v2835
        %v2862 = vpop.permute.xlu0 %2861
        %2865 = vset.pattern.permute.xlu0 0
        %2866 = vperm.xlu0 %2865, %v2836
        %v2867 = vpop.permute.xlu0 %2866
        %2870 = vset.pattern.permute.xlu0 0
        %2871 = vperm.xlu0 %2870, %v2837
        %v2872 = vpop.permute.xlu0 %2871
        %2875 = vset.pattern.permute.xlu0 0
        %2876 = vperm.xlu0 %2875, %v2838
        %v2877 = vpop.permute.xlu0 %2876
        %2880 = vset.pattern.permute.xlu0 0
        %2881 = vperm.xlu0 %2880, %v2839
        %v2882 = vpop.permute.xlu0 %2881
        %2885 = vset.pattern.permute.xlu0 0
        %2886 = vperm.xlu0 %2885, %v2840
        %v2887 = vpop.permute.xlu0 %2886
        %2890 = vset.pattern.permute.xlu0 0
        %2891 = vperm.xlu0 %2890, %v2841
        %v2892 = vpop.permute.xlu0 %2891
        %2895 = vset.pattern.permute.xlu0 0
        %2896 = vperm.xlu0 %2895, %v2842
        %v2897 = vpop.permute.xlu0 %2896
        %2900 = vset.pattern.permute.xlu0 0
        %2901 = vperm.xlu0 %2900, %v2843
        %v2902 = vpop.permute.xlu0 %2901
        %2905 = vset.pattern.permute.xlu0 0
        %2906 = vperm.xlu0 %2905, %v2844
        %v2907 = vpop.permute.xlu0 %2906
        %2910 = vset.pattern.permute.xlu0 0
        %2911 = vperm.xlu0 %2910, %v2845
        %v2912 = vpop.permute.xlu0 %2911
        %2915 = vset.pattern.permute.xlu0 0
        %2916 = vperm.xlu0 %2915, %v2846
        %v2917 = vpop.permute.xlu0 %2916
        %2920 = vset.pattern.permute.xlu0 0
        %2921 = vperm.xlu0 %2920, %v2847
        %v2922 = vpop.permute.xlu0 %2921
        %2925 = vset.pattern.permute.xlu0 0
        %2926 = vperm.xlu0 %2925, %v2848
        %v2927 = vpop.permute.xlu0 %2926
        %2929 = vmatprep.subr.mxu0 0.0
        %2930 = vmatpush1.msra.mxu0 %v2814
        %2931 = vmatprep.subr.mxu0 0.0
        %2932 = vmatpush1.msra.mxu0 %v2813
        %2933 = vmatprep.subr.mxu0 0.0
        %2934 = vmatpush1.msra.mxu0 %v2812
        %2935 = vmatprep.subr.mxu0 0.0
        %2936 = vmatpush1.msra.mxu0 %v2811
        %2937 = vmatprep.subr.mxu0 0.0
        %2938 = vmatpush1.msra.mxu0 %v2810
        %2939 = vmatprep.subr.mxu0 0.0
        %2940 = vmatpush1.msra.mxu0 %v2809
        %2941 = vmatprep.subr.mxu0 0.0
        %2942 = vmatpush1.msra.mxu0 %v2808
        %2943 = vmatprep.subr.mxu0 0.0
        %2944 = vmatpush1.msra.mxu0 %v2807
        %2945 = vmatprep.subr.mxu0 0.0
        %2946 = vmatpush1.msra.mxu0 %v2806
        %2947 = vmatprep.subr.mxu0 0.0
        %2948 = vmatpush1.msra.mxu0 %v2805
        %2949 = vmatprep.subr.mxu0 0.0
        %2950 = vmatpush1.msra.mxu0 %v2804
        %2951 = vmatprep.subr.mxu0 0.0
        %2952 = vmatpush1.msra.mxu0 %v2803
        %2953 = vmatprep.subr.mxu0 0.0
        %2954 = vmatpush1.msra.mxu0 %v2802
        %2955 = vmatprep.subr.mxu0 0.0
        %2956 = vmatpush1.msra.mxu0 %v2801
        %2957 = vmatprep.subr.mxu0 0.0
        %2958 = vmatpush1.msra.mxu0 %v2800
        %2959 = vmatprep.subr.mxu0 0.0
        %2960 = vmatpush1.msra.mxu0 %v2799
        %2961 = vmatprep.subr.mxu0 0.0
        %2962 = vmatpush2.msra.mxu0 0.0
        %2963 = vmatprep.subr.mxu0 0.0
        %2964 = vmatpush2.msra.mxu0 0.0
        %2965 = vmatprep.subr.mxu0 0.0
        %2966 = vmatpush2.msra.mxu0 0.0
        %2967 = vmatprep.subr.mxu0 0.0
        %2968 = vmatpush2.msra.mxu0 0.0
        %2969 = vmatprep.subr.mxu0 0.0
        %2970 = vmatpush2.msra.mxu0 0.0
        %2971 = vmatprep.subr.mxu0 0.0
        %2972 = vmatpush2.msra.mxu0 0.0
        %2973 = vmatprep.subr.mxu0 0.0
        %2974 = vmatpush2.msra.mxu0 0.0
        %2975 = vmatprep.subr.mxu0 0.0
        %2976 = vmatpush2.msra.mxu0 0.0
        %2977 = vmatprep.subr.mxu0 0.0
        %2978 = vmatpush2.msra.mxu0 0.0
        %2979 = vmatprep.subr.mxu0 0.0
        %2980 = vmatpush2.msra.mxu0 0.0
        %2981 = vmatprep.subr.mxu0 0.0
        %2982 = vmatpush2.msra.mxu0 0.0
        %2983 = vmatprep.subr.mxu0 0.0
        %2984 = vmatpush2.msra.mxu0 0.0
        %2985 = vmatprep.subr.mxu0 0.0
        %2986 = vmatpush2.msra.mxu0 0.0
        %2987 = vmatprep.subr.mxu0 0.0
        %2988 = vmatpush2.msra.mxu0 0.0
        %2989 = vmatprep.subr.mxu0 0.0
        %2990 = vmatpush2.msra.mxu0 0.0
        %2991 = vmatprep.subr.mxu0 0.0
        %2992 = vmatpush2.msra.mxu0 0.0
        %2993 = vmatprep.mubr.f32.mxu0 0.0
        %2994 = vmatmul.mubr.f32.gmra.mxu0 %v2816
        %v2995 = vpop.f32.mrf.mxu0
        %v2996 = vadd.f32 %v2852, %v2995
        %v2997 = vpop.f32.mrf.mxu0
        %2998 = vmatprep.mubr.f32.mxu0 0.0
        %2999 = vmatmul.mubr.f32.gmra.mxu0 %v2817
        %v3000 = vpop.f32.mrf.mxu0
        %v3001 = vadd.f32 %v2857, %v3000
        %v3002 = vpop.f32.mrf.mxu0
        %3003 = vmatprep.mubr.f32.mxu0 0.0
        %3004 = vmatmul.mubr.f32.gmra.mxu0 %v2818
        %v3005 = vpop.f32.mrf.mxu0
        %v3006 = vadd.f32 %v2862, %v3005
        %v3007 = vpop.f32.mrf.mxu0
        %3008 = vmatprep.mubr.f32.mxu0 0.0
        %3009 = vmatmul.mubr.f32.gmra.mxu0 %v2819
        %v3010 = vpop.f32.mrf.mxu0
        %v3011 = vadd.f32 %v2867, %v3010
        %v3012 = vpop.f32.mrf.mxu0
        %3013 = vmatprep.mubr.f32.mxu0 0.0
        %3014 = vmatmul.mubr.f32.gmra.mxu0 %v2820
        %v3015 = vpop.f32.mrf.mxu0
        %v3016 = vadd.f32 %v2872, %v3015
        %v3017 = vpop.f32.mrf.mxu0
        %3018 = vmatprep.mubr.f32.mxu0 0.0
        %3019 = vmatmul.mubr.f32.gmra.mxu0 %v2821
        %v3020 = vpop.f32.mrf.mxu0
        %v3021 = vadd.f32 %v2877, %v3020
        %v3022 = vpop.f32.mrf.mxu0
        %3023 = vmatprep.mubr.f32.mxu0 0.0
        %3024 = vmatmul.mubr.f32.gmra.mxu0 %v2822
        %v3025 = vpop.f32.mrf.mxu0
        %v3026 = vadd.f32 %v2882, %v3025
        %v3027 = vpop.f32.mrf.mxu0
        %3028 = vmatprep.mubr.f32.mxu0 0.0
        %3029 = vmatmul.mubr.f32.gmra.mxu0 %v2823
        %v3030 = vpop.f32.mrf.mxu0
        %v3031 = vadd.f32 %v2887, %v3030
        %v3032 = vpop.f32.mrf.mxu0
        %3033 = vmatprep.mubr.f32.mxu0 0.0
        %3034 = vmatmul.mubr.f32.gmra.mxu0 %v2824
        %v3035 = vpop.f32.mrf.mxu0
        %v3036 = vadd.f32 %v2892, %v3035
        %v3037 = vpop.f32.mrf.mxu0
        %3038 = vmatprep.mubr.f32.mxu0 0.0
        %3039 = vmatmul.mubr.f32.gmra.mxu0 %v2825
        %v3040 = vpop.f32.mrf.mxu0
        %v3041 = vadd.f32 %v2897, %v3040
        %v3042 = vpop.f32.mrf.mxu0
        %3043 = vmatprep.mubr.f32.mxu0 0.0
        %3044 = vmatmul.mubr.f32.gmra.mxu0 %v2826
        %v3045 = vpop.f32.mrf.mxu0
        %v3046 = vadd.f32 %v2902, %v3045
        %v3047 = vpop.f32.mrf.mxu0
        %3048 = vmatprep.mubr.f32.mxu0 0.0
        %3049 = vmatmul.mubr.f32.gmra.mxu0 %v2827
        %v3050 = vpop.f32.mrf.mxu0
        %v3051 = vadd.f32 %v2907, %v3050
        %v3052 = vpop.f32.mrf.mxu0
        %3053 = vmatprep.mubr.f32.mxu0 0.0
        %3054 = vmatmul.mubr.f32.gmra.mxu0 %v2828
        %v3055 = vpop.f32.mrf.mxu0
        %v3056 = vadd.f32 %v2912, %v3055
        %v3057 = vpop.f32.mrf.mxu0
        %3058 = vmatprep.mubr.f32.mxu0 0.0
        %3059 = vmatmul.mubr.f32.gmra.mxu0 %v2829
        %v3060 = vpop.f32.mrf.mxu0
        %v3061 = vadd.f32 %v2917, %v3060
        %v3062 = vpop.f32.mrf.mxu0
        %3063 = vmatprep.mubr.f32.mxu0 0.0
        %3064 = vmatmul.mubr.f32.gmra.mxu0 %v2830
        %v3065 = vpop.f32.mrf.mxu0
        %v3066 = vadd.f32 %v2922, %v3065
        %v3067 = vpop.f32.mrf.mxu0
        %3068 = vmatprep.mubr.f32.mxu0 0.0
        %3069 = vmatmul.mubr.f32.gmra.mxu0 %v2831
        %v3070 = vpop.f32.mrf.mxu0
        %v3071 = vadd.f32 %v2927, %v3070
        %v3072 = vpop.f32.mrf.mxu0
        %3073 = vdwg.mxu0
        %s3074 = scalar_lea.vmem %s7, 128
        %3075 = vst.msk [vmem:[%s3074] sm:$0xff] %vm2363, %v2996
        %3076 = vst.msk [vmem:[%s3074 + $0x8] sm:$0xff] %vm2363, %v3001
        %3077 = vst.msk [vmem:[%s3074 + $0x10] sm:$0xff] %vm2363, %v3006
        %3078 = vst.msk [vmem:[%s3074 + $0x18] sm:$0xff] %vm2363, %v3011
        %3079 = vst.msk [vmem:[%s3074 + $0x20] sm:$0xff] %vm2363, %v3016
        %3080 = vst.msk [vmem:[%s3074 + $0x28] sm:$0xff] %vm2363, %v3021
        %3081 = vst.msk [vmem:[%s3074 + $0x30] sm:$0xff] %vm2363, %v3026
        %3082 = vst.msk [vmem:[%s3074 + $0x38] sm:$0xff] %vm2363, %v3031
        %3083 = vst.msk [vmem:[%s3074 + $0x40] sm:$0xff] %vm2363, %v3036
        %3084 = vst.msk [vmem:[%s3074 + $0x48] sm:$0xff] %vm2363, %v3041
        %3085 = vst.msk [vmem:[%s3074 + $0x50] sm:$0xff] %vm2363, %v3046
        %3086 = vst.msk [vmem:[%s3074 + $0x58] sm:$0xff] %vm2363, %v3051
        %3087 = vst.msk [vmem:[%s3074 + $0x60] sm:$0xff] %vm2363, %v3056
        %3088 = vst.msk [vmem:[%s3074 + $0x68] sm:$0xff] %vm2363, %v3061
        %3089 = vst.msk [vmem:[%s3074 + $0x70] sm:$0xff] %vm2363, %v3066
        %3090 = vst.msk [vmem:[%s3074 + $0x78] sm:$0xff] %vm2363, %v3071
      $region56: #{teacher_student_forward.1} parent=47 // pred_fallthru
        _
      // Predicated region
      $region57: #{teacher_student_forward.1} parent=47 // pred_check
        %p3091 = pneg %p183
      $region58: #{teacher_student_forward.1} parent=47 // pred_check_branch
        %3093 = sbr.rel (%p3091) target = $region60
      $region59: #{teacher_student_forward.1} parent=47 // pred_region
        _
      $region60: #{teacher_student_forward.1} parent=47 // pred_fallthru
        _
      // Predicated region
      $region61: #{teacher_student_forward.1} parent=47 // pred_check
        %p3094 = pneg %p183
      $region62: #{teacher_student_forward.1} parent=47 // pred_check_branch
        %3096 = sbr.rel (%p3094) target = $region64
      $region63: #{teacher_student_forward.1} parent=47 // pred_region
        _
      $region64: #{teacher_student_forward.1} parent=47 // pred_fallthru
        _
    $region48: #{teacher_student_forward.1} parent=5 // pred_fallthru
      _
    %p3097 = scmp.le.s32.totalorder 2, %s13
    // Predicated region
    $region65: #{teacher_student_forward.1} parent=5 // pred_check
      %p3098 = pneg %p3097
    $region66: #{teacher_student_forward.1} parent=5 // pred_check_branch
      %3100 = sbr.rel (%p3098) target = $region68
    $region67: #{teacher_student_forward.1} parent=5 // pred_region
      %s3101 = ssub.s32 %s13, 2
    $region68: #{teacher_student_forward.1} parent=5 // pred_fallthru
      _
  $region6: #{teacher_student_forward.1} parent=0 // loop_footer
    %s17 = sadd.s32 1, %s13
  $region7: #{teacher_student_forward.1} parent=0 // loop_footer_branch
    %12 = sbr.rel target = $region3
  $region8: #{teacher_student_forward.1} parent=0 // loop_exit
    _

</llo_original>
